<compile_context>
chip_gen: v7x
topology: tpu7x:2x2x1
jax: 0.10.0
libtpu: 0.0.40
codegen_flags: <defaults>
</compile_context>

<pallas_src>
import jax
import jax.numpy as jnp
from jax.experimental import pallas as pl
from jax.experimental.pallas import tpu as pltpu

# ---- model config (small, consistent with the module's forward) ----
B = 2
S_DEC = 8          # decoder (y) sequence length
S_ENC = 8          # encoder (x) sequence length
D_MODEL = 32
NUM_HEADS = 4
HEAD_DIM = D_MODEL // NUM_HEADS
D_FF = 64
EPS = 1e-5
_SCALE = 1.0 / (HEAD_DIM ** 0.5)

MD = B * S_DEC     # stacked decoder rows
ME = B * S_ENC     # stacked encoder rows

# column offsets inside the packed weight slab (rows = D_MODEL)
_OFF_QKV = 0                         # (D, 3D) self-attn q|k|v   (head-major cols)
_OFF_QC  = _OFF_QKV + 3 * D_MODEL    # (D, D)  cross-attn q      (head-major cols)
_OFF_KVC = _OFF_QC + D_MODEL         # (D, 2D) cross-attn k|v    (head-major cols)
_OFF_WO1 = _OFF_KVC + 2 * D_MODEL    # (D, D)  self-attn out proj
_OFF_WO2 = _OFF_WO1 + D_MODEL        # (D, D)  cross-attn out proj
_OFF_W1  = _OFF_WO2 + D_MODEL        # (D, D_FF) ffn linear1
_WBIG_COLS = _OFF_W1 + D_FF          # 320

# rows of the packed bias / layernorm table, shape (_VEC_ROWS, 3*D_MODEL)
(_R_BQKV, _R_BQC, _R_BKVC, _R_BO1, _R_BO2, _R_B1, _R_B2,
 _R_G1, _R_BE1, _R_G2, _R_BE2, _R_G3, _R_BE3) = range(13)
_VEC_ROWS = 16
_VEC_COLS = 3 * D_MODEL


# ----------------------------- kernel ---------------------------------------
def _layernorm(v, gamma, beta):
    mean = jnp.mean(v, axis=-1, keepdims=True)
    var = jnp.mean((v - mean) ** 2, axis=-1, keepdims=True)
    return (v - mean) * jax.lax.rsqrt(var + EPS) * gamma + beta


def _mh_attention(q_all, k_all, v_all, wo, mask):
    """Multi-head attention on batch-stacked rows with fused output projection.

    q_all:(Mq,D), k_all/v_all:(Mk,D) with head-major columns; mask:(Mq,Mk) is
    additive and block-diagonal over batch.  Returns concat_h(o_h) @ wo, computed
    as sum_h o_h @ wo[h*hd:(h+1)*hd, :] (no lane concatenation).
    """
    out = jnp.zeros((q_all.shape[0], D_MODEL), jnp.float32)
    for h in range(NUM_HEADS):
        c0 = h * HEAD_DIM
        q = q_all[:, c0:c0 + HEAD_DIM]
        k = k_all[:, c0:c0 + HEAD_DIM]
        v = v_all[:, c0:c0 + HEAD_DIM]
        # q @ k^T on the MXU without materializing a transpose.
        s = jax.lax.dot_general(q, k, (((1,), (1,)), ((), ())),
                                preferred_element_type=jnp.float32)
        s = s * _SCALE + mask
        s = s - jnp.max(s, axis=-1, keepdims=True)
        p = jnp.exp(s)
        # EUP reciprocal instead of a VPU divide (approx=True also works within
        # tolerance; approx=False is bit-safer and costs the same here).
        p = p * pl.reciprocal(jnp.sum(p, axis=-1, keepdims=True), approx=False)
        o = jnp.dot(p, v, preferred_element_type=jnp.float32)
        out = out + jnp.dot(o, wo[c0:c0 + HEAD_DIM, :],
                            preferred_element_type=jnp.float32)
    return out


def decoder_layer_kernel(y_ref, x_ref, smask_ref, cmask_ref,
                         wbig_ref, w2_ref, vecs_ref, out_ref):
    y = y_ref[...]                        # (MD, D)   both batches stacked
    x = x_ref[...]                        # (ME, D)
    smask = smask_ref[...]                # (MD, MD)  block-diag additive mask
    cmask = cmask_ref[...]                # (MD, ME)

    def vec(r, n):
        return vecs_ref[r:r + 1, 0:n]     # (1, n) row of the packed table

    # ---------------- self attention ----------------
    qkv = jnp.dot(y, wbig_ref[:, _OFF_QKV:_OFF_QKV + 3 * D_MODEL],
                  preferred_element_type=jnp.float32) + vec(_R_BQKV, 3 * D_MODEL)
    sa = _mh_attention(qkv[:, 0:D_MODEL],
                       qkv[:, D_MODEL:2 * D_MODEL],
                       qkv[:, 2 * D_MODEL:3 * D_MODEL],
                       wbig_ref[:, _OFF_WO1:_OFF_WO1 + D_MODEL], smask)
    sa = sa + vec(_R_BO1, D_MODEL)
    # dropout1: identity (inference)
    y = _layernorm(sa + y, vec(_R_G1, D_MODEL), vec(_R_BE1, D_MODEL))

    # ---------------- encoder-decoder (cross) attention ----------------
    kv = jnp.dot(x, wbig_ref[:, _OFF_KVC:_OFF_KVC + 2 * D_MODEL],
                 preferred_element_type=jnp.float32) + vec(_R_BKVC, 2 * D_MODEL)
    qc = jnp.dot(y, wbig_ref[:, _OFF_QC:_OFF_QC + D_MODEL],
                 preferred_element_type=jnp.float32) + vec(_R_BQC, D_MODEL)
    ca = _mh_attention(qc, kv[:, 0:D_MODEL], kv[:, D_MODEL:2 * D_MODEL],
                       wbig_ref[:, _OFF_WO2:_OFF_WO2 + D_MODEL], cmask)
    ca = ca + vec(_R_BO2, D_MODEL)
    # dropout2: identity (inference)
    y = _layernorm(ca + y, vec(_R_G2, D_MODEL), vec(_R_BE2, D_MODEL))

    # ---------------- position-wise FFN ----------------
    h1 = jnp.maximum(
        jnp.dot(y, wbig_ref[:, _OFF_W1:_OFF_W1 + D_FF],
                preferred_element_type=jnp.float32) + vec(_R_B1, D_FF), 0.0)
    # ffn-internal dropout: identity (inference)
    ff = jnp.dot(h1, w2_ref[...], preferred_element_type=jnp.float32) + vec(_R_B2, D_MODEL)
    # dropout3: identity (inference)
    out_ref[...] = _layernorm(ff + y, vec(_R_G3, D_MODEL), vec(_R_BE3, D_MODEL))


# ----------------------------- wrapper ---------------------------------------
def _head_major_qkv(w):
    # torch layout: per head h the columns are [q_h | k_h | v_h] at offset h*3*hd.
    # Reorder to [Q_headmajor | K_headmajor | V_headmajor].
    cols = []
    for part in range(3):                       # 0=q, 1=k, 2=v (torch chunk order)
        for h in range(NUM_HEADS):
            base = h * 3 * HEAD_DIM + part * HEAD_DIM
            cols.append(w[..., base:base + HEAD_DIM])
    return jnp.concatenate(cols, axis=-1)


def _head_major_kv(w):
    # torch layout: per head h the columns are [k_h | v_h] at offset h*2*hd.
    cols = []
    for part in range(2):                       # 0=k, 1=v
        for h in range(NUM_HEADS):
            base = h * 2 * HEAD_DIM + part * HEAD_DIM
            cols.append(w[..., base:base + HEAD_DIM])
    return jnp.concatenate(cols, axis=-1)


def _pack_params(params):
    (wqkv, bqkv, wo1, bo1, g1, be1,
     wkv, bkv, wq, bq, wo2, bo2, g2, be2,
     w1, b1, w2, b2, g3, be3) = params

    w_big = jnp.concatenate(
        [_head_major_qkv(wqkv), wq, _head_major_kv(wkv), wo1, wo2, w1], axis=1)

    def row(v):
        v = v.reshape(-1)
        return jnp.pad(v, (0, _VEC_COLS - v.shape[0]))[None, :]

    rows = [row(_head_major_qkv(bqkv)), row(bq), row(_head_major_kv(bkv)),
            row(bo1), row(bo2), row(b1), row(b2),
            row(g1), row(be1), row(g2), row(be2), row(g3), row(be3)]
    vecs = jnp.concatenate(
        rows + [jnp.zeros((_VEC_ROWS - len(rows), _VEC_COLS), jnp.float32)], axis=0)
    return w_big, w2, vecs


def _block_diag_mask(mask, sq, sk):
    # (sq, sk) additive mask -> (B*sq, B*sk) block-diagonal additive mask so that
    # batches stacked along the sublane axis never attend across each other.
    big = jnp.full((B * sq, B * sk), -1e9, jnp.float32)
    for b in range(B):
        big = big.at[b * sq:(b + 1) * sq, b * sk:(b + 1) * sk].set(mask)
    return big


@jax.jit
def decoder_layer(y, x, self_mask, cross_mask, params):
    w_big, w2, vecs = _pack_params(params)
    y2 = y.reshape(MD, D_MODEL)
    x2 = x.reshape(ME, D_MODEL)
    smask = _block_diag_mask(self_mask, S_DEC, S_DEC)
    cmask = _block_diag_mask(cross_mask, S_DEC, S_ENC)

    vmem = pl.BlockSpec(memory_space=pltpu.MemorySpace.VMEM)  # whole array in VMEM
    out2 = pl.pallas_call(
        decoder_layer_kernel,
        out_shape=jax.ShapeDtypeStruct((MD, D_MODEL), jnp.float32),
        in_specs=[vmem] * 7,
        out_specs=vmem,
    )(y2, x2, smask, cmask, w_big, w2, vecs)
    return out2.reshape(B, S_DEC, D_MODEL)


# ----------------------------- params / reference ----------------------------
def init_params(key):
    ks = jax.random.split(key, 8)

    def lin(k, din, dout):
        kw, kb = jax.random.split(k)
        w = jax.random.normal(kw, (din, dout), jnp.float32) * (1.0 / (din ** 0.5))
        b = jax.random.normal(kb, (1, dout), jnp.float32) * 0.02
        return w, b

    wqkv, bqkv = lin(ks[0], D_MODEL, 3 * D_MODEL)       # self-attn qkv_layer
    wo1, bo1 = lin(ks[1], D_MODEL, D_MODEL)             # self-attn out proj
    g1, be1 = jnp.ones((1, D_MODEL), jnp.float32), jnp.zeros((1, D_MODEL), jnp.float32)

    wkv, bkv = lin(ks[2], D_MODEL, 2 * D_MODEL)         # cross-attn kv_layer (on x)
    wq, bq = lin(ks[3], D_MODEL, D_MODEL)               # cross-attn q_layer (on y)
    wo2, bo2 = lin(ks[4], D_MODEL, D_MODEL)             # cross-attn out proj
    g2, be2 = jnp.ones((1, D_MODEL), jnp.float32), jnp.zeros((1, D_MODEL), jnp.float32)

    w1, b1 = lin(ks[5], D_MODEL, D_FF)                  # ffn linear1
    w2, b2 = lin(ks[6], D_FF, D_MODEL)                  # ffn linear2
    g3, be3 = jnp.ones((1, D_MODEL), jnp.float32), jnp.zeros((1, D_MODEL), jnp.float32)

    return (wqkv, bqkv, wo1, bo1, g1, be1,
            wkv, bkv, wq, bq, wo2, bo2, g2, be2,
            w1, b1, w2, b2, g3, be3)


def reference(y, x, smask, cmask, params):
    (wqkv, bqkv, wo1, bo1, g1, be1,
     wkv, bkv, wq, bq, wo2, bo2, g2, be2,
     w1, b1, w2, b2, g3, be3) = params
    Bn, Sd, _ = y.shape
    Se = x.shape[1]

    def ln(v, g, b):
        m = v.mean(-1, keepdims=True)
        var = ((v - m) ** 2).mean(-1, keepdims=True)
        return (v - m) / jnp.sqrt(var + EPS) * g + b

    def mh_attn(q, k, v, mask):
        s = jnp.einsum('bqhd,bkhd->bhqk', q, k) * _SCALE + mask
        p = jax.nn.softmax(s, axis=-1)
        o = jnp.einsum('bhqk,bkhd->bqhd', p, v)
        return o.reshape(Bn, q.shape[1], D_MODEL)

    qkv = (y @ wqkv + bqkv).reshape(Bn, Sd, NUM_HEADS, 3 * HEAD_DIM)
    q, k, v = jnp.split(qkv, 3, axis=-1)
    yy = ln(mh_attn(q, k, v, smask) @ wo1 + bo1 + y, g1, be1)

    kv = (x @ wkv + bkv).reshape(Bn, Se, NUM_HEADS, 2 * HEAD_DIM)
    kk, vv = jnp.split(kv, 2, axis=-1)
    qq = (yy @ wq + bq).reshape(Bn, Sd, NUM_HEADS, HEAD_DIM)
    yy = ln(mh_attn(qq, kk, vv, cmask) @ wo2 + bo2 + yy, g2, be2)

    ff = jnp.maximum(yy @ w1 + b1, 0.0) @ w2 + b2
    return ln(ff + yy, g3, be3)


if __name__ == "__main__":
    key = jax.random.PRNGKey(0)
    k_y, k_x, k_p = jax.random.split(key, 3)
    y = jax.random.normal(k_y, (B, S_DEC, D_MODEL), jnp.float32)
    x = jax.random.normal(k_x, (B, S_ENC, D_MODEL), jnp.float32)

    causal = jnp.where(
        jnp.triu(jnp.ones((S_DEC, S_DEC), jnp.bool_), k=1), -1e9, 0.0
    ).astype(jnp.float32)
    cross_mask = jnp.zeros((S_DEC, S_ENC), jnp.float32)

    params = init_params(k_p)

    out = decoder_layer(y, x, causal, cross_mask, params)
    jax.block_until_ready(out)

    ref = reference(y, x, causal, cross_mask, params)
    assert out.shape == (B, S_DEC, D_MODEL)
    max_err = float(jnp.max(jnp.abs(out - ref)))
    assert jnp.allclose(out, ref, atol=2e-3, rtol=2e-3), f"max_err={max_err}"
    print("KERNEL_OK")
</pallas_src>

<mosaic_0001>
module attributes {stable_mosaic.version = 11 : i64} {
  func.func @decoder_layer_kernel(%arg0: memref<16x32xf32, #tpu.memory_space<vmem>>, %arg1: memref<16x32xf32, #tpu.memory_space<vmem>>, %arg2: memref<16x16xf32, #tpu.memory_space<vmem>>, %arg3: memref<16x16xf32, #tpu.memory_space<vmem>>, %arg4: memref<32x320xf32, #tpu.memory_space<vmem>>, %arg5: memref<64x32xf32, #tpu.memory_space<vmem>>, %arg6: memref<16x96xf32, #tpu.memory_space<vmem>>, %arg7: memref<16x32xf32, #tpu.memory_space<vmem>>) attributes {dimension_semantics = [], scalar_prefetch = 0 : i64, scratch_operands = 0 : i64, tpu.core_type = #tpu.core_type<tc>} {
    %c0 = arith.constant 0 : index
    %c0_0 = arith.constant 0 : index
    %0 = vector.load %arg0[%c0, %c0_0] : memref<16x32xf32, #tpu.memory_space<vmem>>, vector<16x32xf32>
    %c0_1 = arith.constant 0 : index
    %c0_2 = arith.constant 0 : index
    %1 = vector.load %arg1[%c0_1, %c0_2] : memref<16x32xf32, #tpu.memory_space<vmem>>, vector<16x32xf32>
    %c0_3 = arith.constant 0 : index
    %c0_4 = arith.constant 0 : index
    %2 = vector.load %arg2[%c0_3, %c0_4] : memref<16x16xf32, #tpu.memory_space<vmem>>, vector<16x16xf32>
    %c0_5 = arith.constant 0 : index
    %c0_6 = arith.constant 0 : index
    %3 = vector.load %arg3[%c0_5, %c0_6] : memref<16x16xf32, #tpu.memory_space<vmem>>, vector<16x16xf32>
    %c0_7 = arith.constant 0 : index
    %c0_8 = arith.constant 0 : index
    %4 = vector.load %arg4[%c0_7, %c0_8] : memref<32x320xf32, #tpu.memory_space<vmem>>, vector<32x96xf32>
    %cst = arith.constant dense<0.000000e+00> : vector<16x96xf32>
    %5 = tpu.matmul %0, %4, %cst {dimension_numbers = #tpu.dot_dimension_numbers<[1], [0], [0], [1], [0, 0, 1, 1], [], []>} : vector<16x32xf32>, vector<32x96xf32>, vector<16x96xf32> -> vector<16x96xf32>
    %c0_9 = arith.constant 0 : index
    %c0_10 = arith.constant 0 : index
    %6 = vector.load %arg6[%c0_9, %c0_10] : memref<16x96xf32, #tpu.memory_space<vmem>>, vector<1x96xf32>
    %7 = vector.broadcast %6 : vector<1x96xf32> to vector<16x96xf32>
    %8 = arith.addf %5, %7 : vector<16x96xf32>
    %9 = vector.extract_strided_slice %8 {offsets = [0, 0], sizes = [16, 32], strides = [1, 1]} : vector<16x96xf32> to vector<16x32xf32>
    %10 = vector.extract_strided_slice %8 {offsets = [0, 32], sizes = [16, 32], strides = [1, 1]} : vector<16x96xf32> to vector<16x32xf32>
    %11 = vector.extract_strided_slice %8 {offsets = [0, 64], sizes = [16, 32], strides = [1, 1]} : vector<16x96xf32> to vector<16x32xf32>
    %c0_11 = arith.constant 0 : index
    %c192 = arith.constant 192 : index
    %12 = vector.load %arg4[%c0_11, %c192] : memref<32x320xf32, #tpu.memory_space<vmem>>, vector<32x32xf32>
    %cst_12 = arith.constant 0.000000e+00 : f32
    %13 = vector.broadcast %cst_12 : f32 to vector<16x32xf32>
    %14 = vector.extract_strided_slice %9 {offsets = [0, 0], sizes = [16, 8], strides = [1, 1]} : vector<16x32xf32> to vector<16x8xf32>
    %15 = vector.extract_strided_slice %10 {offsets = [0, 0], sizes = [16, 8], strides = [1, 1]} : vector<16x32xf32> to vector<16x8xf32>
    %16 = vector.extract_strided_slice %11 {offsets = [0, 0], sizes = [16, 8], strides = [1, 1]} : vector<16x32xf32> to vector<16x8xf32>
    %cst_13 = arith.constant dense<0.000000e+00> : vector<16x16xf32>
    %17 = tpu.matmul %14, %15, %cst_13 {dimension_numbers = #tpu.dot_dimension_numbers<[1], [1], [0], [0], [0, 0, 1, 0], [], []>} : vector<16x8xf32>, vector<16x8xf32>, vector<16x16xf32> -> vector<16x16xf32>
    %cst_14 = arith.constant 0.353553385 : f32
    %18 = vector.broadcast %cst_14 : f32 to vector<16x16xf32>
    %19 = arith.mulf %17, %18 : vector<16x16xf32>
    %20 = arith.addf %19, %2 : vector<16x16xf32>
    %cst_15 = arith.constant dense<0xFF800000> : vector<16xf32>
    %21 = vector.multi_reduction <maximumf>, %20, %cst_15 [1] : vector<16x16xf32> to vector<16xf32>
    %22 = vector.shape_cast %21 : vector<16xf32> to vector<16x1xf32>
    %23 = vector.broadcast %22 : vector<16x1xf32> to vector<16x16xf32>
    %24 = arith.subf %20, %23 : vector<16x16xf32>
    %25 = math.exp %24 : vector<16x16xf32>
    %cst_16 = arith.constant dense<0.000000e+00> : vector<16xf32>
    %26 = vector.multi_reduction <add>, %25, %cst_16 [1] : vector<16x16xf32> to vector<16xf32>
    %27 = vector.shape_cast %26 : vector<16xf32> to vector<16x1xf32>
    %28 = tpu.reciprocal %27 : vector<16x1xf32> -> vector<16x1xf32>
    %29 = vector.broadcast %28 : vector<16x1xf32> to vector<16x16xf32>
    %30 = arith.mulf %25, %29 : vector<16x16xf32>
    %cst_17 = arith.constant dense<0.000000e+00> : vector<16x8xf32>
    %31 = tpu.matmul %30, %16, %cst_17 {dimension_numbers = #tpu.dot_dimension_numbers<[1], [0], [0], [1], [0, 0, 1, 1], [], []>} : vector<16x16xf32>, vector<16x8xf32>, vector<16x8xf32> -> vector<16x8xf32>
    %32 = vector.extract_strided_slice %12 {offsets = [0, 0], sizes = [8, 32], strides = [1, 1]} : vector<32x32xf32> to vector<8x32xf32>
    %cst_18 = arith.constant dense<0.000000e+00> : vector<16x32xf32>
    %33 = tpu.matmul %31, %32, %cst_18 {dimension_numbers = #tpu.dot_dimension_numbers<[1], [0], [0], [1], [0, 0, 1, 1], [], []>} : vector<16x8xf32>, vector<8x32xf32>, vector<16x32xf32> -> vector<16x32xf32>
    %34 = arith.addf %13, %33 : vector<16x32xf32>
    %35 = vector.extract_strided_slice %9 {offsets = [0, 8], sizes = [16, 8], strides = [1, 1]} : vector<16x32xf32> to vector<16x8xf32>
    %36 = vector.extract_strided_slice %10 {offsets = [0, 8], sizes = [16, 8], strides = [1, 1]} : vector<16x32xf32> to vector<16x8xf32>
    %37 = vector.extract_strided_slice %11 {offsets = [0, 8], sizes = [16, 8], strides = [1, 1]} : vector<16x32xf32> to vector<16x8xf32>
    %cst_19 = arith.constant dense<0.000000e+00> : vector<16x16xf32>
    %38 = tpu.matmul %35, %36, %cst_19 {dimension_numbers = #tpu.dot_dimension_numbers<[1], [1], [0], [0], [0, 0, 1, 0], [], []>} : vector<16x8xf32>, vector<16x8xf32>, vector<16x16xf32> -> vector<16x16xf32>
    %cst_20 = arith.constant 0.353553385 : f32
    %39 = vector.broadcast %cst_20 : f32 to vector<16x16xf32>
    %40 = arith.mulf %38, %39 : vector<16x16xf32>
    %41 = arith.addf %40, %2 : vector<16x16xf32>
    %cst_21 = arith.constant dense<0xFF800000> : vector<16xf32>
    %42 = vector.multi_reduction <maximumf>, %41, %cst_21 [1] : vector<16x16xf32> to vector<16xf32>
    %43 = vector.shape_cast %42 : vector<16xf32> to vector<16x1xf32>
    %44 = vector.broadcast %43 : vector<16x1xf32> to vector<16x16xf32>
    %45 = arith.subf %41, %44 : vector<16x16xf32>
    %46 = math.exp %45 : vector<16x16xf32>
    %cst_22 = arith.constant dense<0.000000e+00> : vector<16xf32>
    %47 = vector.multi_reduction <add>, %46, %cst_22 [1] : vector<16x16xf32> to vector<16xf32>
    %48 = vector.shape_cast %47 : vector<16xf32> to vector<16x1xf32>
    %49 = tpu.reciprocal %48 : vector<16x1xf32> -> vector<16x1xf32>
    %50 = vector.broadcast %49 : vector<16x1xf32> to vector<16x16xf32>
    %51 = arith.mulf %46, %50 : vector<16x16xf32>
    %cst_23 = arith.constant dense<0.000000e+00> : vector<16x8xf32>
    %52 = tpu.matmul %51, %37, %cst_23 {dimension_numbers = #tpu.dot_dimension_numbers<[1], [0], [0], [1], [0, 0, 1, 1], [], []>} : vector<16x16xf32>, vector<16x8xf32>, vector<16x8xf32> -> vector<16x8xf32>
    %53 = vector.extract_strided_slice %12 {offsets = [8, 0], sizes = [8, 32], strides = [1, 1]} : vector<32x32xf32> to vector<8x32xf32>
    %cst_24 = arith.constant dense<0.000000e+00> : vector<16x32xf32>
    %54 = tpu.matmul %52, %53, %cst_24 {dimension_numbers = #tpu.dot_dimension_numbers<[1], [0], [0], [1], [0, 0, 1, 1], [], []>} : vector<16x8xf32>, vector<8x32xf32>, vector<16x32xf32> -> vector<16x32xf32>
    %55 = arith.addf %34, %54 : vector<16x32xf32>
    %56 = vector.extract_strided_slice %9 {offsets = [0, 16], sizes = [16, 8], strides = [1, 1]} : vector<16x32xf32> to vector<16x8xf32>
    %57 = vector.extract_strided_slice %10 {offsets = [0, 16], sizes = [16, 8], strides = [1, 1]} : vector<16x32xf32> to vector<16x8xf32>
    %58 = vector.extract_strided_slice %11 {offsets = [0, 16], sizes = [16, 8], strides = [1, 1]} : vector<16x32xf32> to vector<16x8xf32>
    %cst_25 = arith.constant dense<0.000000e+00> : vector<16x16xf32>
    %59 = tpu.matmul %56, %57, %cst_25 {dimension_numbers = #tpu.dot_dimension_numbers<[1], [1], [0], [0], [0, 0, 1, 0], [], []>} : vector<16x8xf32>, vector<16x8xf32>, vector<16x16xf32> -> vector<16x16xf32>
    %cst_26 = arith.constant 0.353553385 : f32
    %60 = vector.broadcast %cst_26 : f32 to vector<16x16xf32>
    %61 = arith.mulf %59, %60 : vector<16x16xf32>
    %62 = arith.addf %61, %2 : vector<16x16xf32>
    %cst_27 = arith.constant dense<0xFF800000> : vector<16xf32>
    %63 = vector.multi_reduction <maximumf>, %62, %cst_27 [1] : vector<16x16xf32> to vector<16xf32>
    %64 = vector.shape_cast %63 : vector<16xf32> to vector<16x1xf32>
    %65 = vector.broadcast %64 : vector<16x1xf32> to vector<16x16xf32>
    %66 = arith.subf %62, %65 : vector<16x16xf32>
    %67 = math.exp %66 : vector<16x16xf32>
    %cst_28 = arith.constant dense<0.000000e+00> : vector<16xf32>
    %68 = vector.multi_reduction <add>, %67, %cst_28 [1] : vector<16x16xf32> to vector<16xf32>
    %69 = vector.shape_cast %68 : vector<16xf32> to vector<16x1xf32>
    %70 = tpu.reciprocal %69 : vector<16x1xf32> -> vector<16x1xf32>
    %71 = vector.broadcast %70 : vector<16x1xf32> to vector<16x16xf32>
    %72 = arith.mulf %67, %71 : vector<16x16xf32>
    %cst_29 = arith.constant dense<0.000000e+00> : vector<16x8xf32>
    %73 = tpu.matmul %72, %58, %cst_29 {dimension_numbers = #tpu.dot_dimension_numbers<[1], [0], [0], [1], [0, 0, 1, 1], [], []>} : vector<16x16xf32>, vector<16x8xf32>, vector<16x8xf32> -> vector<16x8xf32>
    %74 = vector.extract_strided_slice %12 {offsets = [16, 0], sizes = [8, 32], strides = [1, 1]} : vector<32x32xf32> to vector<8x32xf32>
    %cst_30 = arith.constant dense<0.000000e+00> : vector<16x32xf32>
    %75 = tpu.matmul %73, %74, %cst_30 {dimension_numbers = #tpu.dot_dimension_numbers<[1], [0], [0], [1], [0, 0, 1, 1], [], []>} : vector<16x8xf32>, vector<8x32xf32>, vector<16x32xf32> -> vector<16x32xf32>
    %76 = arith.addf %55, %75 : vector<16x32xf32>
    %77 = vector.extract_strided_slice %9 {offsets = [0, 24], sizes = [16, 8], strides = [1, 1]} : vector<16x32xf32> to vector<16x8xf32>
    %78 = vector.extract_strided_slice %10 {offsets = [0, 24], sizes = [16, 8], strides = [1, 1]} : vector<16x32xf32> to vector<16x8xf32>
    %79 = vector.extract_strided_slice %11 {offsets = [0, 24], sizes = [16, 8], strides = [1, 1]} : vector<16x32xf32> to vector<16x8xf32>
    %cst_31 = arith.constant dense<0.000000e+00> : vector<16x16xf32>
    %80 = tpu.matmul %77, %78, %cst_31 {dimension_numbers = #tpu.dot_dimension_numbers<[1], [1], [0], [0], [0, 0, 1, 0], [], []>} : vector<16x8xf32>, vector<16x8xf32>, vector<16x16xf32> -> vector<16x16xf32>
    %cst_32 = arith.constant 0.353553385 : f32
    %81 = vector.broadcast %cst_32 : f32 to vector<16x16xf32>
    %82 = arith.mulf %80, %81 : vector<16x16xf32>
    %83 = arith.addf %82, %2 : vector<16x16xf32>
    %cst_33 = arith.constant dense<0xFF800000> : vector<16xf32>
    %84 = vector.multi_reduction <maximumf>, %83, %cst_33 [1] : vector<16x16xf32> to vector<16xf32>
    %85 = vector.shape_cast %84 : vector<16xf32> to vector<16x1xf32>
    %86 = vector.broadcast %85 : vector<16x1xf32> to vector<16x16xf32>
    %87 = arith.subf %83, %86 : vector<16x16xf32>
    %88 = math.exp %87 : vector<16x16xf32>
    %cst_34 = arith.constant dense<0.000000e+00> : vector<16xf32>
    %89 = vector.multi_reduction <add>, %88, %cst_34 [1] : vector<16x16xf32> to vector<16xf32>
    %90 = vector.shape_cast %89 : vector<16xf32> to vector<16x1xf32>
    %91 = tpu.reciprocal %90 : vector<16x1xf32> -> vector<16x1xf32>
    %92 = vector.broadcast %91 : vector<16x1xf32> to vector<16x16xf32>
    %93 = arith.mulf %88, %92 : vector<16x16xf32>
    %cst_35 = arith.constant dense<0.000000e+00> : vector<16x8xf32>
    %94 = tpu.matmul %93, %79, %cst_35 {dimension_numbers = #tpu.dot_dimension_numbers<[1], [0], [0], [1], [0, 0, 1, 1], [], []>} : vector<16x16xf32>, vector<16x8xf32>, vector<16x8xf32> -> vector<16x8xf32>
    %95 = vector.extract_strided_slice %12 {offsets = [24, 0], sizes = [8, 32], strides = [1, 1]} : vector<32x32xf32> to vector<8x32xf32>
    %cst_36 = arith.constant dense<0.000000e+00> : vector<16x32xf32>
    %96 = tpu.matmul %94, %95, %cst_36 {dimension_numbers = #tpu.dot_dimension_numbers<[1], [0], [0], [1], [0, 0, 1, 1], [], []>} : vector<16x8xf32>, vector<8x32xf32>, vector<16x32xf32> -> vector<16x32xf32>
    %97 = arith.addf %76, %96 : vector<16x32xf32>
    %c3 = arith.constant 3 : index
    %c0_37 = arith.constant 0 : index
    %98 = vector.load %arg6[%c3, %c0_37] : memref<16x96xf32, #tpu.memory_space<vmem>>, vector<1x32xf32>
    %99 = vector.broadcast %98 : vector<1x32xf32> to vector<16x32xf32>
    %100 = arith.addf %97, %99 : vector<16x32xf32>
    %101 = arith.addf %100, %0 : vector<16x32xf32>
    %c7 = arith.constant 7 : index
    %c0_38 = arith.constant 0 : index
    %102 = vector.load %arg6[%c7, %c0_38] : memref<16x96xf32, #tpu.memory_space<vmem>>, vector<1x32xf32>
    %c8 = arith.constant 8 : index
    %c0_39 = arith.constant 0 : index
    %103 = vector.load %arg6[%c8, %c0_39] : memref<16x96xf32, #tpu.memory_space<vmem>>, vector<1x32xf32>
    %cst_40 = arith.constant dense<0.000000e+00> : vector<16xf32>
    %104 = vector.multi_reduction <add>, %101, %cst_40 [1] : vector<16x32xf32> to vector<16xf32>
    %105 = vector.shape_cast %104 : vector<16xf32> to vector<16x1xf32>
    %cst_41 = arith.constant 3.200000e+01 : f32
    %106 = vector.broadcast %cst_41 : f32 to vector<16x1xf32>
    %107 = arith.divf %105, %106 : vector<16x1xf32>
    %108 = vector.broadcast %107 : vector<16x1xf32> to vector<16x32xf32>
    %109 = arith.subf %101, %108 : vector<16x32xf32>
    %110 = arith.mulf %109, %109 : vector<16x32xf32>
    %cst_42 = arith.constant dense<0.000000e+00> : vector<16xf32>
    %111 = vector.multi_reduction <add>, %110, %cst_42 [1] : vector<16x32xf32> to vector<16xf32>
    %112 = vector.shape_cast %111 : vector<16xf32> to vector<16x1xf32>
    %cst_43 = arith.constant 3.200000e+01 : f32
    %113 = vector.broadcast %cst_43 : f32 to vector<16x1xf32>
    %114 = arith.divf %112, %113 : vector<16x1xf32>
    %115 = vector.broadcast %107 : vector<16x1xf32> to vector<16x32xf32>
    %116 = arith.subf %101, %115 : vector<16x32xf32>
    %cst_44 = arith.constant 9.99999974E-6 : f32
    %117 = vector.broadcast %cst_44 : f32 to vector<16x1xf32>
    %118 = arith.addf %114, %117 : vector<16x1xf32>
    %119 = math.rsqrt %118 : vector<16x1xf32>
    %120 = vector.broadcast %119 : vector<16x1xf32> to vector<16x32xf32>
    %121 = arith.mulf %116, %120 : vector<16x32xf32>
    %122 = vector.broadcast %102 : vector<1x32xf32> to vector<16x32xf32>
    %123 = arith.mulf %121, %122 : vector<16x32xf32>
    %124 = vector.broadcast %103 : vector<1x32xf32> to vector<16x32xf32>
    %125 = arith.addf %123, %124 : vector<16x32xf32>
    %c0_45 = arith.constant 0 : index
    %c128 = arith.constant 128 : index
    %126 = vector.load %arg4[%c0_45, %c128] : memref<32x320xf32, #tpu.memory_space<vmem>>, vector<32x64xf32>
    %cst_46 = arith.constant dense<0.000000e+00> : vector<16x64xf32>
    %127 = tpu.matmul %1, %126, %cst_46 {dimension_numbers = #tpu.dot_dimension_numbers<[1], [0], [0], [1], [0, 0, 1, 1], [], []>} : vector<16x32xf32>, vector<32x64xf32>, vector<16x64xf32> -> vector<16x64xf32>
    %c2 = arith.constant 2 : index
    %c0_47 = arith.constant 0 : index
    %128 = vector.load %arg6[%c2, %c0_47] : memref<16x96xf32, #tpu.memory_space<vmem>>, vector<1x64xf32>
    %129 = vector.broadcast %128 : vector<1x64xf32> to vector<16x64xf32>
    %130 = arith.addf %127, %129 : vector<16x64xf32>
    %c0_48 = arith.constant 0 : index
    %c96 = arith.constant 96 : index
    %131 = vector.load %arg4[%c0_48, %c96] : memref<32x320xf32, #tpu.memory_space<vmem>>, vector<32x32xf32>
    %cst_49 = arith.constant dense<0.000000e+00> : vector<16x32xf32>
    %132 = tpu.matmul %125, %131, %cst_49 {dimension_numbers = #tpu.dot_dimension_numbers<[1], [0], [0], [1], [0, 0, 1, 1], [], []>} : vector<16x32xf32>, vector<32x32xf32>, vector<16x32xf32> -> vector<16x32xf32>
    %c1 = arith.constant 1 : index
    %c0_50 = arith.constant 0 : index
    %133 = vector.load %arg6[%c1, %c0_50] : memref<16x96xf32, #tpu.memory_space<vmem>>, vector<1x32xf32>
    %134 = vector.broadcast %133 : vector<1x32xf32> to vector<16x32xf32>
    %135 = arith.addf %132, %134 : vector<16x32xf32>
    %136 = vector.extract_strided_slice %130 {offsets = [0, 0], sizes = [16, 32], strides = [1, 1]} : vector<16x64xf32> to vector<16x32xf32>
    %137 = vector.extract_strided_slice %130 {offsets = [0, 32], sizes = [16, 32], strides = [1, 1]} : vector<16x64xf32> to vector<16x32xf32>
    %c0_51 = arith.constant 0 : index
    %c224 = arith.constant 224 : index
    %138 = vector.load %arg4[%c0_51, %c224] : memref<32x320xf32, #tpu.memory_space<vmem>>, vector<32x32xf32>
    %cst_52 = arith.constant 0.000000e+00 : f32
    %139 = vector.broadcast %cst_52 : f32 to vector<16x32xf32>
    %140 = vector.extract_strided_slice %135 {offsets = [0, 0], sizes = [16, 8], strides = [1, 1]} : vector<16x32xf32> to vector<16x8xf32>
    %141 = vector.extract_strided_slice %136 {offsets = [0, 0], sizes = [16, 8], strides = [1, 1]} : vector<16x32xf32> to vector<16x8xf32>
    %142 = vector.extract_strided_slice %137 {offsets = [0, 0], sizes = [16, 8], strides = [1, 1]} : vector<16x32xf32> to vector<16x8xf32>
    %cst_53 = arith.constant dense<0.000000e+00> : vector<16x16xf32>
    %143 = tpu.matmul %140, %141, %cst_53 {dimension_numbers = #tpu.dot_dimension_numbers<[1], [1], [0], [0], [0, 0, 1, 0], [], []>} : vector<16x8xf32>, vector<16x8xf32>, vector<16x16xf32> -> vector<16x16xf32>
    %cst_54 = arith.constant 0.353553385 : f32
    %144 = vector.broadcast %cst_54 : f32 to vector<16x16xf32>
    %145 = arith.mulf %143, %144 : vector<16x16xf32>
    %146 = arith.addf %145, %3 : vector<16x16xf32>
    %cst_55 = arith.constant dense<0xFF800000> : vector<16xf32>
    %147 = vector.multi_reduction <maximumf>, %146, %cst_55 [1] : vector<16x16xf32> to vector<16xf32>
    %148 = vector.shape_cast %147 : vector<16xf32> to vector<16x1xf32>
    %149 = vector.broadcast %148 : vector<16x1xf32> to vector<16x16xf32>
    %150 = arith.subf %146, %149 : vector<16x16xf32>
    %151 = math.exp %150 : vector<16x16xf32>
    %cst_56 = arith.constant dense<0.000000e+00> : vector<16xf32>
    %152 = vector.multi_reduction <add>, %151, %cst_56 [1] : vector<16x16xf32> to vector<16xf32>
    %153 = vector.shape_cast %152 : vector<16xf32> to vector<16x1xf32>
    %154 = tpu.reciprocal %153 : vector<16x1xf32> -> vector<16x1xf32>
    %155 = vector.broadcast %154 : vector<16x1xf32> to vector<16x16xf32>
    %156 = arith.mulf %151, %155 : vector<16x16xf32>
    %cst_57 = arith.constant dense<0.000000e+00> : vector<16x8xf32>
    %157 = tpu.matmul %156, %142, %cst_57 {dimension_numbers = #tpu.dot_dimension_numbers<[1], [0], [0], [1], [0, 0, 1, 1], [], []>} : vector<16x16xf32>, vector<16x8xf32>, vector<16x8xf32> -> vector<16x8xf32>
    %158 = vector.extract_strided_slice %138 {offsets = [0, 0], sizes = [8, 32], strides = [1, 1]} : vector<32x32xf32> to vector<8x32xf32>
    %cst_58 = arith.constant dense<0.000000e+00> : vector<16x32xf32>
    %159 = tpu.matmul %157, %158, %cst_58 {dimension_numbers = #tpu.dot_dimension_numbers<[1], [0], [0], [1], [0, 0, 1, 1], [], []>} : vector<16x8xf32>, vector<8x32xf32>, vector<16x32xf32> -> vector<16x32xf32>
    %160 = arith.addf %139, %159 : vector<16x32xf32>
    %161 = vector.extract_strided_slice %135 {offsets = [0, 8], sizes = [16, 8], strides = [1, 1]} : vector<16x32xf32> to vector<16x8xf32>
    %162 = vector.extract_strided_slice %136 {offsets = [0, 8], sizes = [16, 8], strides = [1, 1]} : vector<16x32xf32> to vector<16x8xf32>
    %163 = vector.extract_strided_slice %137 {offsets = [0, 8], sizes = [16, 8], strides = [1, 1]} : vector<16x32xf32> to vector<16x8xf32>
    %cst_59 = arith.constant dense<0.000000e+00> : vector<16x16xf32>
    %164 = tpu.matmul %161, %162, %cst_59 {dimension_numbers = #tpu.dot_dimension_numbers<[1], [1], [0], [0], [0, 0, 1, 0], [], []>} : vector<16x8xf32>, vector<16x8xf32>, vector<16x16xf32> -> vector<16x16xf32>
    %cst_60 = arith.constant 0.353553385 : f32
    %165 = vector.broadcast %cst_60 : f32 to vector<16x16xf32>
    %166 = arith.mulf %164, %165 : vector<16x16xf32>
    %167 = arith.addf %166, %3 : vector<16x16xf32>
    %cst_61 = arith.constant dense<0xFF800000> : vector<16xf32>
    %168 = vector.multi_reduction <maximumf>, %167, %cst_61 [1] : vector<16x16xf32> to vector<16xf32>
    %169 = vector.shape_cast %168 : vector<16xf32> to vector<16x1xf32>
    %170 = vector.broadcast %169 : vector<16x1xf32> to vector<16x16xf32>
    %171 = arith.subf %167, %170 : vector<16x16xf32>
    %172 = math.exp %171 : vector<16x16xf32>
    %cst_62 = arith.constant dense<0.000000e+00> : vector<16xf32>
    %173 = vector.multi_reduction <add>, %172, %cst_62 [1] : vector<16x16xf32> to vector<16xf32>
    %174 = vector.shape_cast %173 : vector<16xf32> to vector<16x1xf32>
    %175 = tpu.reciprocal %174 : vector<16x1xf32> -> vector<16x1xf32>
    %176 = vector.broadcast %175 : vector<16x1xf32> to vector<16x16xf32>
    %177 = arith.mulf %172, %176 : vector<16x16xf32>
    %cst_63 = arith.constant dense<0.000000e+00> : vector<16x8xf32>
    %178 = tpu.matmul %177, %163, %cst_63 {dimension_numbers = #tpu.dot_dimension_numbers<[1], [0], [0], [1], [0, 0, 1, 1], [], []>} : vector<16x16xf32>, vector<16x8xf32>, vector<16x8xf32> -> vector<16x8xf32>
    %179 = vector.extract_strided_slice %138 {offsets = [8, 0], sizes = [8, 32], strides = [1, 1]} : vector<32x32xf32> to vector<8x32xf32>
    %cst_64 = arith.constant dense<0.000000e+00> : vector<16x32xf32>
    %180 = tpu.matmul %178, %179, %cst_64 {dimension_numbers = #tpu.dot_dimension_numbers<[1], [0], [0], [1], [0, 0, 1, 1], [], []>} : vector<16x8xf32>, vector<8x32xf32>, vector<16x32xf32> -> vector<16x32xf32>
    %181 = arith.addf %160, %180 : vector<16x32xf32>
    %182 = vector.extract_strided_slice %135 {offsets = [0, 16], sizes = [16, 8], strides = [1, 1]} : vector<16x32xf32> to vector<16x8xf32>
    %183 = vector.extract_strided_slice %136 {offsets = [0, 16], sizes = [16, 8], strides = [1, 1]} : vector<16x32xf32> to vector<16x8xf32>
    %184 = vector.extract_strided_slice %137 {offsets = [0, 16], sizes = [16, 8], strides = [1, 1]} : vector<16x32xf32> to vector<16x8xf32>
    %cst_65 = arith.constant dense<0.000000e+00> : vector<16x16xf32>
    %185 = tpu.matmul %182, %183, %cst_65 {dimension_numbers = #tpu.dot_dimension_numbers<[1], [1], [0], [0], [0, 0, 1, 0], [], []>} : vector<16x8xf32>, vector<16x8xf32>, vector<16x16xf32> -> vector<16x16xf32>
    %cst_66 = arith.constant 0.353553385 : f32
    %186 = vector.broadcast %cst_66 : f32 to vector<16x16xf32>
    %187 = arith.mulf %185, %186 : vector<16x16xf32>
    %188 = arith.addf %187, %3 : vector<16x16xf32>
    %cst_67 = arith.constant dense<0xFF800000> : vector<16xf32>
    %189 = vector.multi_reduction <maximumf>, %188, %cst_67 [1] : vector<16x16xf32> to vector<16xf32>
    %190 = vector.shape_cast %189 : vector<16xf32> to vector<16x1xf32>
    %191 = vector.broadcast %190 : vector<16x1xf32> to vector<16x16xf32>
    %192 = arith.subf %188, %191 : vector<16x16xf32>
    %193 = math.exp %192 : vector<16x16xf32>
    %cst_68 = arith.constant dense<0.000000e+00> : vector<16xf32>
    %194 = vector.multi_reduction <add>, %193, %cst_68 [1] : vector<16x16xf32> to vector<16xf32>
    %195 = vector.shape_cast %194 : vector<16xf32> to vector<16x1xf32>
    %196 = tpu.reciprocal %195 : vector<16x1xf32> -> vector<16x1xf32>
    %197 = vector.broadcast %196 : vector<16x1xf32> to vector<16x16xf32>
    %198 = arith.mulf %193, %197 : vector<16x16xf32>
    %cst_69 = arith.constant dense<0.000000e+00> : vector<16x8xf32>
    %199 = tpu.matmul %198, %184, %cst_69 {dimension_numbers = #tpu.dot_dimension_numbers<[1], [0], [0], [1], [0, 0, 1, 1], [], []>} : vector<16x16xf32>, vector<16x8xf32>, vector<16x8xf32> -> vector<16x8xf32>
    %200 = vector.extract_strided_slice %138 {offsets = [16, 0], sizes = [8, 32], strides = [1, 1]} : vector<32x32xf32> to vector<8x32xf32>
    %cst_70 = arith.constant dense<0.000000e+00> : vector<16x32xf32>
    %201 = tpu.matmul %199, %200, %cst_70 {dimension_numbers = #tpu.dot_dimension_numbers<[1], [0], [0], [1], [0, 0, 1, 1], [], []>} : vector<16x8xf32>, vector<8x32xf32>, vector<16x32xf32> -> vector<16x32xf32>
    %202 = arith.addf %181, %201 : vector<16x32xf32>
    %203 = vector.extract_strided_slice %135 {offsets = [0, 24], sizes = [16, 8], strides = [1, 1]} : vector<16x32xf32> to vector<16x8xf32>
    %204 = vector.extract_strided_slice %136 {offsets = [0, 24], sizes = [16, 8], strides = [1, 1]} : vector<16x32xf32> to vector<16x8xf32>
    %205 = vector.extract_strided_slice %137 {offsets = [0, 24], sizes = [16, 8], strides = [1, 1]} : vector<16x32xf32> to vector<16x8xf32>
    %cst_71 = arith.constant dense<0.000000e+00> : vector<16x16xf32>
    %206 = tpu.matmul %203, %204, %cst_71 {dimension_numbers = #tpu.dot_dimension_numbers<[1], [1], [0], [0], [0, 0, 1, 0], [], []>} : vector<16x8xf32>, vector<16x8xf32>, vector<16x16xf32> -> vector<16x16xf32>
    %cst_72 = arith.constant 0.353553385 : f32
    %207 = vector.broadcast %cst_72 : f32 to vector<16x16xf32>
    %208 = arith.mulf %206, %207 : vector<16x16xf32>
    %209 = arith.addf %208, %3 : vector<16x16xf32>
    %cst_73 = arith.constant dense<0xFF800000> : vector<16xf32>
    %210 = vector.multi_reduction <maximumf>, %209, %cst_73 [1] : vector<16x16xf32> to vector<16xf32>
    %211 = vector.shape_cast %210 : vector<16xf32> to vector<16x1xf32>
    %212 = vector.broadcast %211 : vector<16x1xf32> to vector<16x16xf32>
    %213 = arith.subf %209, %212 : vector<16x16xf32>
    %214 = math.exp %213 : vector<16x16xf32>
    %cst_74 = arith.constant dense<0.000000e+00> : vector<16xf32>
    %215 = vector.multi_reduction <add>, %214, %cst_74 [1] : vector<16x16xf32> to vector<16xf32>
    %216 = vector.shape_cast %215 : vector<16xf32> to vector<16x1xf32>
    %217 = tpu.reciprocal %216 : vector<16x1xf32> -> vector<16x1xf32>
    %218 = vector.broadcast %217 : vector<16x1xf32> to vector<16x16xf32>
    %219 = arith.mulf %214, %218 : vector<16x16xf32>
    %cst_75 = arith.constant dense<0.000000e+00> : vector<16x8xf32>
    %220 = tpu.matmul %219, %205, %cst_75 {dimension_numbers = #tpu.dot_dimension_numbers<[1], [0], [0], [1], [0, 0, 1, 1], [], []>} : vector<16x16xf32>, vector<16x8xf32>, vector<16x8xf32> -> vector<16x8xf32>
    %221 = vector.extract_strided_slice %138 {offsets = [24, 0], sizes = [8, 32], strides = [1, 1]} : vector<32x32xf32> to vector<8x32xf32>
    %cst_76 = arith.constant dense<0.000000e+00> : vector<16x32xf32>
    %222 = tpu.matmul %220, %221, %cst_76 {dimension_numbers = #tpu.dot_dimension_numbers<[1], [0], [0], [1], [0, 0, 1, 1], [], []>} : vector<16x8xf32>, vector<8x32xf32>, vector<16x32xf32> -> vector<16x32xf32>
    %223 = arith.addf %202, %222 : vector<16x32xf32>
    %c4 = arith.constant 4 : index
    %c0_77 = arith.constant 0 : index
    %224 = vector.load %arg6[%c4, %c0_77] : memref<16x96xf32, #tpu.memory_space<vmem>>, vector<1x32xf32>
    %225 = vector.broadcast %224 : vector<1x32xf32> to vector<16x32xf32>
    %226 = arith.addf %223, %225 : vector<16x32xf32>
    %227 = arith.addf %226, %125 : vector<16x32xf32>
    %c9 = arith.constant 9 : index
    %c0_78 = arith.constant 0 : index
    %228 = vector.load %arg6[%c9, %c0_78] : memref<16x96xf32, #tpu.memory_space<vmem>>, vector<1x32xf32>
    %c10 = arith.constant 10 : index
    %c0_79 = arith.constant 0 : index
    %229 = vector.load %arg6[%c10, %c0_79] : memref<16x96xf32, #tpu.memory_space<vmem>>, vector<1x32xf32>
    %cst_80 = arith.constant dense<0.000000e+00> : vector<16xf32>
    %230 = vector.multi_reduction <add>, %227, %cst_80 [1] : vector<16x32xf32> to vector<16xf32>
    %231 = vector.shape_cast %230 : vector<16xf32> to vector<16x1xf32>
    %cst_81 = arith.constant 3.200000e+01 : f32
    %232 = vector.broadcast %cst_81 : f32 to vector<16x1xf32>
    %233 = arith.divf %231, %232 : vector<16x1xf32>
    %234 = vector.broadcast %233 : vector<16x1xf32> to vector<16x32xf32>
    %235 = arith.subf %227, %234 : vector<16x32xf32>
    %236 = arith.mulf %235, %235 : vector<16x32xf32>
    %cst_82 = arith.constant dense<0.000000e+00> : vector<16xf32>
    %237 = vector.multi_reduction <add>, %236, %cst_82 [1] : vector<16x32xf32> to vector<16xf32>
    %238 = vector.shape_cast %237 : vector<16xf32> to vector<16x1xf32>
    %cst_83 = arith.constant 3.200000e+01 : f32
    %239 = vector.broadcast %cst_83 : f32 to vector<16x1xf32>
    %240 = arith.divf %238, %239 : vector<16x1xf32>
    %241 = vector.broadcast %233 : vector<16x1xf32> to vector<16x32xf32>
    %242 = arith.subf %227, %241 : vector<16x32xf32>
    %cst_84 = arith.constant 9.99999974E-6 : f32
    %243 = vector.broadcast %cst_84 : f32 to vector<16x1xf32>
    %244 = arith.addf %240, %243 : vector<16x1xf32>
    %245 = math.rsqrt %244 : vector<16x1xf32>
    %246 = vector.broadcast %245 : vector<16x1xf32> to vector<16x32xf32>
    %247 = arith.mulf %242, %246 : vector<16x32xf32>
    %248 = vector.broadcast %228 : vector<1x32xf32> to vector<16x32xf32>
    %249 = arith.mulf %247, %248 : vector<16x32xf32>
    %250 = vector.broadcast %229 : vector<1x32xf32> to vector<16x32xf32>
    %251 = arith.addf %249, %250 : vector<16x32xf32>
    %c0_85 = arith.constant 0 : index
    %c256 = arith.constant 256 : index
    %252 = vector.load %arg4[%c0_85, %c256] : memref<32x320xf32, #tpu.memory_space<vmem>>, vector<32x64xf32>
    %cst_86 = arith.constant dense<0.000000e+00> : vector<16x64xf32>
    %253 = tpu.matmul %251, %252, %cst_86 {dimension_numbers = #tpu.dot_dimension_numbers<[1], [0], [0], [1], [0, 0, 1, 1], [], []>} : vector<16x32xf32>, vector<32x64xf32>, vector<16x64xf32> -> vector<16x64xf32>
    %c5 = arith.constant 5 : index
    %c0_87 = arith.constant 0 : index
    %254 = vector.load %arg6[%c5, %c0_87] : memref<16x96xf32, #tpu.memory_space<vmem>>, vector<1x64xf32>
    %255 = vector.broadcast %254 : vector<1x64xf32> to vector<16x64xf32>
    %256 = arith.addf %253, %255 : vector<16x64xf32>
    %cst_88 = arith.constant 0.000000e+00 : f32
    %257 = vector.broadcast %cst_88 : f32 to vector<16x64xf32>
    %258 = arith.maximumf %256, %257 : vector<16x64xf32>
    %c0_89 = arith.constant 0 : index
    %c0_90 = arith.constant 0 : index
    %259 = vector.load %arg5[%c0_89, %c0_90] : memref<64x32xf32, #tpu.memory_space<vmem>>, vector<64x32xf32>
    %cst_91 = arith.constant dense<0.000000e+00> : vector<16x32xf32>
    %260 = tpu.matmul %258, %259, %cst_91 {dimension_numbers = #tpu.dot_dimension_numbers<[1], [0], [0], [1], [0, 0, 1, 1], [], []>} : vector<16x64xf32>, vector<64x32xf32>, vector<16x32xf32> -> vector<16x32xf32>
    %c6 = arith.constant 6 : index
    %c0_92 = arith.constant 0 : index
    %261 = vector.load %arg6[%c6, %c0_92] : memref<16x96xf32, #tpu.memory_space<vmem>>, vector<1x32xf32>
    %262 = vector.broadcast %261 : vector<1x32xf32> to vector<16x32xf32>
    %263 = arith.addf %260, %262 : vector<16x32xf32>
    %264 = arith.addf %263, %251 : vector<16x32xf32>
    %c11 = arith.constant 11 : index
    %c0_93 = arith.constant 0 : index
    %265 = vector.load %arg6[%c11, %c0_93] : memref<16x96xf32, #tpu.memory_space<vmem>>, vector<1x32xf32>
    %c12 = arith.constant 12 : index
    %c0_94 = arith.constant 0 : index
    %266 = vector.load %arg6[%c12, %c0_94] : memref<16x96xf32, #tpu.memory_space<vmem>>, vector<1x32xf32>
    %cst_95 = arith.constant dense<0.000000e+00> : vector<16xf32>
    %267 = vector.multi_reduction <add>, %264, %cst_95 [1] : vector<16x32xf32> to vector<16xf32>
    %268 = vector.shape_cast %267 : vector<16xf32> to vector<16x1xf32>
    %cst_96 = arith.constant 3.200000e+01 : f32
    %269 = vector.broadcast %cst_96 : f32 to vector<16x1xf32>
    %270 = arith.divf %268, %269 : vector<16x1xf32>
    %271 = vector.broadcast %270 : vector<16x1xf32> to vector<16x32xf32>
    %272 = arith.subf %264, %271 : vector<16x32xf32>
    %273 = arith.mulf %272, %272 : vector<16x32xf32>
    %cst_97 = arith.constant dense<0.000000e+00> : vector<16xf32>
    %274 = vector.multi_reduction <add>, %273, %cst_97 [1] : vector<16x32xf32> to vector<16xf32>
    %275 = vector.shape_cast %274 : vector<16xf32> to vector<16x1xf32>
    %cst_98 = arith.constant 3.200000e+01 : f32
    %276 = vector.broadcast %cst_98 : f32 to vector<16x1xf32>
    %277 = arith.divf %275, %276 : vector<16x1xf32>
    %278 = vector.broadcast %270 : vector<16x1xf32> to vector<16x32xf32>
    %279 = arith.subf %264, %278 : vector<16x32xf32>
    %cst_99 = arith.constant 9.99999974E-6 : f32
    %280 = vector.broadcast %cst_99 : f32 to vector<16x1xf32>
    %281 = arith.addf %277, %280 : vector<16x1xf32>
    %282 = math.rsqrt %281 : vector<16x1xf32>
    %283 = vector.broadcast %282 : vector<16x1xf32> to vector<16x32xf32>
    %284 = arith.mulf %279, %283 : vector<16x32xf32>
    %285 = vector.broadcast %265 : vector<1x32xf32> to vector<16x32xf32>
    %286 = arith.mulf %284, %285 : vector<16x32xf32>
    %287 = vector.broadcast %266 : vector<1x32xf32> to vector<16x32xf32>
    %288 = arith.addf %286, %287 : vector<16x32xf32>
    %c0_100 = arith.constant 0 : index
    %c0_101 = arith.constant 0 : index
    %289 = vector.load %arg7[%c0_100, %c0_101] : memref<16x32xf32, #tpu.memory_space<vmem>>, vector<16x32xf32>
    tpu.vector_store %arg7[%c0_100, %c0_101], %288 {strides = array<i32>} : memref<16x32xf32, #tpu.memory_space<vmem>>, vector<16x32xf32>,
    return
  }
}

</mosaic_0001>

<llo_original>
// kernel: decoder_layer.1
$region0: #{decoder_layer.1}
  #allocation0 [shape = 'u32[]', space=smem, size = 0x4, offset = 0x4, fixed_abs, tag = 'smem constant byte address 0x4 - core index']
  #allocation1 [shape = 'u32[144,128]{1,0:T(1,128)}', space=vmem, size = 0x12000, scoped, tag = 'internal scratch']
  %s0 = inlined_call_operand.vmem [shape: f32[16,32], index: 0, kind: input, shape index: {}]
  %s1 = inlined_call_operand.vmem [shape: f32[16,32], index: 1, kind: input, shape index: {}]
  %s2 = inlined_call_operand.vmem [shape: f32[16,16], index: 2, kind: input, shape index: {}]
  %s3 = inlined_call_operand.vmem [shape: f32[16,16], index: 3, kind: input, shape index: {}]
  %s4 = inlined_call_operand.vmem [shape: f32[32,320], index: 4, kind: input, shape index: {}]
  %s5 = inlined_call_operand.vmem [shape: f32[64,32], index: 5, kind: input, shape index: {}]
  %s6 = inlined_call_operand.vmem [shape: f32[16,96], index: 6, kind: input, shape index: {}]
  %s7 = inlined_call_operand.hbm [shape: f32[16,32], index: 7, kind: output, shape index: {}]
  %s8 = sld [smem:[#allocation0]]
  $region38: #{decoder_layer.1} parent=0
    _
  %s10 = ssub.s32 1, %s8
  %s11 = scalar_select 0, %s10, %s8
  $region1: #{decoder_layer.1} parent=0
    #allocation2 [shape = 'u8[8192]{0}', space=vmem, size = 0x2000, scoped, tag = 'output window, operand 0, single buffered']
    #allocation3 [shape = 's32[1]{0}', space=sflag, size = 0x4, scoped, tag = 'scoped memory for decoder_layer.1']
    %12 = vsyncpa [#allocation3], 0
    // Predicated region
    $region2: #{decoder_layer.1} parent=1 // pred_check
      _
    $region3: #{decoder_layer.1} parent=1 // pred_check_branch
      %14 = sbr.rel (0) target = $region5
    $region4: #{decoder_layer.1} parent=1 // pred_region
      _
    $region5: #{decoder_layer.1} parent=1 // pred_fallthru
      _
    // Predicated region
    $region6: #{decoder_layer.1} parent=1 // pred_check
      _
    $region7: #{decoder_layer.1} parent=1 // pred_check_branch
      %16 = sbr.rel (0) target = $region9
    $region8: #{decoder_layer.1} parent=1 // pred_region
      _
    $region9: #{decoder_layer.1} parent=1 // pred_fallthru
      _
    // Predicated region
    $region10: #{decoder_layer.1} parent=1 // pred_check
      _
    $region11: #{decoder_layer.1} parent=1 // pred_check_branch
      %18 = sbr.rel (0) target = $region13
    $region12: #{decoder_layer.1} parent=1 // pred_region
      _
    $region13: #{decoder_layer.1} parent=1 // pred_fallthru
      _
    // Predicated region
    $region14: #{decoder_layer.1} parent=1 // pred_check
      _
    $region15: #{decoder_layer.1} parent=1 // pred_check_branch
      %20 = sbr.rel (0) target = $region17
    $region16: #{decoder_layer.1} parent=1 // pred_region
      _
    $region17: #{decoder_layer.1} parent=1 // pred_fallthru
      _
    // Predicated region
    $region18: #{decoder_layer.1} parent=1 // pred_check
      _
    $region19: #{decoder_layer.1} parent=1 // pred_check_branch
      %22 = sbr.rel (0) target = $region21
    $region20: #{decoder_layer.1} parent=1 // pred_region
      _
    $region21: #{decoder_layer.1} parent=1 // pred_fallthru
      _
    // Predicated region
    $region22: #{decoder_layer.1} parent=1 // pred_check
      _
    $region23: #{decoder_layer.1} parent=1 // pred_check_branch
      %24 = sbr.rel (0) target = $region25
    $region24: #{decoder_layer.1} parent=1 // pred_region
      _
    $region25: #{decoder_layer.1} parent=1 // pred_fallthru
      _
    // Predicated region
    $region26: #{decoder_layer.1} parent=1 // pred_check
      _
    $region27: #{decoder_layer.1} parent=1 // pred_check_branch
      %26 = sbr.rel (0) target = $region29
    $region28: #{decoder_layer.1} parent=1 // pred_region
      _
    $region29: #{decoder_layer.1} parent=1 // pred_fallthru
      _
    %v27 = vld [vmem:[%s0] sm:$0xff]
    %v28 = vld [vmem:[%s0 + $0x8] sm:$0xff]
    %v29 = vld [vmem:[%s1] sm:$0xff]
    %v30 = vld [vmem:[%s1 + $0x8] sm:$0xff]
    %v31 = vld [vmem:[%s2] sm:$0xff]
    %v32 = vld [vmem:[%s2 + $0x8] sm:$0xff]
    %v33 = vld [vmem:[%s3] sm:$0xff]
    %v34 = vld [vmem:[%s3 + $0x8] sm:$0xff]
    %v35 = vld [vmem:[%s4] sm:$0xff]
    %v36 = vld [vmem:[%s4 + $0x18] sm:$0xff]
    %v37 = vld [vmem:[%s4 + $0x30] sm:$0xff]
    %v38 = vld [vmem:[%s4 + $0x48] sm:$0xff]
    %v39 = vld [vmem:[%s6] sm:$0x1]
    %v40 = vlaneseq
    %v41 = vshrl.u32 %v40, 7
    %v42 = vsub.s32 0, %v41
    %v43 = vrot.slane %v39, %v42
    %vm44 = vcmask 261120
    %v46 = vsel %vm44, %v27, 0
    %v49 = vsel %vm44, %v28, 0
    %51 = vmatprep.subr.mxu0 0.0
    %52 = vmatpush1.msra.mxu0 %v35
    %53 = vmatprep.subr.mxu0 0.0
    %54 = vmatpush1.msra.mxu0 %v36
    %55 = vmatprep.subr.mxu0 0.0
    %56 = vmatpush1.msra.mxu0 %v37
    %57 = vmatprep.subr.mxu0 0.0
    %58 = vmatpush1.msra.mxu0 %v38
    %59 = vmatprep.subr.mxu0 0.0
    %60 = vmatpush1.msra.mxu0 0.0
    %61 = vmatprep.subr.mxu0 0.0
    %62 = vmatpush1.msra.mxu0 0.0
    %63 = vmatprep.subr.mxu0 0.0
    %64 = vmatpush1.msra.mxu0 0.0
    %65 = vmatprep.subr.mxu0 0.0
    %66 = vmatpush1.msra.mxu0 0.0
    %67 = vmatprep.subr.mxu0 0.0
    %68 = vmatpush1.msra.mxu0 0.0
    %69 = vmatprep.subr.mxu0 0.0
    %70 = vmatpush1.msra.mxu0 0.0
    %71 = vmatprep.subr.mxu0 0.0
    %72 = vmatpush1.msra.mxu0 0.0
    %73 = vmatprep.subr.mxu0 0.0
    %74 = vmatpush1.msra.mxu0 0.0
    %75 = vmatprep.subr.mxu0 0.0
    %76 = vmatpush1.msra.mxu0 0.0
    %77 = vmatprep.subr.mxu0 0.0
    %78 = vmatpush1.msra.mxu0 0.0
    %79 = vmatprep.subr.mxu0 0.0
    %80 = vmatpush1.msra.mxu0 0.0
    %81 = vmatprep.subr.mxu0 0.0
    %82 = vmatpush1.msra.mxu0 0.0
    %83 = vmatprep.subr.mxu0 0.0
    %84 = vmatpush1.msra.mxu0 0.0
    %85 = vmatprep.subr.mxu0 0.0
    %86 = vmatpush1.msra.mxu0 0.0
    %87 = vmatprep.subr.mxu0 0.0
    %88 = vmatpush1.msra.mxu0 0.0
    %89 = vmatprep.subr.mxu0 0.0
    %90 = vmatpush1.msra.mxu0 0.0
    %91 = vmatprep.subr.mxu0 0.0
    %92 = vmatpush1.msra.mxu0 0.0
    %93 = vmatprep.subr.mxu0 0.0
    %94 = vmatpush1.msra.mxu0 0.0
    %95 = vmatprep.subr.mxu0 0.0
    %96 = vmatpush1.msra.mxu0 0.0
    %97 = vmatprep.subr.mxu0 0.0
    %98 = vmatpush1.msra.mxu0 0.0
    %99 = vmatprep.subr.mxu0 0.0
    %100 = vmatpush1.msra.mxu0 0.0
    %101 = vmatprep.subr.mxu0 0.0
    %102 = vmatpush1.msra.mxu0 0.0
    %103 = vmatprep.subr.mxu0 0.0
    %104 = vmatpush1.msra.mxu0 0.0
    %105 = vmatprep.subr.mxu0 0.0
    %106 = vmatpush1.msra.mxu0 0.0
    %107 = vmatprep.subr.mxu0 0.0
    %108 = vmatpush1.msra.mxu0 0.0
    %109 = vmatprep.subr.mxu0 0.0
    %110 = vmatpush1.msra.mxu0 0.0
    %111 = vmatprep.subr.mxu0 0.0
    %112 = vmatpush1.msra.mxu0 0.0
    %113 = vmatprep.subr.mxu0 0.0
    %114 = vmatpush1.msra.mxu0 0.0
    %115 = vmatprep.mubr.f32.mxu0 0.0
    %116 = vmatmul.mubr.f32.gmra.mrb[0].mxu0 %v46
    %v117 = vpop.f32.mrb[0].mxu0
    %v118 = vadd.f32 %v43, %v117
    %v119 = vpop.f32.mrb[0].mxu0
    %120 = vmatprep.mubr.f32.mxu0 0.0
    %121 = vmatmul.mubr.f32.gmra.mrb[0].mxu0 %v49
    %v122 = vpop.f32.mrb[0].mxu0
    %v123 = vadd.f32 %v43, %v122
    %v124 = vpop.f32.mrb[0].mxu0
    %125 = vdwg.mxu0
    %v126 = vld [vmem:[%s4 + $0x8] sm:$0xff]
    %v127 = vld [vmem:[%s4 + $0x20] sm:$0xff]
    %v128 = vld [vmem:[%s4 + $0x38] sm:$0xff]
    %v129 = vld [vmem:[%s4 + $0x50] sm:$0xff]
    %132 = vrot.lane.b32.xlu0 %v118, 96
    %v133 = vpop.permute.xlu0 %132
    %134 = vrot.lane.b32.xlu0 %v123, 96
    %v135 = vpop.permute.xlu0 %134
    %vm136 = vcmask 64512
    %v137 = vsel %vm136, %v118, 0
    %v139 = vsel %vm136, %v123, 0
    %v141 = vsel %vm136, %v133, 0
    %v143 = vsel %vm136, %v135, 0
    %145 = vmatprep.subr.mxu0 0.0
    %146 = vmatpush1.xpose.msra.mxu0 %v141
    %147 = vmatprep.subr.mxu0 0.0
    %148 = vmatpush1.xpose.msra.mxu0 %v143
    %149 = vmatprep.subr.mxu0 0.0
    %150 = vmatpush1.xpose.msra.mxu0 0.0
    %151 = vmatprep.subr.mxu0 0.0
    %152 = vmatpush1.xpose.msra.mxu0 0.0
    %153 = vmatprep.subr.mxu0 0.0
    %154 = vmatpush1.xpose.msra.mxu0 0.0
    %155 = vmatprep.subr.mxu0 0.0
    %156 = vmatpush1.xpose.msra.mxu0 0.0
    %157 = vmatprep.subr.mxu0 0.0
    %158 = vmatpush1.xpose.msra.mxu0 0.0
    %159 = vmatprep.subr.mxu0 0.0
    %160 = vmatpush1.xpose.msra.mxu0 0.0
    %161 = vmatprep.subr.mxu0 0.0
    %162 = vmatpush1.xpose.msra.mxu0 0.0
    %163 = vmatprep.subr.mxu0 0.0
    %164 = vmatpush1.xpose.msra.mxu0 0.0
    %165 = vmatprep.subr.mxu0 0.0
    %166 = vmatpush1.xpose.msra.mxu0 0.0
    %167 = vmatprep.subr.mxu0 0.0
    %168 = vmatpush1.xpose.msra.mxu0 0.0
    %169 = vmatprep.subr.mxu0 0.0
    %170 = vmatpush1.xpose.msra.mxu0 0.0
    %171 = vmatprep.subr.mxu0 0.0
    %172 = vmatpush1.xpose.msra.mxu0 0.0
    %173 = vmatprep.subr.mxu0 0.0
    %174 = vmatpush1.xpose.msra.mxu0 0.0
    %175 = vmatprep.subr.mxu0 0.0
    %176 = vmatpush1.xpose.msra.mxu0 0.0
    %177 = vmatprep.subr.mxu0 0.0
    %178 = vmatpush1.xpose.msra.mxu0 0.0
    %179 = vmatprep.subr.mxu0 0.0
    %180 = vmatpush1.xpose.msra.mxu0 0.0
    %181 = vmatprep.subr.mxu0 0.0
    %182 = vmatpush1.xpose.msra.mxu0 0.0
    %183 = vmatprep.subr.mxu0 0.0
    %184 = vmatpush1.xpose.msra.mxu0 0.0
    %185 = vmatprep.subr.mxu0 0.0
    %186 = vmatpush1.xpose.msra.mxu0 0.0
    %187 = vmatprep.subr.mxu0 0.0
    %188 = vmatpush1.xpose.msra.mxu0 0.0
    %189 = vmatprep.subr.mxu0 0.0
    %190 = vmatpush1.xpose.msra.mxu0 0.0
    %191 = vmatprep.subr.mxu0 0.0
    %192 = vmatpush1.xpose.msra.mxu0 0.0
    %193 = vmatprep.subr.mxu0 0.0
    %194 = vmatpush1.xpose.msra.mxu0 0.0
    %195 = vmatprep.subr.mxu0 0.0
    %196 = vmatpush1.xpose.msra.mxu0 0.0
    %197 = vmatprep.subr.mxu0 0.0
    %198 = vmatpush1.xpose.msra.mxu0 0.0
    %199 = vmatprep.subr.mxu0 0.0
    %200 = vmatpush1.xpose.msra.mxu0 0.0
    %201 = vmatprep.subr.mxu0 0.0
    %202 = vmatpush1.xpose.msra.mxu0 0.0
    %203 = vmatprep.subr.mxu0 0.0
    %204 = vmatpush1.xpose.msra.mxu0 0.0
    %205 = vmatprep.subr.mxu0 0.0
    %206 = vmatpush1.xpose.msra.mxu0 0.0
    %207 = vmatprep.subr.mxu0 0.0
    %208 = vmatpush1.xpose.msra.mxu0 0.0
    %209 = vmatprep.mubr.f32.mxu0 0.0
    %210 = vmatmul.mubr.f32.gmra.mrb[0].mxu0 %v137
    %v211 = vpop.f32.mrb[0].mxu0
    %v212 = vadd.f32 0.0, %v211
    %v213 = vpop.f32.mrb[0].mxu0
    %214 = vmatprep.mubr.f32.mxu0 0.0
    %215 = vmatmul.mubr.f32.gmra.mrb[0].mxu0 %v139
    %v216 = vpop.f32.mrb[0].mxu0
    %v217 = vadd.f32 0.0, %v216
    %v218 = vpop.f32.mrb[0].mxu0
    %219 = vdwg.mxu0
    %v220 = vmul.f32 %v212, 0.35355338
    %v221 = vmul.f32 %v217, 0.35355338
    %v222 = vadd.f32 %v220, %v31
    %v223 = vadd.f32 %v221, %v32
    %vm224 = vcmask 130048
    %v225 = vsel %vm224, %v222, -inf
    %226 = vmax.xlane.f32.xlu0 %v225
    %v227 = vpop.xlane.xlu0 %226
    %v228 = vsel %vm224, %v223, -inf
    %229 = vmax.xlane.f32.xlu0 %v228
    %v230 = vpop.xlane.xlu0 %229
    %v231 = vsub.f32 %v222, %v227
    %v232 = vsub.f32 %v223, %v230
    %v233 = vmul.f32 %v231, 1.442695
    %v234 = vpow.pop %v233
    %v235 = vmul.f32 %v232, 1.442695
    %v236 = vpow.pop %v235
    %v237 = vsel %vm224, %v234, 0.0
    %238 = vadd.xlane.f32.xlu0 %v237
    %v239 = vpop.xlane.xlu0 %238
    %v240 = vsel %vm224, %v236, 0.0
    %241 = vadd.xlane.f32.xlu0 %v240
    %v242 = vpop.xlane.xlu0 %241
    %v243 = vrcp.pop %v239
    %v244 = vrcp.pop %v242
    %v245 = vmul.f32 %v234, %v243
    %v246 = vmul.f32 %v236, %v244
    %247 = vrot.lane.b32.xlu0 %v118, 64
    %v248 = vpop.permute.xlu0 %247
    %249 = vrot.lane.b32.xlu0 %v123, 64
    %v250 = vpop.permute.xlu0 %249
    %v254 = vsel %vm224, %v245, 0
    %v257 = vsel %vm224, %v246, 0
    %259 = vmatprep.subr.mxu0 0.0
    %260 = vmatpush1.msra.mxu0 %v248
    %261 = vmatprep.subr.mxu0 0.0
    %262 = vmatpush1.msra.mxu0 %v250
    %263 = vmatprep.subr.mxu0 0.0
    %264 = vmatpush1.msra.mxu0 0.0
    %265 = vmatprep.subr.mxu0 0.0
    %266 = vmatpush1.msra.mxu0 0.0
    %267 = vmatprep.subr.mxu0 0.0
    %268 = vmatpush1.msra.mxu0 0.0
    %269 = vmatprep.subr.mxu0 0.0
    %270 = vmatpush1.msra.mxu0 0.0
    %271 = vmatprep.subr.mxu0 0.0
    %272 = vmatpush1.msra.mxu0 0.0
    %273 = vmatprep.subr.mxu0 0.0
    %274 = vmatpush1.msra.mxu0 0.0
    %275 = vmatprep.subr.mxu0 0.0
    %276 = vmatpush1.msra.mxu0 0.0
    %277 = vmatprep.subr.mxu0 0.0
    %278 = vmatpush1.msra.mxu0 0.0
    %279 = vmatprep.subr.mxu0 0.0
    %280 = vmatpush1.msra.mxu0 0.0
    %281 = vmatprep.subr.mxu0 0.0
    %282 = vmatpush1.msra.mxu0 0.0
    %283 = vmatprep.subr.mxu0 0.0
    %284 = vmatpush1.msra.mxu0 0.0
    %285 = vmatprep.subr.mxu0 0.0
    %286 = vmatpush1.msra.mxu0 0.0
    %287 = vmatprep.subr.mxu0 0.0
    %288 = vmatpush1.msra.mxu0 0.0
    %289 = vmatprep.subr.mxu0 0.0
    %290 = vmatpush1.msra.mxu0 0.0
    %291 = vmatprep.subr.mxu0 0.0
    %292 = vmatpush1.msra.mxu0 0.0
    %293 = vmatprep.subr.mxu0 0.0
    %294 = vmatpush1.msra.mxu0 0.0
    %295 = vmatprep.subr.mxu0 0.0
    %296 = vmatpush1.msra.mxu0 0.0
    %297 = vmatprep.subr.mxu0 0.0
    %298 = vmatpush1.msra.mxu0 0.0
    %299 = vmatprep.subr.mxu0 0.0
    %300 = vmatpush1.msra.mxu0 0.0
    %301 = vmatprep.subr.mxu0 0.0
    %302 = vmatpush1.msra.mxu0 0.0
    %303 = vmatprep.subr.mxu0 0.0
    %304 = vmatpush1.msra.mxu0 0.0
    %305 = vmatprep.subr.mxu0 0.0
    %306 = vmatpush1.msra.mxu0 0.0
    %307 = vmatprep.subr.mxu0 0.0
    %308 = vmatpush1.msra.mxu0 0.0
    %309 = vmatprep.subr.mxu0 0.0
    %310 = vmatpush1.msra.mxu0 0.0
    %311 = vmatprep.subr.mxu0 0.0
    %312 = vmatpush1.msra.mxu0 0.0
    %313 = vmatprep.subr.mxu0 0.0
    %314 = vmatpush1.msra.mxu0 0.0
    %315 = vmatprep.subr.mxu0 0.0
    %316 = vmatpush1.msra.mxu0 0.0
    %317 = vmatprep.subr.mxu0 0.0
    %318 = vmatpush1.msra.mxu0 0.0
    %319 = vmatprep.subr.mxu0 0.0
    %320 = vmatpush1.msra.mxu0 0.0
    %321 = vmatprep.subr.mxu0 0.0
    %322 = vmatpush1.msra.mxu0 0.0
    %323 = vmatprep.mubr.f32.mxu0 0.0
    %324 = vmatmul.mubr.f32.gmra.mrb[0].mxu0 %v254
    %v325 = vpop.f32.mrb[0].mxu0
    %v326 = vadd.f32 0.0, %v325
    %v327 = vpop.f32.mrb[0].mxu0
    %328 = vmatprep.mubr.f32.mxu0 0.0
    %329 = vmatmul.mubr.f32.gmra.mrb[0].mxu0 %v257
    %v330 = vpop.f32.mrb[0].mxu0
    %v331 = vadd.f32 0.0, %v330
    %v332 = vpop.f32.mrb[0].mxu0
    %333 = vdwg.mxu0
    %334 = vrot.lane.b32.xlu0 %v118, 120
    %v335 = vpop.permute.xlu0 %334
    %336 = vrot.lane.b32.xlu0 %v123, 120
    %v337 = vpop.permute.xlu0 %336
    %338 = vrot.lane.b32.xlu0 %v118, 88
    %v339 = vpop.permute.xlu0 %338
    %340 = vrot.lane.b32.xlu0 %v123, 88
    %v341 = vpop.permute.xlu0 %340
    %v342 = vsel %vm136, %v335, 0
    %v344 = vsel %vm136, %v337, 0
    %v346 = vsel %vm136, %v339, 0
    %v348 = vsel %vm136, %v341, 0
    %350 = vmatprep.subr.mxu0 0.0
    %351 = vmatpush1.xpose.msra.mxu0 %v346
    %352 = vmatprep.subr.mxu0 0.0
    %353 = vmatpush1.xpose.msra.mxu0 %v348
    %354 = vmatprep.subr.mxu0 0.0
    %355 = vmatpush1.xpose.msra.mxu0 0.0
    %356 = vmatprep.subr.mxu0 0.0
    %357 = vmatpush1.xpose.msra.mxu0 0.0
    %358 = vmatprep.subr.mxu0 0.0
    %359 = vmatpush1.xpose.msra.mxu0 0.0
    %360 = vmatprep.subr.mxu0 0.0
    %361 = vmatpush1.xpose.msra.mxu0 0.0
    %362 = vmatprep.subr.mxu0 0.0
    %363 = vmatpush1.xpose.msra.mxu0 0.0
    %364 = vmatprep.subr.mxu0 0.0
    %365 = vmatpush1.xpose.msra.mxu0 0.0
    %366 = vmatprep.subr.mxu0 0.0
    %367 = vmatpush1.xpose.msra.mxu0 0.0
    %368 = vmatprep.subr.mxu0 0.0
    %369 = vmatpush1.xpose.msra.mxu0 0.0
    %370 = vmatprep.subr.mxu0 0.0
    %371 = vmatpush1.xpose.msra.mxu0 0.0
    %372 = vmatprep.subr.mxu0 0.0
    %373 = vmatpush1.xpose.msra.mxu0 0.0
    %374 = vmatprep.subr.mxu0 0.0
    %375 = vmatpush1.xpose.msra.mxu0 0.0
    %376 = vmatprep.subr.mxu0 0.0
    %377 = vmatpush1.xpose.msra.mxu0 0.0
    %378 = vmatprep.subr.mxu0 0.0
    %379 = vmatpush1.xpose.msra.mxu0 0.0
    %380 = vmatprep.subr.mxu0 0.0
    %381 = vmatpush1.xpose.msra.mxu0 0.0
    %382 = vmatprep.subr.mxu0 0.0
    %383 = vmatpush1.xpose.msra.mxu0 0.0
    %384 = vmatprep.subr.mxu0 0.0
    %385 = vmatpush1.xpose.msra.mxu0 0.0
    %386 = vmatprep.subr.mxu0 0.0
    %387 = vmatpush1.xpose.msra.mxu0 0.0
    %388 = vmatprep.subr.mxu0 0.0
    %389 = vmatpush1.xpose.msra.mxu0 0.0
    %390 = vmatprep.subr.mxu0 0.0
    %391 = vmatpush1.xpose.msra.mxu0 0.0
    %392 = vmatprep.subr.mxu0 0.0
    %393 = vmatpush1.xpose.msra.mxu0 0.0
    %394 = vmatprep.subr.mxu0 0.0
    %395 = vmatpush1.xpose.msra.mxu0 0.0
    %396 = vmatprep.subr.mxu0 0.0
    %397 = vmatpush1.xpose.msra.mxu0 0.0
    %398 = vmatprep.subr.mxu0 0.0
    %399 = vmatpush1.xpose.msra.mxu0 0.0
    %400 = vmatprep.subr.mxu0 0.0
    %401 = vmatpush1.xpose.msra.mxu0 0.0
    %402 = vmatprep.subr.mxu0 0.0
    %403 = vmatpush1.xpose.msra.mxu0 0.0
    %404 = vmatprep.subr.mxu0 0.0
    %405 = vmatpush1.xpose.msra.mxu0 0.0
    %406 = vmatprep.subr.mxu0 0.0
    %407 = vmatpush1.xpose.msra.mxu0 0.0
    %408 = vmatprep.subr.mxu0 0.0
    %409 = vmatpush1.xpose.msra.mxu0 0.0
    %410 = vmatprep.subr.mxu0 0.0
    %411 = vmatpush1.xpose.msra.mxu0 0.0
    %412 = vmatprep.subr.mxu0 0.0
    %413 = vmatpush1.xpose.msra.mxu0 0.0
    %414 = vmatprep.mubr.f32.mxu0 0.0
    %415 = vmatmul.mubr.f32.gmra.mrb[0].mxu0 %v342
    %v416 = vpop.f32.mrb[0].mxu0
    %v417 = vadd.f32 0.0, %v416
    %v418 = vpop.f32.mrb[0].mxu0
    %419 = vmatprep.mubr.f32.mxu0 0.0
    %420 = vmatmul.mubr.f32.gmra.mrb[0].mxu0 %v344
    %v421 = vpop.f32.mrb[0].mxu0
    %v422 = vadd.f32 0.0, %v421
    %v423 = vpop.f32.mrb[0].mxu0
    %424 = vdwg.mxu0
    %v425 = vmul.f32 %v417, 0.35355338
    %v426 = vmul.f32 %v422, 0.35355338
    %v427 = vadd.f32 %v425, %v31
    %v428 = vadd.f32 %v426, %v32
    %v429 = vsel %vm224, %v427, -inf
    %430 = vmax.xlane.f32.xlu0 %v429
    %v431 = vpop.xlane.xlu0 %430
    %v432 = vsel %vm224, %v428, -inf
    %433 = vmax.xlane.f32.xlu0 %v432
    %v434 = vpop.xlane.xlu0 %433
    %v435 = vsub.f32 %v427, %v431
    %v436 = vsub.f32 %v428, %v434
    %v437 = vmul.f32 %v435, 1.442695
    %v438 = vpow.pop %v437
    %v439 = vmul.f32 %v436, 1.442695
    %v440 = vpow.pop %v439
    %v441 = vsel %vm224, %v438, 0.0
    %442 = vadd.xlane.f32.xlu0 %v441
    %v443 = vpop.xlane.xlu0 %442
    %v444 = vsel %vm224, %v440, 0.0
    %445 = vadd.xlane.f32.xlu0 %v444
    %v446 = vpop.xlane.xlu0 %445
    %v447 = vrcp.pop %v443
    %v448 = vrcp.pop %v446
    %v449 = vmul.f32 %v438, %v447
    %v450 = vmul.f32 %v440, %v448
    %451 = vrot.lane.b32.xlu0 %v118, 56
    %v452 = vpop.permute.xlu0 %451
    %453 = vrot.lane.b32.xlu0 %v123, 56
    %v454 = vpop.permute.xlu0 %453
    %v458 = vsel %vm224, %v449, 0
    %v461 = vsel %vm224, %v450, 0
    %463 = vmatprep.subr.mxu0 0.0
    %464 = vmatpush1.msra.mxu0 %v452
    %465 = vmatprep.subr.mxu0 0.0
    %466 = vmatpush1.msra.mxu0 %v454
    %467 = vmatprep.subr.mxu0 0.0
    %468 = vmatpush1.msra.mxu0 0.0
    %469 = vmatprep.subr.mxu0 0.0
    %470 = vmatpush1.msra.mxu0 0.0
    %471 = vmatprep.subr.mxu0 0.0
    %472 = vmatpush1.msra.mxu0 0.0
    %473 = vmatprep.subr.mxu0 0.0
    %474 = vmatpush1.msra.mxu0 0.0
    %475 = vmatprep.subr.mxu0 0.0
    %476 = vmatpush1.msra.mxu0 0.0
    %477 = vmatprep.subr.mxu0 0.0
    %478 = vmatpush1.msra.mxu0 0.0
    %479 = vmatprep.subr.mxu0 0.0
    %480 = vmatpush1.msra.mxu0 0.0
    %481 = vmatprep.subr.mxu0 0.0
    %482 = vmatpush1.msra.mxu0 0.0
    %483 = vmatprep.subr.mxu0 0.0
    %484 = vmatpush1.msra.mxu0 0.0
    %485 = vmatprep.subr.mxu0 0.0
    %486 = vmatpush1.msra.mxu0 0.0
    %487 = vmatprep.subr.mxu0 0.0
    %488 = vmatpush1.msra.mxu0 0.0
    %489 = vmatprep.subr.mxu0 0.0
    %490 = vmatpush1.msra.mxu0 0.0
    %491 = vmatprep.subr.mxu0 0.0
    %492 = vmatpush1.msra.mxu0 0.0
    %493 = vmatprep.subr.mxu0 0.0
    %494 = vmatpush1.msra.mxu0 0.0
    %495 = vmatprep.subr.mxu0 0.0
    %496 = vmatpush1.msra.mxu0 0.0
    %497 = vmatprep.subr.mxu0 0.0
    %498 = vmatpush1.msra.mxu0 0.0
    %499 = vmatprep.subr.mxu0 0.0
    %500 = vmatpush1.msra.mxu0 0.0
    %501 = vmatprep.subr.mxu0 0.0
    %502 = vmatpush1.msra.mxu0 0.0
    %503 = vmatprep.subr.mxu0 0.0
    %504 = vmatpush1.msra.mxu0 0.0
    %505 = vmatprep.subr.mxu0 0.0
    %506 = vmatpush1.msra.mxu0 0.0
    %507 = vmatprep.subr.mxu0 0.0
    %508 = vmatpush1.msra.mxu0 0.0
    %509 = vmatprep.subr.mxu0 0.0
    %510 = vmatpush1.msra.mxu0 0.0
    %511 = vmatprep.subr.mxu0 0.0
    %512 = vmatpush1.msra.mxu0 0.0
    %513 = vmatprep.subr.mxu0 0.0
    %514 = vmatpush1.msra.mxu0 0.0
    %515 = vmatprep.subr.mxu0 0.0
    %516 = vmatpush1.msra.mxu0 0.0
    %517 = vmatprep.subr.mxu0 0.0
    %518 = vmatpush1.msra.mxu0 0.0
    %519 = vmatprep.subr.mxu0 0.0
    %520 = vmatpush1.msra.mxu0 0.0
    %521 = vmatprep.subr.mxu0 0.0
    %522 = vmatpush1.msra.mxu0 0.0
    %523 = vmatprep.subr.mxu0 0.0
    %524 = vmatpush1.msra.mxu0 0.0
    %525 = vmatprep.subr.mxu0 0.0
    %526 = vmatpush1.msra.mxu0 0.0
    %527 = vmatprep.mubr.f32.mxu0 0.0
    %528 = vmatmul.mubr.f32.gmra.mrb[0].mxu0 %v458
    %v529 = vpop.f32.mrb[0].mxu0
    %v530 = vadd.f32 0.0, %v529
    %v531 = vpop.f32.mrb[0].mxu0
    %532 = vmatprep.mubr.f32.mxu0 0.0
    %533 = vmatmul.mubr.f32.gmra.mrb[0].mxu0 %v461
    %v534 = vpop.f32.mrb[0].mxu0
    %v535 = vadd.f32 0.0, %v534
    %v536 = vpop.f32.mrb[0].mxu0
    %537 = vdwg.mxu0
    %539 = vrot.lane.b32.xlu0 %v127, 64
    %v540 = vpop.permute.xlu0 %539
    %v543 = vsel %vm136, %v530, 0
    %v546 = vsel %vm136, %v535, 0
    %548 = vmatprep.subr.mxu0 0.0
    %549 = vmatpush1.msra.mxu0 %v540
    %550 = vmatprep.subr.mxu0 0.0
    %551 = vmatpush1.msra.mxu0 0.0
    %552 = vmatprep.subr.mxu0 0.0
    %553 = vmatpush1.msra.mxu0 0.0
    %554 = vmatprep.subr.mxu0 0.0
    %555 = vmatpush1.msra.mxu0 0.0
    %556 = vmatprep.subr.mxu0 0.0
    %557 = vmatpush1.msra.mxu0 0.0
    %558 = vmatprep.subr.mxu0 0.0
    %559 = vmatpush1.msra.mxu0 0.0
    %560 = vmatprep.subr.mxu0 0.0
    %561 = vmatpush1.msra.mxu0 0.0
    %562 = vmatprep.subr.mxu0 0.0
    %563 = vmatpush1.msra.mxu0 0.0
    %564 = vmatprep.subr.mxu0 0.0
    %565 = vmatpush1.msra.mxu0 0.0
    %566 = vmatprep.subr.mxu0 0.0
    %567 = vmatpush1.msra.mxu0 0.0
    %568 = vmatprep.subr.mxu0 0.0
    %569 = vmatpush1.msra.mxu0 0.0
    %570 = vmatprep.subr.mxu0 0.0
    %571 = vmatpush1.msra.mxu0 0.0
    %572 = vmatprep.subr.mxu0 0.0
    %573 = vmatpush1.msra.mxu0 0.0
    %574 = vmatprep.subr.mxu0 0.0
    %575 = vmatpush1.msra.mxu0 0.0
    %576 = vmatprep.subr.mxu0 0.0
    %577 = vmatpush1.msra.mxu0 0.0
    %578 = vmatprep.subr.mxu0 0.0
    %579 = vmatpush1.msra.mxu0 0.0
    %580 = vmatprep.subr.mxu0 0.0
    %581 = vmatpush1.msra.mxu0 0.0
    %582 = vmatprep.subr.mxu0 0.0
    %583 = vmatpush1.msra.mxu0 0.0
    %584 = vmatprep.subr.mxu0 0.0
    %585 = vmatpush1.msra.mxu0 0.0
    %586 = vmatprep.subr.mxu0 0.0
    %587 = vmatpush1.msra.mxu0 0.0
    %588 = vmatprep.subr.mxu0 0.0
    %589 = vmatpush1.msra.mxu0 0.0
    %590 = vmatprep.subr.mxu0 0.0
    %591 = vmatpush1.msra.mxu0 0.0
    %592 = vmatprep.subr.mxu0 0.0
    %593 = vmatpush1.msra.mxu0 0.0
    %594 = vmatprep.subr.mxu0 0.0
    %595 = vmatpush1.msra.mxu0 0.0
    %596 = vmatprep.subr.mxu0 0.0
    %597 = vmatpush1.msra.mxu0 0.0
    %598 = vmatprep.subr.mxu0 0.0
    %599 = vmatpush1.msra.mxu0 0.0
    %600 = vmatprep.subr.mxu0 0.0
    %601 = vmatpush1.msra.mxu0 0.0
    %602 = vmatprep.subr.mxu0 0.0
    %603 = vmatpush1.msra.mxu0 0.0
    %604 = vmatprep.subr.mxu0 0.0
    %605 = vmatpush1.msra.mxu0 0.0
    %606 = vmatprep.subr.mxu0 0.0
    %607 = vmatpush1.msra.mxu0 0.0
    %608 = vmatprep.subr.mxu0 0.0
    %609 = vmatpush1.msra.mxu0 0.0
    %610 = vmatprep.subr.mxu0 0.0
    %611 = vmatpush1.msra.mxu0 0.0
    %612 = vmatprep.mubr.f32.mxu0 0.0
    %613 = vmatmul.mubr.f32.gmra.mrb[0].mxu0 %v543
    %v614 = vpop.f32.mrb[0].mxu0
    %v615 = vadd.f32 0.0, %v614
    %v616 = vpop.f32.mrb[0].mxu0
    %617 = vmatprep.mubr.f32.mxu0 0.0
    %618 = vmatmul.mubr.f32.gmra.mrb[0].mxu0 %v546
    %v619 = vpop.f32.mrb[0].mxu0
    %v620 = vadd.f32 0.0, %v619
    %v621 = vpop.f32.mrb[0].mxu0
    %622 = vdwg.mxu0
    %624 = vrot.lane.b32.xlu0 %v126, 64
    %v625 = vpop.permute.xlu0 %624
    %v628 = vsel %vm136, %v326, 0
    %v631 = vsel %vm136, %v331, 0
    %633 = vmatprep.subr.mxu0 0.0
    %634 = vmatpush1.msra.mxu0 %v625
    %635 = vmatprep.subr.mxu0 0.0
    %636 = vmatpush1.msra.mxu0 0.0
    %637 = vmatprep.subr.mxu0 0.0
    %638 = vmatpush1.msra.mxu0 0.0
    %639 = vmatprep.subr.mxu0 0.0
    %640 = vmatpush1.msra.mxu0 0.0
    %641 = vmatprep.subr.mxu0 0.0
    %642 = vmatpush1.msra.mxu0 0.0
    %643 = vmatprep.subr.mxu0 0.0
    %644 = vmatpush1.msra.mxu0 0.0
    %645 = vmatprep.subr.mxu0 0.0
    %646 = vmatpush1.msra.mxu0 0.0
    %647 = vmatprep.subr.mxu0 0.0
    %648 = vmatpush1.msra.mxu0 0.0
    %649 = vmatprep.subr.mxu0 0.0
    %650 = vmatpush1.msra.mxu0 0.0
    %651 = vmatprep.subr.mxu0 0.0
    %652 = vmatpush1.msra.mxu0 0.0
    %653 = vmatprep.subr.mxu0 0.0
    %654 = vmatpush1.msra.mxu0 0.0
    %655 = vmatprep.subr.mxu0 0.0
    %656 = vmatpush1.msra.mxu0 0.0
    %657 = vmatprep.subr.mxu0 0.0
    %658 = vmatpush1.msra.mxu0 0.0
    %659 = vmatprep.subr.mxu0 0.0
    %660 = vmatpush1.msra.mxu0 0.0
    %661 = vmatprep.subr.mxu0 0.0
    %662 = vmatpush1.msra.mxu0 0.0
    %663 = vmatprep.subr.mxu0 0.0
    %664 = vmatpush1.msra.mxu0 0.0
    %665 = vmatprep.subr.mxu0 0.0
    %666 = vmatpush1.msra.mxu0 0.0
    %667 = vmatprep.subr.mxu0 0.0
    %668 = vmatpush1.msra.mxu0 0.0
    %669 = vmatprep.subr.mxu0 0.0
    %670 = vmatpush1.msra.mxu0 0.0
    %671 = vmatprep.subr.mxu0 0.0
    %672 = vmatpush1.msra.mxu0 0.0
    %673 = vmatprep.subr.mxu0 0.0
    %674 = vmatpush1.msra.mxu0 0.0
    %675 = vmatprep.subr.mxu0 0.0
    %676 = vmatpush1.msra.mxu0 0.0
    %677 = vmatprep.subr.mxu0 0.0
    %678 = vmatpush1.msra.mxu0 0.0
    %679 = vmatprep.subr.mxu0 0.0
    %680 = vmatpush1.msra.mxu0 0.0
    %681 = vmatprep.subr.mxu0 0.0
    %682 = vmatpush1.msra.mxu0 0.0
    %683 = vmatprep.subr.mxu0 0.0
    %684 = vmatpush1.msra.mxu0 0.0
    %685 = vmatprep.subr.mxu0 0.0
    %686 = vmatpush1.msra.mxu0 0.0
    %687 = vmatprep.subr.mxu0 0.0
    %688 = vmatpush1.msra.mxu0 0.0
    %689 = vmatprep.subr.mxu0 0.0
    %690 = vmatpush1.msra.mxu0 0.0
    %691 = vmatprep.subr.mxu0 0.0
    %692 = vmatpush1.msra.mxu0 0.0
    %693 = vmatprep.subr.mxu0 0.0
    %694 = vmatpush1.msra.mxu0 0.0
    %695 = vmatprep.subr.mxu0 0.0
    %696 = vmatpush1.msra.mxu0 0.0
    %697 = vmatprep.mubr.f32.mxu0 0.0
    %698 = vmatmul.mubr.f32.gmra.mrb[0].mxu0 %v628
    %v699 = vpop.f32.mrb[0].mxu0
    %v700 = vadd.f32 %v615, %v699
    %v701 = vpop.f32.mrb[0].mxu0
    %702 = vmatprep.mubr.f32.mxu0 0.0
    %703 = vmatmul.mubr.f32.gmra.mrb[0].mxu0 %v631
    %v704 = vpop.f32.mrb[0].mxu0
    %v705 = vadd.f32 %v620, %v704
    %v706 = vpop.f32.mrb[0].mxu0
    %707 = vdwg.mxu0
    %708 = vrot.lane.b32.xlu0 %v118, 112
    %v709 = vpop.permute.xlu0 %708
    %710 = vrot.lane.b32.xlu0 %v123, 112
    %v711 = vpop.permute.xlu0 %710
    %712 = vrot.lane.b32.xlu0 %v118, 80
    %v713 = vpop.permute.xlu0 %712
    %714 = vrot.lane.b32.xlu0 %v123, 80
    %v715 = vpop.permute.xlu0 %714
    %v716 = vsel %vm136, %v709, 0
    %v718 = vsel %vm136, %v711, 0
    %v720 = vsel %vm136, %v713, 0
    %v722 = vsel %vm136, %v715, 0
    %724 = vmatprep.subr.mxu0 0.0
    %725 = vmatpush1.xpose.msra.mxu0 %v720
    %726 = vmatprep.subr.mxu0 0.0
    %727 = vmatpush1.xpose.msra.mxu0 %v722
    %728 = vmatprep.subr.mxu0 0.0
    %729 = vmatpush1.xpose.msra.mxu0 0.0
    %730 = vmatprep.subr.mxu0 0.0
    %731 = vmatpush1.xpose.msra.mxu0 0.0
    %732 = vmatprep.subr.mxu0 0.0
    %733 = vmatpush1.xpose.msra.mxu0 0.0
    %734 = vmatprep.subr.mxu0 0.0
    %735 = vmatpush1.xpose.msra.mxu0 0.0
    %736 = vmatprep.subr.mxu0 0.0
    %737 = vmatpush1.xpose.msra.mxu0 0.0
    %738 = vmatprep.subr.mxu0 0.0
    %739 = vmatpush1.xpose.msra.mxu0 0.0
    %740 = vmatprep.subr.mxu0 0.0
    %741 = vmatpush1.xpose.msra.mxu0 0.0
    %742 = vmatprep.subr.mxu0 0.0
    %743 = vmatpush1.xpose.msra.mxu0 0.0
    %744 = vmatprep.subr.mxu0 0.0
    %745 = vmatpush1.xpose.msra.mxu0 0.0
    %746 = vmatprep.subr.mxu0 0.0
    %747 = vmatpush1.xpose.msra.mxu0 0.0
    %748 = vmatprep.subr.mxu0 0.0
    %749 = vmatpush1.xpose.msra.mxu0 0.0
    %750 = vmatprep.subr.mxu0 0.0
    %751 = vmatpush1.xpose.msra.mxu0 0.0
    %752 = vmatprep.subr.mxu0 0.0
    %753 = vmatpush1.xpose.msra.mxu0 0.0
    %754 = vmatprep.subr.mxu0 0.0
    %755 = vmatpush1.xpose.msra.mxu0 0.0
    %756 = vmatprep.subr.mxu0 0.0
    %757 = vmatpush1.xpose.msra.mxu0 0.0
    %758 = vmatprep.subr.mxu0 0.0
    %759 = vmatpush1.xpose.msra.mxu0 0.0
    %760 = vmatprep.subr.mxu0 0.0
    %761 = vmatpush1.xpose.msra.mxu0 0.0
    %762 = vmatprep.subr.mxu0 0.0
    %763 = vmatpush1.xpose.msra.mxu0 0.0
    %764 = vmatprep.subr.mxu0 0.0
    %765 = vmatpush1.xpose.msra.mxu0 0.0
    %766 = vmatprep.subr.mxu0 0.0
    %767 = vmatpush1.xpose.msra.mxu0 0.0
    %768 = vmatprep.subr.mxu0 0.0
    %769 = vmatpush1.xpose.msra.mxu0 0.0
    %770 = vmatprep.subr.mxu0 0.0
    %771 = vmatpush1.xpose.msra.mxu0 0.0
    %772 = vmatprep.subr.mxu0 0.0
    %773 = vmatpush1.xpose.msra.mxu0 0.0
    %774 = vmatprep.subr.mxu0 0.0
    %775 = vmatpush1.xpose.msra.mxu0 0.0
    %776 = vmatprep.subr.mxu0 0.0
    %777 = vmatpush1.xpose.msra.mxu0 0.0
    %778 = vmatprep.subr.mxu0 0.0
    %779 = vmatpush1.xpose.msra.mxu0 0.0
    %780 = vmatprep.subr.mxu0 0.0
    %781 = vmatpush1.xpose.msra.mxu0 0.0
    %782 = vmatprep.subr.mxu0 0.0
    %783 = vmatpush1.xpose.msra.mxu0 0.0
    %784 = vmatprep.subr.mxu0 0.0
    %785 = vmatpush1.xpose.msra.mxu0 0.0
    %786 = vmatprep.subr.mxu0 0.0
    %787 = vmatpush1.xpose.msra.mxu0 0.0
    %788 = vmatprep.mubr.f32.mxu0 0.0
    %789 = vmatmul.mubr.f32.gmra.mrb[0].mxu0 %v716
    %v790 = vpop.f32.mrb[0].mxu0
    %v791 = vadd.f32 0.0, %v790
    %v792 = vpop.f32.mrb[0].mxu0
    %793 = vmatprep.mubr.f32.mxu0 0.0
    %794 = vmatmul.mubr.f32.gmra.mrb[0].mxu0 %v718
    %v795 = vpop.f32.mrb[0].mxu0
    %v796 = vadd.f32 0.0, %v795
    %v797 = vpop.f32.mrb[0].mxu0
    %798 = vdwg.mxu0
    %v799 = vmul.f32 %v791, 0.35355338
    %v800 = vmul.f32 %v796, 0.35355338
    %v801 = vadd.f32 %v799, %v31
    %v802 = vadd.f32 %v800, %v32
    %v803 = vsel %vm224, %v801, -inf
    %804 = vmax.xlane.f32.xlu0 %v803
    %v805 = vpop.xlane.xlu0 %804
    %v806 = vsel %vm224, %v802, -inf
    %807 = vmax.xlane.f32.xlu0 %v806
    %v808 = vpop.xlane.xlu0 %807
    %v809 = vsub.f32 %v801, %v805
    %v810 = vsub.f32 %v802, %v808
    %v811 = vmul.f32 %v809, 1.442695
    %v812 = vpow.pop %v811
    %v813 = vmul.f32 %v810, 1.442695
    %v814 = vpow.pop %v813
    %v815 = vsel %vm224, %v812, 0.0
    %816 = vadd.xlane.f32.xlu0 %v815
    %v817 = vpop.xlane.xlu0 %816
    %v818 = vsel %vm224, %v814, 0.0
    %819 = vadd.xlane.f32.xlu0 %v818
    %v820 = vpop.xlane.xlu0 %819
    %v821 = vrcp.pop %v817
    %v822 = vrcp.pop %v820
    %v823 = vmul.f32 %v812, %v821
    %v824 = vmul.f32 %v814, %v822
    %825 = vrot.lane.b32.xlu0 %v118, 48
    %v826 = vpop.permute.xlu0 %825
    %827 = vrot.lane.b32.xlu0 %v123, 48
    %v828 = vpop.permute.xlu0 %827
    %v832 = vsel %vm224, %v823, 0
    %v835 = vsel %vm224, %v824, 0
    %837 = vmatprep.subr.mxu0 0.0
    %838 = vmatpush1.msra.mxu0 %v826
    %839 = vmatprep.subr.mxu0 0.0
    %840 = vmatpush1.msra.mxu0 %v828
    %841 = vmatprep.subr.mxu0 0.0
    %842 = vmatpush1.msra.mxu0 0.0
    %843 = vmatprep.subr.mxu0 0.0
    %844 = vmatpush1.msra.mxu0 0.0
    %845 = vmatprep.subr.mxu0 0.0
    %846 = vmatpush1.msra.mxu0 0.0
    %847 = vmatprep.subr.mxu0 0.0
    %848 = vmatpush1.msra.mxu0 0.0
    %849 = vmatprep.subr.mxu0 0.0
    %850 = vmatpush1.msra.mxu0 0.0
    %851 = vmatprep.subr.mxu0 0.0
    %852 = vmatpush1.msra.mxu0 0.0
    %853 = vmatprep.subr.mxu0 0.0
    %854 = vmatpush1.msra.mxu0 0.0
    %855 = vmatprep.subr.mxu0 0.0
    %856 = vmatpush1.msra.mxu0 0.0
    %857 = vmatprep.subr.mxu0 0.0
    %858 = vmatpush1.msra.mxu0 0.0
    %859 = vmatprep.subr.mxu0 0.0
    %860 = vmatpush1.msra.mxu0 0.0
    %861 = vmatprep.subr.mxu0 0.0
    %862 = vmatpush1.msra.mxu0 0.0
    %863 = vmatprep.subr.mxu0 0.0
    %864 = vmatpush1.msra.mxu0 0.0
    %865 = vmatprep.subr.mxu0 0.0
    %866 = vmatpush1.msra.mxu0 0.0
    %867 = vmatprep.subr.mxu0 0.0
    %868 = vmatpush1.msra.mxu0 0.0
    %869 = vmatprep.subr.mxu0 0.0
    %870 = vmatpush1.msra.mxu0 0.0
    %871 = vmatprep.subr.mxu0 0.0
    %872 = vmatpush1.msra.mxu0 0.0
    %873 = vmatprep.subr.mxu0 0.0
    %874 = vmatpush1.msra.mxu0 0.0
    %875 = vmatprep.subr.mxu0 0.0
    %876 = vmatpush1.msra.mxu0 0.0
    %877 = vmatprep.subr.mxu0 0.0
    %878 = vmatpush1.msra.mxu0 0.0
    %879 = vmatprep.subr.mxu0 0.0
    %880 = vmatpush1.msra.mxu0 0.0
    %881 = vmatprep.subr.mxu0 0.0
    %882 = vmatpush1.msra.mxu0 0.0
    %883 = vmatprep.subr.mxu0 0.0
    %884 = vmatpush1.msra.mxu0 0.0
    %885 = vmatprep.subr.mxu0 0.0
    %886 = vmatpush1.msra.mxu0 0.0
    %887 = vmatprep.subr.mxu0 0.0
    %888 = vmatpush1.msra.mxu0 0.0
    %889 = vmatprep.subr.mxu0 0.0
    %890 = vmatpush1.msra.mxu0 0.0
    %891 = vmatprep.subr.mxu0 0.0
    %892 = vmatpush1.msra.mxu0 0.0
    %893 = vmatprep.subr.mxu0 0.0
    %894 = vmatpush1.msra.mxu0 0.0
    %895 = vmatprep.subr.mxu0 0.0
    %896 = vmatpush1.msra.mxu0 0.0
    %897 = vmatprep.subr.mxu0 0.0
    %898 = vmatpush1.msra.mxu0 0.0
    %899 = vmatprep.subr.mxu0 0.0
    %900 = vmatpush1.msra.mxu0 0.0
    %901 = vmatprep.mubr.f32.mxu0 0.0
    %902 = vmatmul.mubr.f32.gmra.mrb[0].mxu0 %v832
    %v903 = vpop.f32.mrb[0].mxu0
    %v904 = vadd.f32 0.0, %v903
    %v905 = vpop.f32.mrb[0].mxu0
    %906 = vmatprep.mubr.f32.mxu0 0.0
    %907 = vmatmul.mubr.f32.gmra.mrb[0].mxu0 %v835
    %v908 = vpop.f32.mrb[0].mxu0
    %v909 = vadd.f32 0.0, %v908
    %v910 = vpop.f32.mrb[0].mxu0
    %911 = vdwg.mxu0
    %913 = vrot.lane.b32.xlu0 %v128, 64
    %v914 = vpop.permute.xlu0 %913
    %v917 = vsel %vm136, %v904, 0
    %v920 = vsel %vm136, %v909, 0
    %922 = vmatprep.subr.mxu0 0.0
    %923 = vmatpush1.msra.mxu0 %v914
    %924 = vmatprep.subr.mxu0 0.0
    %925 = vmatpush1.msra.mxu0 0.0
    %926 = vmatprep.subr.mxu0 0.0
    %927 = vmatpush1.msra.mxu0 0.0
    %928 = vmatprep.subr.mxu0 0.0
    %929 = vmatpush1.msra.mxu0 0.0
    %930 = vmatprep.subr.mxu0 0.0
    %931 = vmatpush1.msra.mxu0 0.0
    %932 = vmatprep.subr.mxu0 0.0
    %933 = vmatpush1.msra.mxu0 0.0
    %934 = vmatprep.subr.mxu0 0.0
    %935 = vmatpush1.msra.mxu0 0.0
    %936 = vmatprep.subr.mxu0 0.0
    %937 = vmatpush1.msra.mxu0 0.0
    %938 = vmatprep.subr.mxu0 0.0
    %939 = vmatpush1.msra.mxu0 0.0
    %940 = vmatprep.subr.mxu0 0.0
    %941 = vmatpush1.msra.mxu0 0.0
    %942 = vmatprep.subr.mxu0 0.0
    %943 = vmatpush1.msra.mxu0 0.0
    %944 = vmatprep.subr.mxu0 0.0
    %945 = vmatpush1.msra.mxu0 0.0
    %946 = vmatprep.subr.mxu0 0.0
    %947 = vmatpush1.msra.mxu0 0.0
    %948 = vmatprep.subr.mxu0 0.0
    %949 = vmatpush1.msra.mxu0 0.0
    %950 = vmatprep.subr.mxu0 0.0
    %951 = vmatpush1.msra.mxu0 0.0
    %952 = vmatprep.subr.mxu0 0.0
    %953 = vmatpush1.msra.mxu0 0.0
    %954 = vmatprep.subr.mxu0 0.0
    %955 = vmatpush1.msra.mxu0 0.0
    %956 = vmatprep.subr.mxu0 0.0
    %957 = vmatpush1.msra.mxu0 0.0
    %958 = vmatprep.subr.mxu0 0.0
    %959 = vmatpush1.msra.mxu0 0.0
    %960 = vmatprep.subr.mxu0 0.0
    %961 = vmatpush1.msra.mxu0 0.0
    %962 = vmatprep.subr.mxu0 0.0
    %963 = vmatpush1.msra.mxu0 0.0
    %964 = vmatprep.subr.mxu0 0.0
    %965 = vmatpush1.msra.mxu0 0.0
    %966 = vmatprep.subr.mxu0 0.0
    %967 = vmatpush1.msra.mxu0 0.0
    %968 = vmatprep.subr.mxu0 0.0
    %969 = vmatpush1.msra.mxu0 0.0
    %970 = vmatprep.subr.mxu0 0.0
    %971 = vmatpush1.msra.mxu0 0.0
    %972 = vmatprep.subr.mxu0 0.0
    %973 = vmatpush1.msra.mxu0 0.0
    %974 = vmatprep.subr.mxu0 0.0
    %975 = vmatpush1.msra.mxu0 0.0
    %976 = vmatprep.subr.mxu0 0.0
    %977 = vmatpush1.msra.mxu0 0.0
    %978 = vmatprep.subr.mxu0 0.0
    %979 = vmatpush1.msra.mxu0 0.0
    %980 = vmatprep.subr.mxu0 0.0
    %981 = vmatpush1.msra.mxu0 0.0
    %982 = vmatprep.subr.mxu0 0.0
    %983 = vmatpush1.msra.mxu0 0.0
    %984 = vmatprep.subr.mxu0 0.0
    %985 = vmatpush1.msra.mxu0 0.0
    %986 = vmatprep.mubr.f32.mxu0 0.0
    %987 = vmatmul.mubr.f32.gmra.mrb[0].mxu0 %v917
    %v988 = vpop.f32.mrb[0].mxu0
    %v989 = vadd.f32 0.0, %v988
    %v990 = vpop.f32.mrb[0].mxu0
    %991 = vmatprep.mubr.f32.mxu0 0.0
    %992 = vmatmul.mubr.f32.gmra.mrb[0].mxu0 %v920
    %v993 = vpop.f32.mrb[0].mxu0
    %v994 = vadd.f32 0.0, %v993
    %v995 = vpop.f32.mrb[0].mxu0
    %996 = vdwg.mxu0
    %v997 = vadd.f32 %v700, %v989
    %v998 = vadd.f32 %v705, %v994
    %999 = vrot.lane.b32.xlu0 %v118, 104
    %v1000 = vpop.permute.xlu0 %999
    %1001 = vrot.lane.b32.xlu0 %v123, 104
    %v1002 = vpop.permute.xlu0 %1001
    %1003 = vrot.lane.b32.xlu0 %v118, 72
    %v1004 = vpop.permute.xlu0 %1003
    %1005 = vrot.lane.b32.xlu0 %v123, 72
    %v1006 = vpop.permute.xlu0 %1005
    %v1007 = vsel %vm136, %v1000, 0
    %v1009 = vsel %vm136, %v1002, 0
    %v1011 = vsel %vm136, %v1004, 0
    %v1013 = vsel %vm136, %v1006, 0
    %1015 = vmatprep.subr.mxu0 0.0
    %1016 = vmatpush1.xpose.msra.mxu0 %v1011
    %1017 = vmatprep.subr.mxu0 0.0
    %1018 = vmatpush1.xpose.msra.mxu0 %v1013
    %1019 = vmatprep.subr.mxu0 0.0
    %1020 = vmatpush1.xpose.msra.mxu0 0.0
    %1021 = vmatprep.subr.mxu0 0.0
    %1022 = vmatpush1.xpose.msra.mxu0 0.0
    %1023 = vmatprep.subr.mxu0 0.0
    %1024 = vmatpush1.xpose.msra.mxu0 0.0
    %1025 = vmatprep.subr.mxu0 0.0
    %1026 = vmatpush1.xpose.msra.mxu0 0.0
    %1027 = vmatprep.subr.mxu0 0.0
    %1028 = vmatpush1.xpose.msra.mxu0 0.0
    %1029 = vmatprep.subr.mxu0 0.0
    %1030 = vmatpush1.xpose.msra.mxu0 0.0
    %1031 = vmatprep.subr.mxu0 0.0
    %1032 = vmatpush1.xpose.msra.mxu0 0.0
    %1033 = vmatprep.subr.mxu0 0.0
    %1034 = vmatpush1.xpose.msra.mxu0 0.0
    %1035 = vmatprep.subr.mxu0 0.0
    %1036 = vmatpush1.xpose.msra.mxu0 0.0
    %1037 = vmatprep.subr.mxu0 0.0
    %1038 = vmatpush1.xpose.msra.mxu0 0.0
    %1039 = vmatprep.subr.mxu0 0.0
    %1040 = vmatpush1.xpose.msra.mxu0 0.0
    %1041 = vmatprep.subr.mxu0 0.0
    %1042 = vmatpush1.xpose.msra.mxu0 0.0
    %1043 = vmatprep.subr.mxu0 0.0
    %1044 = vmatpush1.xpose.msra.mxu0 0.0
    %1045 = vmatprep.subr.mxu0 0.0
    %1046 = vmatpush1.xpose.msra.mxu0 0.0
    %1047 = vmatprep.subr.mxu0 0.0
    %1048 = vmatpush1.xpose.msra.mxu0 0.0
    %1049 = vmatprep.subr.mxu0 0.0
    %1050 = vmatpush1.xpose.msra.mxu0 0.0
    %1051 = vmatprep.subr.mxu0 0.0
    %1052 = vmatpush1.xpose.msra.mxu0 0.0
    %1053 = vmatprep.subr.mxu0 0.0
    %1054 = vmatpush1.xpose.msra.mxu0 0.0
    %1055 = vmatprep.subr.mxu0 0.0
    %1056 = vmatpush1.xpose.msra.mxu0 0.0
    %1057 = vmatprep.subr.mxu0 0.0
    %1058 = vmatpush1.xpose.msra.mxu0 0.0
    %1059 = vmatprep.subr.mxu0 0.0
    %1060 = vmatpush1.xpose.msra.mxu0 0.0
    %1061 = vmatprep.subr.mxu0 0.0
    %1062 = vmatpush1.xpose.msra.mxu0 0.0
    %1063 = vmatprep.subr.mxu0 0.0
    %1064 = vmatpush1.xpose.msra.mxu0 0.0
    %1065 = vmatprep.subr.mxu0 0.0
    %1066 = vmatpush1.xpose.msra.mxu0 0.0
    %1067 = vmatprep.subr.mxu0 0.0
    %1068 = vmatpush1.xpose.msra.mxu0 0.0
    %1069 = vmatprep.subr.mxu0 0.0
    %1070 = vmatpush1.xpose.msra.mxu0 0.0
    %1071 = vmatprep.subr.mxu0 0.0
    %1072 = vmatpush1.xpose.msra.mxu0 0.0
    %1073 = vmatprep.subr.mxu0 0.0
    %1074 = vmatpush1.xpose.msra.mxu0 0.0
    %1075 = vmatprep.subr.mxu0 0.0
    %1076 = vmatpush1.xpose.msra.mxu0 0.0
    %1077 = vmatprep.subr.mxu0 0.0
    %1078 = vmatpush1.xpose.msra.mxu0 0.0
    %1079 = vmatprep.mubr.f32.mxu0 0.0
    %1080 = vmatmul.mubr.f32.gmra.mrb[0].mxu0 %v1007
    %v1081 = vpop.f32.mrb[0].mxu0
    %v1082 = vadd.f32 0.0, %v1081
    %v1083 = vpop.f32.mrb[0].mxu0
    %1084 = vmatprep.mubr.f32.mxu0 0.0
    %1085 = vmatmul.mubr.f32.gmra.mrb[0].mxu0 %v1009
    %v1086 = vpop.f32.mrb[0].mxu0
    %v1087 = vadd.f32 0.0, %v1086
    %v1088 = vpop.f32.mrb[0].mxu0
    %1089 = vdwg.mxu0
    %v1090 = vmul.f32 %v1082, 0.35355338
    %v1091 = vmul.f32 %v1087, 0.35355338
    %v1092 = vadd.f32 %v1090, %v31
    %v1093 = vadd.f32 %v1091, %v32
    %v1094 = vsel %vm224, %v1092, -inf
    %1095 = vmax.xlane.f32.xlu0 %v1094
    %v1096 = vpop.xlane.xlu0 %1095
    %v1097 = vsel %vm224, %v1093, -inf
    %1098 = vmax.xlane.f32.xlu0 %v1097
    %v1099 = vpop.xlane.xlu0 %1098
    %v1100 = vsub.f32 %v1092, %v1096
    %v1101 = vsub.f32 %v1093, %v1099
    %v1102 = vmul.f32 %v1100, 1.442695
    %v1103 = vpow.pop %v1102
    %v1104 = vmul.f32 %v1101, 1.442695
    %v1105 = vpow.pop %v1104
    %v1106 = vsel %vm224, %v1103, 0.0
    %1107 = vadd.xlane.f32.xlu0 %v1106
    %v1108 = vpop.xlane.xlu0 %1107
    %v1109 = vsel %vm224, %v1105, 0.0
    %1110 = vadd.xlane.f32.xlu0 %v1109
    %v1111 = vpop.xlane.xlu0 %1110
    %v1112 = vrcp.pop %v1108
    %v1113 = vrcp.pop %v1111
    %v1114 = vmul.f32 %v1103, %v1112
    %v1115 = vmul.f32 %v1105, %v1113
    %1116 = vrot.lane.b32.xlu0 %v118, 40
    %v1117 = vpop.permute.xlu0 %1116
    %1118 = vrot.lane.b32.xlu0 %v123, 40
    %v1119 = vpop.permute.xlu0 %1118
    %v1123 = vsel %vm224, %v1114, 0
    %v1126 = vsel %vm224, %v1115, 0
    %1128 = vmatprep.subr.mxu0 0.0
    %1129 = vmatpush1.msra.mxu0 %v1117
    %1130 = vmatprep.subr.mxu0 0.0
    %1131 = vmatpush1.msra.mxu0 %v1119
    %1132 = vmatprep.subr.mxu0 0.0
    %1133 = vmatpush1.msra.mxu0 0.0
    %1134 = vmatprep.subr.mxu0 0.0
    %1135 = vmatpush1.msra.mxu0 0.0
    %1136 = vmatprep.subr.mxu0 0.0
    %1137 = vmatpush1.msra.mxu0 0.0
    %1138 = vmatprep.subr.mxu0 0.0
    %1139 = vmatpush1.msra.mxu0 0.0
    %1140 = vmatprep.subr.mxu0 0.0
    %1141 = vmatpush1.msra.mxu0 0.0
    %1142 = vmatprep.subr.mxu0 0.0
    %1143 = vmatpush1.msra.mxu0 0.0
    %1144 = vmatprep.subr.mxu0 0.0
    %1145 = vmatpush1.msra.mxu0 0.0
    %1146 = vmatprep.subr.mxu0 0.0
    %1147 = vmatpush1.msra.mxu0 0.0
    %1148 = vmatprep.subr.mxu0 0.0
    %1149 = vmatpush1.msra.mxu0 0.0
    %1150 = vmatprep.subr.mxu0 0.0
    %1151 = vmatpush1.msra.mxu0 0.0
    %1152 = vmatprep.subr.mxu0 0.0
    %1153 = vmatpush1.msra.mxu0 0.0
    %1154 = vmatprep.subr.mxu0 0.0
    %1155 = vmatpush1.msra.mxu0 0.0
    %1156 = vmatprep.subr.mxu0 0.0
    %1157 = vmatpush1.msra.mxu0 0.0
    %1158 = vmatprep.subr.mxu0 0.0
    %1159 = vmatpush1.msra.mxu0 0.0
    %1160 = vmatprep.subr.mxu0 0.0
    %1161 = vmatpush1.msra.mxu0 0.0
    %1162 = vmatprep.subr.mxu0 0.0
    %1163 = vmatpush1.msra.mxu0 0.0
    %1164 = vmatprep.subr.mxu0 0.0
    %1165 = vmatpush1.msra.mxu0 0.0
    %1166 = vmatprep.subr.mxu0 0.0
    %1167 = vmatpush1.msra.mxu0 0.0
    %1168 = vmatprep.subr.mxu0 0.0
    %1169 = vmatpush1.msra.mxu0 0.0
    %1170 = vmatprep.subr.mxu0 0.0
    %1171 = vmatpush1.msra.mxu0 0.0
    %1172 = vmatprep.subr.mxu0 0.0
    %1173 = vmatpush1.msra.mxu0 0.0
    %1174 = vmatprep.subr.mxu0 0.0
    %1175 = vmatpush1.msra.mxu0 0.0
    %1176 = vmatprep.subr.mxu0 0.0
    %1177 = vmatpush1.msra.mxu0 0.0
    %1178 = vmatprep.subr.mxu0 0.0
    %1179 = vmatpush1.msra.mxu0 0.0
    %1180 = vmatprep.subr.mxu0 0.0
    %1181 = vmatpush1.msra.mxu0 0.0
    %1182 = vmatprep.subr.mxu0 0.0
    %1183 = vmatpush1.msra.mxu0 0.0
    %1184 = vmatprep.subr.mxu0 0.0
    %1185 = vmatpush1.msra.mxu0 0.0
    %1186 = vmatprep.subr.mxu0 0.0
    %1187 = vmatpush1.msra.mxu0 0.0
    %1188 = vmatprep.subr.mxu0 0.0
    %1189 = vmatpush1.msra.mxu0 0.0
    %1190 = vmatprep.subr.mxu0 0.0
    %1191 = vmatpush1.msra.mxu0 0.0
    %1192 = vmatprep.mubr.f32.mxu0 0.0
    %1193 = vmatmul.mubr.f32.gmra.mrb[0].mxu0 %v1123
    %v1194 = vpop.f32.mrb[0].mxu0
    %v1195 = vadd.f32 0.0, %v1194
    %v1196 = vpop.f32.mrb[0].mxu0
    %1197 = vmatprep.mubr.f32.mxu0 0.0
    %1198 = vmatmul.mubr.f32.gmra.mrb[0].mxu0 %v1126
    %v1199 = vpop.f32.mrb[0].mxu0
    %v1200 = vadd.f32 0.0, %v1199
    %v1201 = vpop.f32.mrb[0].mxu0
    %1202 = vdwg.mxu0
    %1204 = vrot.lane.b32.xlu0 %v129, 64
    %v1205 = vpop.permute.xlu0 %1204
    %v1208 = vsel %vm136, %v1195, 0
    %v1211 = vsel %vm136, %v1200, 0
    %1213 = vmatprep.subr.mxu0 0.0
    %1214 = vmatpush1.msra.mxu0 %v1205
    %1215 = vmatprep.subr.mxu0 0.0
    %1216 = vmatpush1.msra.mxu0 0.0
    %1217 = vmatprep.subr.mxu0 0.0
    %1218 = vmatpush1.msra.mxu0 0.0
    %1219 = vmatprep.subr.mxu0 0.0
    %1220 = vmatpush1.msra.mxu0 0.0
    %1221 = vmatprep.subr.mxu0 0.0
    %1222 = vmatpush1.msra.mxu0 0.0
    %1223 = vmatprep.subr.mxu0 0.0
    %1224 = vmatpush1.msra.mxu0 0.0
    %1225 = vmatprep.subr.mxu0 0.0
    %1226 = vmatpush1.msra.mxu0 0.0
    %1227 = vmatprep.subr.mxu0 0.0
    %1228 = vmatpush1.msra.mxu0 0.0
    %1229 = vmatprep.subr.mxu0 0.0
    %1230 = vmatpush1.msra.mxu0 0.0
    %1231 = vmatprep.subr.mxu0 0.0
    %1232 = vmatpush1.msra.mxu0 0.0
    %1233 = vmatprep.subr.mxu0 0.0
    %1234 = vmatpush1.msra.mxu0 0.0
    %1235 = vmatprep.subr.mxu0 0.0
    %1236 = vmatpush1.msra.mxu0 0.0
    %1237 = vmatprep.subr.mxu0 0.0
    %1238 = vmatpush1.msra.mxu0 0.0
    %1239 = vmatprep.subr.mxu0 0.0
    %1240 = vmatpush1.msra.mxu0 0.0
    %1241 = vmatprep.subr.mxu0 0.0
    %1242 = vmatpush1.msra.mxu0 0.0
    %1243 = vmatprep.subr.mxu0 0.0
    %1244 = vmatpush1.msra.mxu0 0.0
    %1245 = vmatprep.subr.mxu0 0.0
    %1246 = vmatpush1.msra.mxu0 0.0
    %1247 = vmatprep.subr.mxu0 0.0
    %1248 = vmatpush1.msra.mxu0 0.0
    %1249 = vmatprep.subr.mxu0 0.0
    %1250 = vmatpush1.msra.mxu0 0.0
    %1251 = vmatprep.subr.mxu0 0.0
    %1252 = vmatpush1.msra.mxu0 0.0
    %1253 = vmatprep.subr.mxu0 0.0
    %1254 = vmatpush1.msra.mxu0 0.0
    %1255 = vmatprep.subr.mxu0 0.0
    %1256 = vmatpush1.msra.mxu0 0.0
    %1257 = vmatprep.subr.mxu0 0.0
    %1258 = vmatpush1.msra.mxu0 0.0
    %1259 = vmatprep.subr.mxu0 0.0
    %1260 = vmatpush1.msra.mxu0 0.0
    %1261 = vmatprep.subr.mxu0 0.0
    %1262 = vmatpush1.msra.mxu0 0.0
    %1263 = vmatprep.subr.mxu0 0.0
    %1264 = vmatpush1.msra.mxu0 0.0
    %1265 = vmatprep.subr.mxu0 0.0
    %1266 = vmatpush1.msra.mxu0 0.0
    %1267 = vmatprep.subr.mxu0 0.0
    %1268 = vmatpush1.msra.mxu0 0.0
    %1269 = vmatprep.subr.mxu0 0.0
    %1270 = vmatpush1.msra.mxu0 0.0
    %1271 = vmatprep.subr.mxu0 0.0
    %1272 = vmatpush1.msra.mxu0 0.0
    %1273 = vmatprep.subr.mxu0 0.0
    %1274 = vmatpush1.msra.mxu0 0.0
    %1275 = vmatprep.subr.mxu0 0.0
    %1276 = vmatpush1.msra.mxu0 0.0
    %1277 = vmatprep.mubr.f32.mxu0 0.0
    %1278 = vmatmul.mubr.f32.gmra.mrb[0].mxu0 %v1208
    %v1279 = vpop.f32.mrb[0].mxu0
    %v1280 = vadd.f32 0.0, %v1279
    %v1281 = vpop.f32.mrb[0].mxu0
    %1282 = vmatprep.mubr.f32.mxu0 0.0
    %1283 = vmatmul.mubr.f32.gmra.mrb[0].mxu0 %v1211
    %v1284 = vpop.f32.mrb[0].mxu0
    %v1285 = vadd.f32 0.0, %v1284
    %v1286 = vpop.f32.mrb[0].mxu0
    %1287 = vdwg.mxu0
    %v1288 = vadd.f32 %v997, %v1280
    %v1289 = vadd.f32 %v998, %v1285
    %v1290 = vld [vmem:[%s6 + $0x3] sm:$0x1]
    %v1291 = vlaneseq
    %v1292 = vshrl.u32 %v1291, 7
    %v1293 = vsub.s32 0, %v1292
    %v1294 = vrot.slane %v1290, %v1293
    %v1295 = vadd.f32 %v1288, %v1294
    %v1296 = vadd.f32 %v1289, %v1294
    %v1297 = vadd.f32 %v1295, %v27
    %v1298 = vadd.f32 %v1296, %v28
    %v1299 = vld [vmem:[%s6 + $0x7] sm:$0x1]
    %v1300 = vld [vmem:[%s6 + $0x8] sm:$0x1]
    %v1301 = vsel %vm44, %v1297, 0.0
    %1302 = vadd.xlane.f32.xlu0 %v1301
    %v1303 = vpop.xlane.xlu0 %1302
    %v1304 = vsel %vm44, %v1298, 0.0
    %1305 = vadd.xlane.f32.xlu0 %v1304
    %v1306 = vpop.xlane.xlu0 %1305
    %v1307 = vrcp.pop 32.0
    %v1308 = vmul.f32 %v1303, %v1307
    %v1309 = vmul.f32 %v1306, %v1307
    %v1310 = vsub.f32 %v1297, %v1308
    %v1311 = vsub.f32 %v1298, %v1309
    %v1312 = vmul.f32 %v1310, %v1310
    %v1313 = vmul.f32 %v1311, %v1311
    %v1314 = vsel %vm44, %v1312, 0.0
    %1315 = vadd.xlane.f32.xlu0 %v1314
    %v1316 = vpop.xlane.xlu0 %1315
    %v1317 = vsel %vm44, %v1313, 0.0
    %1318 = vadd.xlane.f32.xlu0 %v1317
    %v1319 = vpop.xlane.xlu0 %1318
    %v1320 = vmul.f32 %v1316, %v1307
    %v1321 = vmul.f32 %v1319, %v1307
    %v1322 = vadd.f32 %v1320, 1e-05
    %v1323 = vadd.f32 %v1321, 1e-05
    %v1324 = vrsqrt.pop %v1322
    %v1325 = vrsqrt.pop %v1323
    %v1326 = vmul.f32 %v1310, %v1324
    %v1327 = vmul.f32 %v1311, %v1325
    %v1328 = vlaneseq
    %v1329 = vshrl.u32 %v1328, 7
    %v1330 = vsub.s32 0, %v1329
    %v1331 = vrot.slane %v1299, %v1330
    %v1332 = vmul.f32 %v1326, %v1331
    %v1333 = vmul.f32 %v1327, %v1331
    %v1334 = vlaneseq
    %v1335 = vshrl.u32 %v1334, 7
    %v1336 = vsub.s32 0, %v1335
    %v1337 = vrot.slane %v1300, %v1336
    %v1338 = vadd.f32 %v1332, %v1337
    %v1339 = vadd.f32 %v1333, %v1337
    %v1340 = vld [vmem:[%s6 + $0x2] sm:$0x1]
    %v1341 = vlaneseq
    %v1342 = vshrl.u32 %v1341, 7
    %v1343 = vsub.s32 0, %v1342
    %v1344 = vrot.slane %v1340, %v1343
    %v1346 = vsel %vm44, %v29, 0
    %v1349 = vsel %vm44, %v30, 0
    %1351 = vmatprep.subr.mxu0 0.0
    %1352 = vmatpush1.msra.mxu0 %v126
    %1353 = vmatprep.subr.mxu0 0.0
    %1354 = vmatpush1.msra.mxu0 %v127
    %1355 = vmatprep.subr.mxu0 0.0
    %1356 = vmatpush1.msra.mxu0 %v128
    %1357 = vmatprep.subr.mxu0 0.0
    %1358 = vmatpush1.msra.mxu0 %v129
    %1359 = vmatprep.subr.mxu0 0.0
    %1360 = vmatpush1.msra.mxu0 0.0
    %1361 = vmatprep.subr.mxu0 0.0
    %1362 = vmatpush1.msra.mxu0 0.0
    %1363 = vmatprep.subr.mxu0 0.0
    %1364 = vmatpush1.msra.mxu0 0.0
    %1365 = vmatprep.subr.mxu0 0.0
    %1366 = vmatpush1.msra.mxu0 0.0
    %1367 = vmatprep.subr.mxu0 0.0
    %1368 = vmatpush1.msra.mxu0 0.0
    %1369 = vmatprep.subr.mxu0 0.0
    %1370 = vmatpush1.msra.mxu0 0.0
    %1371 = vmatprep.subr.mxu0 0.0
    %1372 = vmatpush1.msra.mxu0 0.0
    %1373 = vmatprep.subr.mxu0 0.0
    %1374 = vmatpush1.msra.mxu0 0.0
    %1375 = vmatprep.subr.mxu0 0.0
    %1376 = vmatpush1.msra.mxu0 0.0
    %1377 = vmatprep.subr.mxu0 0.0
    %1378 = vmatpush1.msra.mxu0 0.0
    %1379 = vmatprep.subr.mxu0 0.0
    %1380 = vmatpush1.msra.mxu0 0.0
    %1381 = vmatprep.subr.mxu0 0.0
    %1382 = vmatpush1.msra.mxu0 0.0
    %1383 = vmatprep.subr.mxu0 0.0
    %1384 = vmatpush1.msra.mxu0 0.0
    %1385 = vmatprep.subr.mxu0 0.0
    %1386 = vmatpush1.msra.mxu0 0.0
    %1387 = vmatprep.subr.mxu0 0.0
    %1388 = vmatpush1.msra.mxu0 0.0
    %1389 = vmatprep.subr.mxu0 0.0
    %1390 = vmatpush1.msra.mxu0 0.0
    %1391 = vmatprep.subr.mxu0 0.0
    %1392 = vmatpush1.msra.mxu0 0.0
    %1393 = vmatprep.subr.mxu0 0.0
    %1394 = vmatpush1.msra.mxu0 0.0
    %1395 = vmatprep.subr.mxu0 0.0
    %1396 = vmatpush1.msra.mxu0 0.0
    %1397 = vmatprep.subr.mxu0 0.0
    %1398 = vmatpush1.msra.mxu0 0.0
    %1399 = vmatprep.subr.mxu0 0.0
    %1400 = vmatpush1.msra.mxu0 0.0
    %1401 = vmatprep.subr.mxu0 0.0
    %1402 = vmatpush1.msra.mxu0 0.0
    %1403 = vmatprep.subr.mxu0 0.0
    %1404 = vmatpush1.msra.mxu0 0.0
    %1405 = vmatprep.subr.mxu0 0.0
    %1406 = vmatpush1.msra.mxu0 0.0
    %1407 = vmatprep.subr.mxu0 0.0
    %1408 = vmatpush1.msra.mxu0 0.0
    %1409 = vmatprep.subr.mxu0 0.0
    %1410 = vmatpush1.msra.mxu0 0.0
    %1411 = vmatprep.subr.mxu0 0.0
    %1412 = vmatpush1.msra.mxu0 0.0
    %1413 = vmatprep.subr.mxu0 0.0
    %1414 = vmatpush1.msra.mxu0 0.0
    %1415 = vmatprep.mubr.f32.mxu0 0.0
    %1416 = vmatmul.mubr.f32.gmra.mrb[0].mxu0 %v1346
    %v1417 = vpop.f32.mrb[0].mxu0
    %v1418 = vadd.f32 %v1344, %v1417
    %v1419 = vpop.f32.mrb[0].mxu0
    %1420 = vmatprep.mubr.f32.mxu0 0.0
    %1421 = vmatmul.mubr.f32.gmra.mrb[0].mxu0 %v1349
    %v1422 = vpop.f32.mrb[0].mxu0
    %v1423 = vadd.f32 %v1344, %v1422
    %v1424 = vpop.f32.mrb[0].mxu0
    %1425 = vdwg.mxu0
    %v1426 = vld [vmem:[%s6 + $0x1] sm:$0x1]
    %v1427 = vlaneseq
    %v1428 = vshrl.u32 %v1427, 7
    %v1429 = vsub.s32 0, %v1428
    %v1430 = vrot.slane %v1426, %v1429
    %1435 = vrot.lane.b32.xlu0 %v35, 32
    %v1436 = vpop.permute.xlu0 %1435
    %1437 = vrot.lane.b32.xlu0 %v36, 32
    %v1438 = vpop.permute.xlu0 %1437
    %1439 = vrot.lane.b32.xlu0 %v37, 32
    %v1440 = vpop.permute.xlu0 %1439
    %1441 = vrot.lane.b32.xlu0 %v38, 32
    %v1442 = vpop.permute.xlu0 %1441
    %v1448 = vsel %vm44, %v1338, 0
    %v1451 = vsel %vm44, %v1339, 0
    %1453 = vmatprep.subr.mxu0 0.0
    %1454 = vmatpush1.msra.mxu0 %v1436
    %1455 = vmatprep.subr.mxu0 0.0
    %1456 = vmatpush1.msra.mxu0 %v1438
    %1457 = vmatprep.subr.mxu0 0.0
    %1458 = vmatpush1.msra.mxu0 %v1440
    %1459 = vmatprep.subr.mxu0 0.0
    %1460 = vmatpush1.msra.mxu0 %v1442
    %1461 = vmatprep.subr.mxu0 0.0
    %1462 = vmatpush1.msra.mxu0 0.0
    %1463 = vmatprep.subr.mxu0 0.0
    %1464 = vmatpush1.msra.mxu0 0.0
    %1465 = vmatprep.subr.mxu0 0.0
    %1466 = vmatpush1.msra.mxu0 0.0
    %1467 = vmatprep.subr.mxu0 0.0
    %1468 = vmatpush1.msra.mxu0 0.0
    %1469 = vmatprep.subr.mxu0 0.0
    %1470 = vmatpush1.msra.mxu0 0.0
    %1471 = vmatprep.subr.mxu0 0.0
    %1472 = vmatpush1.msra.mxu0 0.0
    %1473 = vmatprep.subr.mxu0 0.0
    %1474 = vmatpush1.msra.mxu0 0.0
    %1475 = vmatprep.subr.mxu0 0.0
    %1476 = vmatpush1.msra.mxu0 0.0
    %1477 = vmatprep.subr.mxu0 0.0
    %1478 = vmatpush1.msra.mxu0 0.0
    %1479 = vmatprep.subr.mxu0 0.0
    %1480 = vmatpush1.msra.mxu0 0.0
    %1481 = vmatprep.subr.mxu0 0.0
    %1482 = vmatpush1.msra.mxu0 0.0
    %1483 = vmatprep.subr.mxu0 0.0
    %1484 = vmatpush1.msra.mxu0 0.0
    %1485 = vmatprep.subr.mxu0 0.0
    %1486 = vmatpush1.msra.mxu0 0.0
    %1487 = vmatprep.subr.mxu0 0.0
    %1488 = vmatpush1.msra.mxu0 0.0
    %1489 = vmatprep.subr.mxu0 0.0
    %1490 = vmatpush1.msra.mxu0 0.0
    %1491 = vmatprep.subr.mxu0 0.0
    %1492 = vmatpush1.msra.mxu0 0.0
    %1493 = vmatprep.subr.mxu0 0.0
    %1494 = vmatpush1.msra.mxu0 0.0
    %1495 = vmatprep.subr.mxu0 0.0
    %1496 = vmatpush1.msra.mxu0 0.0
    %1497 = vmatprep.subr.mxu0 0.0
    %1498 = vmatpush1.msra.mxu0 0.0
    %1499 = vmatprep.subr.mxu0 0.0
    %1500 = vmatpush1.msra.mxu0 0.0
    %1501 = vmatprep.subr.mxu0 0.0
    %1502 = vmatpush1.msra.mxu0 0.0
    %1503 = vmatprep.subr.mxu0 0.0
    %1504 = vmatpush1.msra.mxu0 0.0
    %1505 = vmatprep.subr.mxu0 0.0
    %1506 = vmatpush1.msra.mxu0 0.0
    %1507 = vmatprep.subr.mxu0 0.0
    %1508 = vmatpush1.msra.mxu0 0.0
    %1509 = vmatprep.subr.mxu0 0.0
    %1510 = vmatpush1.msra.mxu0 0.0
    %1511 = vmatprep.subr.mxu0 0.0
    %1512 = vmatpush1.msra.mxu0 0.0
    %1513 = vmatprep.subr.mxu0 0.0
    %1514 = vmatpush1.msra.mxu0 0.0
    %1515 = vmatprep.subr.mxu0 0.0
    %1516 = vmatpush1.msra.mxu0 0.0
    %1517 = vmatprep.mubr.f32.mxu0 0.0
    %1518 = vmatmul.mubr.f32.gmra.mrb[0].mxu0 %v1448
    %v1519 = vpop.f32.mrb[0].mxu0
    %v1520 = vadd.f32 %v1430, %v1519
    %v1521 = vpop.f32.mrb[0].mxu0
    %1522 = vmatprep.mubr.f32.mxu0 0.0
    %1523 = vmatmul.mubr.f32.gmra.mrb[0].mxu0 %v1451
    %v1524 = vpop.f32.mrb[0].mxu0
    %v1525 = vadd.f32 %v1430, %v1524
    %v1526 = vpop.f32.mrb[0].mxu0
    %1527 = vdwg.mxu0
    %v1529 = vsel %vm136, %v1520, 0
    %v1532 = vsel %vm136, %v1525, 0
    %v1535 = vsel %vm136, %v1418, 0
    %v1538 = vsel %vm136, %v1423, 0
    %1540 = vmatprep.subr.mxu0 0.0
    %1541 = vmatpush1.xpose.msra.mxu0 %v1535
    %1542 = vmatprep.subr.mxu0 0.0
    %1543 = vmatpush1.xpose.msra.mxu0 %v1538
    %1544 = vmatprep.subr.mxu0 0.0
    %1545 = vmatpush1.xpose.msra.mxu0 0.0
    %1546 = vmatprep.subr.mxu0 0.0
    %1547 = vmatpush1.xpose.msra.mxu0 0.0
    %1548 = vmatprep.subr.mxu0 0.0
    %1549 = vmatpush1.xpose.msra.mxu0 0.0
    %1550 = vmatprep.subr.mxu0 0.0
    %1551 = vmatpush1.xpose.msra.mxu0 0.0
    %1552 = vmatprep.subr.mxu0 0.0
    %1553 = vmatpush1.xpose.msra.mxu0 0.0
    %1554 = vmatprep.subr.mxu0 0.0
    %1555 = vmatpush1.xpose.msra.mxu0 0.0
    %1556 = vmatprep.subr.mxu0 0.0
    %1557 = vmatpush1.xpose.msra.mxu0 0.0
    %1558 = vmatprep.subr.mxu0 0.0
    %1559 = vmatpush1.xpose.msra.mxu0 0.0
    %1560 = vmatprep.subr.mxu0 0.0
    %1561 = vmatpush1.xpose.msra.mxu0 0.0
    %1562 = vmatprep.subr.mxu0 0.0
    %1563 = vmatpush1.xpose.msra.mxu0 0.0
    %1564 = vmatprep.subr.mxu0 0.0
    %1565 = vmatpush1.xpose.msra.mxu0 0.0
    %1566 = vmatprep.subr.mxu0 0.0
    %1567 = vmatpush1.xpose.msra.mxu0 0.0
    %1568 = vmatprep.subr.mxu0 0.0
    %1569 = vmatpush1.xpose.msra.mxu0 0.0
    %1570 = vmatprep.subr.mxu0 0.0
    %1571 = vmatpush1.xpose.msra.mxu0 0.0
    %1572 = vmatprep.subr.mxu0 0.0
    %1573 = vmatpush1.xpose.msra.mxu0 0.0
    %1574 = vmatprep.subr.mxu0 0.0
    %1575 = vmatpush1.xpose.msra.mxu0 0.0
    %1576 = vmatprep.subr.mxu0 0.0
    %1577 = vmatpush1.xpose.msra.mxu0 0.0
    %1578 = vmatprep.subr.mxu0 0.0
    %1579 = vmatpush1.xpose.msra.mxu0 0.0
    %1580 = vmatprep.subr.mxu0 0.0
    %1581 = vmatpush1.xpose.msra.mxu0 0.0
    %1582 = vmatprep.subr.mxu0 0.0
    %1583 = vmatpush1.xpose.msra.mxu0 0.0
    %1584 = vmatprep.subr.mxu0 0.0
    %1585 = vmatpush1.xpose.msra.mxu0 0.0
    %1586 = vmatprep.subr.mxu0 0.0
    %1587 = vmatpush1.xpose.msra.mxu0 0.0
    %1588 = vmatprep.subr.mxu0 0.0
    %1589 = vmatpush1.xpose.msra.mxu0 0.0
    %1590 = vmatprep.subr.mxu0 0.0
    %1591 = vmatpush1.xpose.msra.mxu0 0.0
    %1592 = vmatprep.subr.mxu0 0.0
    %1593 = vmatpush1.xpose.msra.mxu0 0.0
    %1594 = vmatprep.subr.mxu0 0.0
    %1595 = vmatpush1.xpose.msra.mxu0 0.0
    %1596 = vmatprep.subr.mxu0 0.0
    %1597 = vmatpush1.xpose.msra.mxu0 0.0
    %1598 = vmatprep.subr.mxu0 0.0
    %1599 = vmatpush1.xpose.msra.mxu0 0.0
    %1600 = vmatprep.subr.mxu0 0.0
    %1601 = vmatpush1.xpose.msra.mxu0 0.0
    %1602 = vmatprep.subr.mxu0 0.0
    %1603 = vmatpush1.xpose.msra.mxu0 0.0
    %1604 = vmatprep.mubr.f32.mxu0 0.0
    %1605 = vmatmul.mubr.f32.gmra.mrb[0].mxu0 %v1529
    %v1606 = vpop.f32.mrb[0].mxu0
    %v1607 = vadd.f32 0.0, %v1606
    %v1608 = vpop.f32.mrb[0].mxu0
    %1609 = vmatprep.mubr.f32.mxu0 0.0
    %1610 = vmatmul.mubr.f32.gmra.mrb[0].mxu0 %v1532
    %v1611 = vpop.f32.mrb[0].mxu0
    %v1612 = vadd.f32 0.0, %v1611
    %v1613 = vpop.f32.mrb[0].mxu0
    %1614 = vdwg.mxu0
    %v1615 = vmul.f32 %v1607, 0.35355338
    %v1616 = vmul.f32 %v1612, 0.35355338
    %v1617 = vadd.f32 %v1615, %v33
    %v1618 = vadd.f32 %v1616, %v34
    %v1619 = vsel %vm224, %v1617, -inf
    %1620 = vmax.xlane.f32.xlu0 %v1619
    %v1621 = vpop.xlane.xlu0 %1620
    %v1622 = vsel %vm224, %v1618, -inf
    %1623 = vmax.xlane.f32.xlu0 %v1622
    %v1624 = vpop.xlane.xlu0 %1623
    %v1625 = vsub.f32 %v1617, %v1621
    %v1626 = vsub.f32 %v1618, %v1624
    %v1627 = vmul.f32 %v1625, 1.442695
    %v1628 = vpow.pop %v1627
    %v1629 = vmul.f32 %v1626, 1.442695
    %v1630 = vpow.pop %v1629
    %v1631 = vsel %vm224, %v1628, 0.0
    %1632 = vadd.xlane.f32.xlu0 %v1631
    %v1633 = vpop.xlane.xlu0 %1632
    %v1634 = vsel %vm224, %v1630, 0.0
    %1635 = vadd.xlane.f32.xlu0 %v1634
    %v1636 = vpop.xlane.xlu0 %1635
    %v1637 = vrcp.pop %v1633
    %v1638 = vrcp.pop %v1636
    %v1639 = vmul.f32 %v1628, %v1637
    %v1640 = vmul.f32 %v1630, %v1638
    %1641 = vrot.lane.b32.xlu0 %v1418, 96
    %v1642 = vpop.permute.xlu0 %1641
    %1643 = vrot.lane.b32.xlu0 %v1423, 96
    %v1644 = vpop.permute.xlu0 %1643
    %v1648 = vsel %vm224, %v1639, 0
    %v1651 = vsel %vm224, %v1640, 0
    %1653 = vmatprep.subr.mxu0 0.0
    %1654 = vmatpush1.msra.mxu0 %v1642
    %1655 = vmatprep.subr.mxu0 0.0
    %1656 = vmatpush1.msra.mxu0 %v1644
    %1657 = vmatprep.subr.mxu0 0.0
    %1658 = vmatpush1.msra.mxu0 0.0
    %1659 = vmatprep.subr.mxu0 0.0
    %1660 = vmatpush1.msra.mxu0 0.0
    %1661 = vmatprep.subr.mxu0 0.0
    %1662 = vmatpush1.msra.mxu0 0.0
    %1663 = vmatprep.subr.mxu0 0.0
    %1664 = vmatpush1.msra.mxu0 0.0
    %1665 = vmatprep.subr.mxu0 0.0
    %1666 = vmatpush1.msra.mxu0 0.0
    %1667 = vmatprep.subr.mxu0 0.0
    %1668 = vmatpush1.msra.mxu0 0.0
    %1669 = vmatprep.subr.mxu0 0.0
    %1670 = vmatpush1.msra.mxu0 0.0
    %1671 = vmatprep.subr.mxu0 0.0
    %1672 = vmatpush1.msra.mxu0 0.0
    %1673 = vmatprep.subr.mxu0 0.0
    %1674 = vmatpush1.msra.mxu0 0.0
    %1675 = vmatprep.subr.mxu0 0.0
    %1676 = vmatpush1.msra.mxu0 0.0
    %1677 = vmatprep.subr.mxu0 0.0
    %1678 = vmatpush1.msra.mxu0 0.0
    %1679 = vmatprep.subr.mxu0 0.0
    %1680 = vmatpush1.msra.mxu0 0.0
    %1681 = vmatprep.subr.mxu0 0.0
    %1682 = vmatpush1.msra.mxu0 0.0
    %1683 = vmatprep.subr.mxu0 0.0
    %1684 = vmatpush1.msra.mxu0 0.0
    %1685 = vmatprep.subr.mxu0 0.0
    %1686 = vmatpush1.msra.mxu0 0.0
    %1687 = vmatprep.subr.mxu0 0.0
    %1688 = vmatpush1.msra.mxu0 0.0
    %1689 = vmatprep.subr.mxu0 0.0
    %1690 = vmatpush1.msra.mxu0 0.0
    %1691 = vmatprep.subr.mxu0 0.0
    %1692 = vmatpush1.msra.mxu0 0.0
    %1693 = vmatprep.subr.mxu0 0.0
    %1694 = vmatpush1.msra.mxu0 0.0
    %1695 = vmatprep.subr.mxu0 0.0
    %1696 = vmatpush1.msra.mxu0 0.0
    %1697 = vmatprep.subr.mxu0 0.0
    %1698 = vmatpush1.msra.mxu0 0.0
    %1699 = vmatprep.subr.mxu0 0.0
    %1700 = vmatpush1.msra.mxu0 0.0
    %1701 = vmatprep.subr.mxu0 0.0
    %1702 = vmatpush1.msra.mxu0 0.0
    %1703 = vmatprep.subr.mxu0 0.0
    %1704 = vmatpush1.msra.mxu0 0.0
    %1705 = vmatprep.subr.mxu0 0.0
    %1706 = vmatpush1.msra.mxu0 0.0
    %1707 = vmatprep.subr.mxu0 0.0
    %1708 = vmatpush1.msra.mxu0 0.0
    %1709 = vmatprep.subr.mxu0 0.0
    %1710 = vmatpush1.msra.mxu0 0.0
    %1711 = vmatprep.subr.mxu0 0.0
    %1712 = vmatpush1.msra.mxu0 0.0
    %1713 = vmatprep.subr.mxu0 0.0
    %1714 = vmatpush1.msra.mxu0 0.0
    %1715 = vmatprep.subr.mxu0 0.0
    %1716 = vmatpush1.msra.mxu0 0.0
    %1717 = vmatprep.mubr.f32.mxu0 0.0
    %1718 = vmatmul.mubr.f32.gmra.mrb[0].mxu0 %v1648
    %v1719 = vpop.f32.mrb[0].mxu0
    %v1720 = vadd.f32 0.0, %v1719
    %v1721 = vpop.f32.mrb[0].mxu0
    %1722 = vmatprep.mubr.f32.mxu0 0.0
    %1723 = vmatmul.mubr.f32.gmra.mrb[0].mxu0 %v1651
    %v1724 = vpop.f32.mrb[0].mxu0
    %v1725 = vadd.f32 0.0, %v1724
    %v1726 = vpop.f32.mrb[0].mxu0
    %1727 = vdwg.mxu0
    %1728 = vrot.lane.b32.xlu0 %v1520, 120
    %v1729 = vpop.permute.xlu0 %1728
    %1730 = vrot.lane.b32.xlu0 %v1525, 120
    %v1731 = vpop.permute.xlu0 %1730
    %1732 = vrot.lane.b32.xlu0 %v1418, 120
    %v1733 = vpop.permute.xlu0 %1732
    %1734 = vrot.lane.b32.xlu0 %v1423, 120
    %v1735 = vpop.permute.xlu0 %1734
    %v1736 = vsel %vm136, %v1729, 0
    %v1738 = vsel %vm136, %v1731, 0
    %v1740 = vsel %vm136, %v1733, 0
    %v1742 = vsel %vm136, %v1735, 0
    %1744 = vmatprep.subr.mxu0 0.0
    %1745 = vmatpush1.xpose.msra.mxu0 %v1740
    %1746 = vmatprep.subr.mxu0 0.0
    %1747 = vmatpush1.xpose.msra.mxu0 %v1742
    %1748 = vmatprep.subr.mxu0 0.0
    %1749 = vmatpush1.xpose.msra.mxu0 0.0
    %1750 = vmatprep.subr.mxu0 0.0
    %1751 = vmatpush1.xpose.msra.mxu0 0.0
    %1752 = vmatprep.subr.mxu0 0.0
    %1753 = vmatpush1.xpose.msra.mxu0 0.0
    %1754 = vmatprep.subr.mxu0 0.0
    %1755 = vmatpush1.xpose.msra.mxu0 0.0
    %1756 = vmatprep.subr.mxu0 0.0
    %1757 = vmatpush1.xpose.msra.mxu0 0.0
    %1758 = vmatprep.subr.mxu0 0.0
    %1759 = vmatpush1.xpose.msra.mxu0 0.0
    %1760 = vmatprep.subr.mxu0 0.0
    %1761 = vmatpush1.xpose.msra.mxu0 0.0
    %1762 = vmatprep.subr.mxu0 0.0
    %1763 = vmatpush1.xpose.msra.mxu0 0.0
    %1764 = vmatprep.subr.mxu0 0.0
    %1765 = vmatpush1.xpose.msra.mxu0 0.0
    %1766 = vmatprep.subr.mxu0 0.0
    %1767 = vmatpush1.xpose.msra.mxu0 0.0
    %1768 = vmatprep.subr.mxu0 0.0
    %1769 = vmatpush1.xpose.msra.mxu0 0.0
    %1770 = vmatprep.subr.mxu0 0.0
    %1771 = vmatpush1.xpose.msra.mxu0 0.0
    %1772 = vmatprep.subr.mxu0 0.0
    %1773 = vmatpush1.xpose.msra.mxu0 0.0
    %1774 = vmatprep.subr.mxu0 0.0
    %1775 = vmatpush1.xpose.msra.mxu0 0.0
    %1776 = vmatprep.subr.mxu0 0.0
    %1777 = vmatpush1.xpose.msra.mxu0 0.0
    %1778 = vmatprep.subr.mxu0 0.0
    %1779 = vmatpush1.xpose.msra.mxu0 0.0
    %1780 = vmatprep.subr.mxu0 0.0
    %1781 = vmatpush1.xpose.msra.mxu0 0.0
    %1782 = vmatprep.subr.mxu0 0.0
    %1783 = vmatpush1.xpose.msra.mxu0 0.0
    %1784 = vmatprep.subr.mxu0 0.0
    %1785 = vmatpush1.xpose.msra.mxu0 0.0
    %1786 = vmatprep.subr.mxu0 0.0
    %1787 = vmatpush1.xpose.msra.mxu0 0.0
    %1788 = vmatprep.subr.mxu0 0.0
    %1789 = vmatpush1.xpose.msra.mxu0 0.0
    %1790 = vmatprep.subr.mxu0 0.0
    %1791 = vmatpush1.xpose.msra.mxu0 0.0
    %1792 = vmatprep.subr.mxu0 0.0
    %1793 = vmatpush1.xpose.msra.mxu0 0.0
    %1794 = vmatprep.subr.mxu0 0.0
    %1795 = vmatpush1.xpose.msra.mxu0 0.0
    %1796 = vmatprep.subr.mxu0 0.0
    %1797 = vmatpush1.xpose.msra.mxu0 0.0
    %1798 = vmatprep.subr.mxu0 0.0
    %1799 = vmatpush1.xpose.msra.mxu0 0.0
    %1800 = vmatprep.subr.mxu0 0.0
    %1801 = vmatpush1.xpose.msra.mxu0 0.0
    %1802 = vmatprep.subr.mxu0 0.0
    %1803 = vmatpush1.xpose.msra.mxu0 0.0
    %1804 = vmatprep.subr.mxu0 0.0
    %1805 = vmatpush1.xpose.msra.mxu0 0.0
    %1806 = vmatprep.subr.mxu0 0.0
    %1807 = vmatpush1.xpose.msra.mxu0 0.0
    %1808 = vmatprep.mubr.f32.mxu0 0.0
    %1809 = vmatmul.mubr.f32.gmra.mrb[0].mxu0 %v1736
    %v1810 = vpop.f32.mrb[0].mxu0
    %v1811 = vadd.f32 0.0, %v1810
    %v1812 = vpop.f32.mrb[0].mxu0
    %1813 = vmatprep.mubr.f32.mxu0 0.0
    %1814 = vmatmul.mubr.f32.gmra.mrb[0].mxu0 %v1738
    %v1815 = vpop.f32.mrb[0].mxu0
    %v1816 = vadd.f32 0.0, %v1815
    %v1817 = vpop.f32.mrb[0].mxu0
    %1818 = vdwg.mxu0
    %v1819 = vmul.f32 %v1811, 0.35355338
    %v1820 = vmul.f32 %v1816, 0.35355338
    %v1821 = vadd.f32 %v1819, %v33
    %v1822 = vadd.f32 %v1820, %v34
    %v1823 = vsel %vm224, %v1821, -inf
    %1824 = vmax.xlane.f32.xlu0 %v1823
    %v1825 = vpop.xlane.xlu0 %1824
    %v1826 = vsel %vm224, %v1822, -inf
    %1827 = vmax.xlane.f32.xlu0 %v1826
    %v1828 = vpop.xlane.xlu0 %1827
    %v1829 = vsub.f32 %v1821, %v1825
    %v1830 = vsub.f32 %v1822, %v1828
    %v1831 = vmul.f32 %v1829, 1.442695
    %v1832 = vpow.pop %v1831
    %v1833 = vmul.f32 %v1830, 1.442695
    %v1834 = vpow.pop %v1833
    %v1835 = vsel %vm224, %v1832, 0.0
    %1836 = vadd.xlane.f32.xlu0 %v1835
    %v1837 = vpop.xlane.xlu0 %1836
    %v1838 = vsel %vm224, %v1834, 0.0
    %1839 = vadd.xlane.f32.xlu0 %v1838
    %v1840 = vpop.xlane.xlu0 %1839
    %v1841 = vrcp.pop %v1837
    %v1842 = vrcp.pop %v1840
    %v1843 = vmul.f32 %v1832, %v1841
    %v1844 = vmul.f32 %v1834, %v1842
    %1845 = vrot.lane.b32.xlu0 %v1418, 88
    %v1846 = vpop.permute.xlu0 %1845
    %1847 = vrot.lane.b32.xlu0 %v1423, 88
    %v1848 = vpop.permute.xlu0 %1847
    %v1852 = vsel %vm224, %v1843, 0
    %v1855 = vsel %vm224, %v1844, 0
    %1857 = vmatprep.subr.mxu0 0.0
    %1858 = vmatpush1.msra.mxu0 %v1846
    %1859 = vmatprep.subr.mxu0 0.0
    %1860 = vmatpush1.msra.mxu0 %v1848
    %1861 = vmatprep.subr.mxu0 0.0
    %1862 = vmatpush1.msra.mxu0 0.0
    %1863 = vmatprep.subr.mxu0 0.0
    %1864 = vmatpush1.msra.mxu0 0.0
    %1865 = vmatprep.subr.mxu0 0.0
    %1866 = vmatpush1.msra.mxu0 0.0
    %1867 = vmatprep.subr.mxu0 0.0
    %1868 = vmatpush1.msra.mxu0 0.0
    %1869 = vmatprep.subr.mxu0 0.0
    %1870 = vmatpush1.msra.mxu0 0.0
    %1871 = vmatprep.subr.mxu0 0.0
    %1872 = vmatpush1.msra.mxu0 0.0
    %1873 = vmatprep.subr.mxu0 0.0
    %1874 = vmatpush1.msra.mxu0 0.0
    %1875 = vmatprep.subr.mxu0 0.0
    %1876 = vmatpush1.msra.mxu0 0.0
    %1877 = vmatprep.subr.mxu0 0.0
    %1878 = vmatpush1.msra.mxu0 0.0
    %1879 = vmatprep.subr.mxu0 0.0
    %1880 = vmatpush1.msra.mxu0 0.0
    %1881 = vmatprep.subr.mxu0 0.0
    %1882 = vmatpush1.msra.mxu0 0.0
    %1883 = vmatprep.subr.mxu0 0.0
    %1884 = vmatpush1.msra.mxu0 0.0
    %1885 = vmatprep.subr.mxu0 0.0
    %1886 = vmatpush1.msra.mxu0 0.0
    %1887 = vmatprep.subr.mxu0 0.0
    %1888 = vmatpush1.msra.mxu0 0.0
    %1889 = vmatprep.subr.mxu0 0.0
    %1890 = vmatpush1.msra.mxu0 0.0
    %1891 = vmatprep.subr.mxu0 0.0
    %1892 = vmatpush1.msra.mxu0 0.0
    %1893 = vmatprep.subr.mxu0 0.0
    %1894 = vmatpush1.msra.mxu0 0.0
    %1895 = vmatprep.subr.mxu0 0.0
    %1896 = vmatpush1.msra.mxu0 0.0
    %1897 = vmatprep.subr.mxu0 0.0
    %1898 = vmatpush1.msra.mxu0 0.0
    %1899 = vmatprep.subr.mxu0 0.0
    %1900 = vmatpush1.msra.mxu0 0.0
    %1901 = vmatprep.subr.mxu0 0.0
    %1902 = vmatpush1.msra.mxu0 0.0
    %1903 = vmatprep.subr.mxu0 0.0
    %1904 = vmatpush1.msra.mxu0 0.0
    %1905 = vmatprep.subr.mxu0 0.0
    %1906 = vmatpush1.msra.mxu0 0.0
    %1907 = vmatprep.subr.mxu0 0.0
    %1908 = vmatpush1.msra.mxu0 0.0
    %1909 = vmatprep.subr.mxu0 0.0
    %1910 = vmatpush1.msra.mxu0 0.0
    %1911 = vmatprep.subr.mxu0 0.0
    %1912 = vmatpush1.msra.mxu0 0.0
    %1913 = vmatprep.subr.mxu0 0.0
    %1914 = vmatpush1.msra.mxu0 0.0
    %1915 = vmatprep.subr.mxu0 0.0
    %1916 = vmatpush1.msra.mxu0 0.0
    %1917 = vmatprep.subr.mxu0 0.0
    %1918 = vmatpush1.msra.mxu0 0.0
    %1919 = vmatprep.subr.mxu0 0.0
    %1920 = vmatpush1.msra.mxu0 0.0
    %1921 = vmatprep.mubr.f32.mxu0 0.0
    %1922 = vmatmul.mubr.f32.gmra.mrb[0].mxu0 %v1852
    %v1923 = vpop.f32.mrb[0].mxu0
    %v1924 = vadd.f32 0.0, %v1923
    %v1925 = vpop.f32.mrb[0].mxu0
    %1926 = vmatprep.mubr.f32.mxu0 0.0
    %1927 = vmatmul.mubr.f32.gmra.mrb[0].mxu0 %v1855
    %v1928 = vpop.f32.mrb[0].mxu0
    %v1929 = vadd.f32 0.0, %v1928
    %v1930 = vpop.f32.mrb[0].mxu0
    %1931 = vdwg.mxu0
    %1932 = vrot.lane.b32.xlu0 %v127, 32
    %v1933 = vpop.permute.xlu0 %1932
    %v1936 = vsel %vm136, %v1924, 0
    %v1939 = vsel %vm136, %v1929, 0
    %1941 = vmatprep.subr.mxu0 0.0
    %1942 = vmatpush1.msra.mxu0 %v1933
    %1943 = vmatprep.subr.mxu0 0.0
    %1944 = vmatpush1.msra.mxu0 0.0
    %1945 = vmatprep.subr.mxu0 0.0
    %1946 = vmatpush1.msra.mxu0 0.0
    %1947 = vmatprep.subr.mxu0 0.0
    %1948 = vmatpush1.msra.mxu0 0.0
    %1949 = vmatprep.subr.mxu0 0.0
    %1950 = vmatpush1.msra.mxu0 0.0
    %1951 = vmatprep.subr.mxu0 0.0
    %1952 = vmatpush1.msra.mxu0 0.0
    %1953 = vmatprep.subr.mxu0 0.0
    %1954 = vmatpush1.msra.mxu0 0.0
    %1955 = vmatprep.subr.mxu0 0.0
    %1956 = vmatpush1.msra.mxu0 0.0
    %1957 = vmatprep.subr.mxu0 0.0
    %1958 = vmatpush1.msra.mxu0 0.0
    %1959 = vmatprep.subr.mxu0 0.0
    %1960 = vmatpush1.msra.mxu0 0.0
    %1961 = vmatprep.subr.mxu0 0.0
    %1962 = vmatpush1.msra.mxu0 0.0
    %1963 = vmatprep.subr.mxu0 0.0
    %1964 = vmatpush1.msra.mxu0 0.0
    %1965 = vmatprep.subr.mxu0 0.0
    %1966 = vmatpush1.msra.mxu0 0.0
    %1967 = vmatprep.subr.mxu0 0.0
    %1968 = vmatpush1.msra.mxu0 0.0
    %1969 = vmatprep.subr.mxu0 0.0
    %1970 = vmatpush1.msra.mxu0 0.0
    %1971 = vmatprep.subr.mxu0 0.0
    %1972 = vmatpush1.msra.mxu0 0.0
    %1973 = vmatprep.subr.mxu0 0.0
    %1974 = vmatpush1.msra.mxu0 0.0
    %1975 = vmatprep.subr.mxu0 0.0
    %1976 = vmatpush1.msra.mxu0 0.0
    %1977 = vmatprep.subr.mxu0 0.0
    %1978 = vmatpush1.msra.mxu0 0.0
    %1979 = vmatprep.subr.mxu0 0.0
    %1980 = vmatpush1.msra.mxu0 0.0
    %1981 = vmatprep.subr.mxu0 0.0
    %1982 = vmatpush1.msra.mxu0 0.0
    %1983 = vmatprep.subr.mxu0 0.0
    %1984 = vmatpush1.msra.mxu0 0.0
    %1985 = vmatprep.subr.mxu0 0.0
    %1986 = vmatpush1.msra.mxu0 0.0
    %1987 = vmatprep.subr.mxu0 0.0
    %1988 = vmatpush1.msra.mxu0 0.0
    %1989 = vmatprep.subr.mxu0 0.0
    %1990 = vmatpush1.msra.mxu0 0.0
    %1991 = vmatprep.subr.mxu0 0.0
    %1992 = vmatpush1.msra.mxu0 0.0
    %1993 = vmatprep.subr.mxu0 0.0
    %1994 = vmatpush1.msra.mxu0 0.0
    %1995 = vmatprep.subr.mxu0 0.0
    %1996 = vmatpush1.msra.mxu0 0.0
    %1997 = vmatprep.subr.mxu0 0.0
    %1998 = vmatpush1.msra.mxu0 0.0
    %1999 = vmatprep.subr.mxu0 0.0
    %2000 = vmatpush1.msra.mxu0 0.0
    %2001 = vmatprep.subr.mxu0 0.0
    %2002 = vmatpush1.msra.mxu0 0.0
    %2003 = vmatprep.subr.mxu0 0.0
    %2004 = vmatpush1.msra.mxu0 0.0
    %2005 = vmatprep.mubr.f32.mxu0 0.0
    %2006 = vmatmul.mubr.f32.gmra.mrb[0].mxu0 %v1936
    %v2007 = vpop.f32.mrb[0].mxu0
    %v2008 = vadd.f32 0.0, %v2007
    %v2009 = vpop.f32.mrb[0].mxu0
    %2010 = vmatprep.mubr.f32.mxu0 0.0
    %2011 = vmatmul.mubr.f32.gmra.mrb[0].mxu0 %v1939
    %v2012 = vpop.f32.mrb[0].mxu0
    %v2013 = vadd.f32 0.0, %v2012
    %v2014 = vpop.f32.mrb[0].mxu0
    %2015 = vdwg.mxu0
    %2016 = vrot.lane.b32.xlu0 %v126, 32
    %v2017 = vpop.permute.xlu0 %2016
    %v2020 = vsel %vm136, %v1720, 0
    %v2023 = vsel %vm136, %v1725, 0
    %2025 = vmatprep.subr.mxu0 0.0
    %2026 = vmatpush1.msra.mxu0 %v2017
    %2027 = vmatprep.subr.mxu0 0.0
    %2028 = vmatpush1.msra.mxu0 0.0
    %2029 = vmatprep.subr.mxu0 0.0
    %2030 = vmatpush1.msra.mxu0 0.0
    %2031 = vmatprep.subr.mxu0 0.0
    %2032 = vmatpush1.msra.mxu0 0.0
    %2033 = vmatprep.subr.mxu0 0.0
    %2034 = vmatpush1.msra.mxu0 0.0
    %2035 = vmatprep.subr.mxu0 0.0
    %2036 = vmatpush1.msra.mxu0 0.0
    %2037 = vmatprep.subr.mxu0 0.0
    %2038 = vmatpush1.msra.mxu0 0.0
    %2039 = vmatprep.subr.mxu0 0.0
    %2040 = vmatpush1.msra.mxu0 0.0
    %2041 = vmatprep.subr.mxu0 0.0
    %2042 = vmatpush1.msra.mxu0 0.0
    %2043 = vmatprep.subr.mxu0 0.0
    %2044 = vmatpush1.msra.mxu0 0.0
    %2045 = vmatprep.subr.mxu0 0.0
    %2046 = vmatpush1.msra.mxu0 0.0
    %2047 = vmatprep.subr.mxu0 0.0
    %2048 = vmatpush1.msra.mxu0 0.0
    %2049 = vmatprep.subr.mxu0 0.0
    %2050 = vmatpush1.msra.mxu0 0.0
    %2051 = vmatprep.subr.mxu0 0.0
    %2052 = vmatpush1.msra.mxu0 0.0
    %2053 = vmatprep.subr.mxu0 0.0
    %2054 = vmatpush1.msra.mxu0 0.0
    %2055 = vmatprep.subr.mxu0 0.0
    %2056 = vmatpush1.msra.mxu0 0.0
    %2057 = vmatprep.subr.mxu0 0.0
    %2058 = vmatpush1.msra.mxu0 0.0
    %2059 = vmatprep.subr.mxu0 0.0
    %2060 = vmatpush1.msra.mxu0 0.0
    %2061 = vmatprep.subr.mxu0 0.0
    %2062 = vmatpush1.msra.mxu0 0.0
    %2063 = vmatprep.subr.mxu0 0.0
    %2064 = vmatpush1.msra.mxu0 0.0
    %2065 = vmatprep.subr.mxu0 0.0
    %2066 = vmatpush1.msra.mxu0 0.0
    %2067 = vmatprep.subr.mxu0 0.0
    %2068 = vmatpush1.msra.mxu0 0.0
    %2069 = vmatprep.subr.mxu0 0.0
    %2070 = vmatpush1.msra.mxu0 0.0
    %2071 = vmatprep.subr.mxu0 0.0
    %2072 = vmatpush1.msra.mxu0 0.0
    %2073 = vmatprep.subr.mxu0 0.0
    %2074 = vmatpush1.msra.mxu0 0.0
    %2075 = vmatprep.subr.mxu0 0.0
    %2076 = vmatpush1.msra.mxu0 0.0
    %2077 = vmatprep.subr.mxu0 0.0
    %2078 = vmatpush1.msra.mxu0 0.0
    %2079 = vmatprep.subr.mxu0 0.0
    %2080 = vmatpush1.msra.mxu0 0.0
    %2081 = vmatprep.subr.mxu0 0.0
    %2082 = vmatpush1.msra.mxu0 0.0
    %2083 = vmatprep.subr.mxu0 0.0
    %2084 = vmatpush1.msra.mxu0 0.0
    %2085 = vmatprep.subr.mxu0 0.0
    %2086 = vmatpush1.msra.mxu0 0.0
    %2087 = vmatprep.subr.mxu0 0.0
    %2088 = vmatpush1.msra.mxu0 0.0
    %2089 = vmatprep.mubr.f32.mxu0 0.0
    %2090 = vmatmul.mubr.f32.gmra.mrb[0].mxu0 %v2020
    %v2091 = vpop.f32.mrb[0].mxu0
    %v2092 = vadd.f32 %v2008, %v2091
    %v2093 = vpop.f32.mrb[0].mxu0
    %2094 = vmatprep.mubr.f32.mxu0 0.0
    %2095 = vmatmul.mubr.f32.gmra.mrb[0].mxu0 %v2023
    %v2096 = vpop.f32.mrb[0].mxu0
    %v2097 = vadd.f32 %v2013, %v2096
    %v2098 = vpop.f32.mrb[0].mxu0
    %2099 = vdwg.mxu0
    %2100 = vrot.lane.b32.xlu0 %v1520, 112
    %v2101 = vpop.permute.xlu0 %2100
    %2102 = vrot.lane.b32.xlu0 %v1525, 112
    %v2103 = vpop.permute.xlu0 %2102
    %2104 = vrot.lane.b32.xlu0 %v1418, 112
    %v2105 = vpop.permute.xlu0 %2104
    %2106 = vrot.lane.b32.xlu0 %v1423, 112
    %v2107 = vpop.permute.xlu0 %2106
    %v2108 = vsel %vm136, %v2101, 0
    %v2110 = vsel %vm136, %v2103, 0
    %v2112 = vsel %vm136, %v2105, 0
    %v2114 = vsel %vm136, %v2107, 0
    %2116 = vmatprep.subr.mxu0 0.0
    %2117 = vmatpush1.xpose.msra.mxu0 %v2112
    %2118 = vmatprep.subr.mxu0 0.0
    %2119 = vmatpush1.xpose.msra.mxu0 %v2114
    %2120 = vmatprep.subr.mxu0 0.0
    %2121 = vmatpush1.xpose.msra.mxu0 0.0
    %2122 = vmatprep.subr.mxu0 0.0
    %2123 = vmatpush1.xpose.msra.mxu0 0.0
    %2124 = vmatprep.subr.mxu0 0.0
    %2125 = vmatpush1.xpose.msra.mxu0 0.0
    %2126 = vmatprep.subr.mxu0 0.0
    %2127 = vmatpush1.xpose.msra.mxu0 0.0
    %2128 = vmatprep.subr.mxu0 0.0
    %2129 = vmatpush1.xpose.msra.mxu0 0.0
    %2130 = vmatprep.subr.mxu0 0.0
    %2131 = vmatpush1.xpose.msra.mxu0 0.0
    %2132 = vmatprep.subr.mxu0 0.0
    %2133 = vmatpush1.xpose.msra.mxu0 0.0
    %2134 = vmatprep.subr.mxu0 0.0
    %2135 = vmatpush1.xpose.msra.mxu0 0.0
    %2136 = vmatprep.subr.mxu0 0.0
    %2137 = vmatpush1.xpose.msra.mxu0 0.0
    %2138 = vmatprep.subr.mxu0 0.0
    %2139 = vmatpush1.xpose.msra.mxu0 0.0
    %2140 = vmatprep.subr.mxu0 0.0
    %2141 = vmatpush1.xpose.msra.mxu0 0.0
    %2142 = vmatprep.subr.mxu0 0.0
    %2143 = vmatpush1.xpose.msra.mxu0 0.0
    %2144 = vmatprep.subr.mxu0 0.0
    %2145 = vmatpush1.xpose.msra.mxu0 0.0
    %2146 = vmatprep.subr.mxu0 0.0
    %2147 = vmatpush1.xpose.msra.mxu0 0.0
    %2148 = vmatprep.subr.mxu0 0.0
    %2149 = vmatpush1.xpose.msra.mxu0 0.0
    %2150 = vmatprep.subr.mxu0 0.0
    %2151 = vmatpush1.xpose.msra.mxu0 0.0
    %2152 = vmatprep.subr.mxu0 0.0
    %2153 = vmatpush1.xpose.msra.mxu0 0.0
    %2154 = vmatprep.subr.mxu0 0.0
    %2155 = vmatpush1.xpose.msra.mxu0 0.0
    %2156 = vmatprep.subr.mxu0 0.0
    %2157 = vmatpush1.xpose.msra.mxu0 0.0
    %2158 = vmatprep.subr.mxu0 0.0
    %2159 = vmatpush1.xpose.msra.mxu0 0.0
    %2160 = vmatprep.subr.mxu0 0.0
    %2161 = vmatpush1.xpose.msra.mxu0 0.0
    %2162 = vmatprep.subr.mxu0 0.0
    %2163 = vmatpush1.xpose.msra.mxu0 0.0
    %2164 = vmatprep.subr.mxu0 0.0
    %2165 = vmatpush1.xpose.msra.mxu0 0.0
    %2166 = vmatprep.subr.mxu0 0.0
    %2167 = vmatpush1.xpose.msra.mxu0 0.0
    %2168 = vmatprep.subr.mxu0 0.0
    %2169 = vmatpush1.xpose.msra.mxu0 0.0
    %2170 = vmatprep.subr.mxu0 0.0
    %2171 = vmatpush1.xpose.msra.mxu0 0.0
    %2172 = vmatprep.subr.mxu0 0.0
    %2173 = vmatpush1.xpose.msra.mxu0 0.0
    %2174 = vmatprep.subr.mxu0 0.0
    %2175 = vmatpush1.xpose.msra.mxu0 0.0
    %2176 = vmatprep.subr.mxu0 0.0
    %2177 = vmatpush1.xpose.msra.mxu0 0.0
    %2178 = vmatprep.subr.mxu0 0.0
    %2179 = vmatpush1.xpose.msra.mxu0 0.0
    %2180 = vmatprep.mubr.f32.mxu0 0.0
    %2181 = vmatmul.mubr.f32.gmra.mrb[0].mxu0 %v2108
    %v2182 = vpop.f32.mrb[0].mxu0
    %v2183 = vadd.f32 0.0, %v2182
    %v2184 = vpop.f32.mrb[0].mxu0
    %2185 = vmatprep.mubr.f32.mxu0 0.0
    %2186 = vmatmul.mubr.f32.gmra.mrb[0].mxu0 %v2110
    %v2187 = vpop.f32.mrb[0].mxu0
    %v2188 = vadd.f32 0.0, %v2187
    %v2189 = vpop.f32.mrb[0].mxu0
    %2190 = vdwg.mxu0
    %v2191 = vmul.f32 %v2183, 0.35355338
    %v2192 = vmul.f32 %v2188, 0.35355338
    %v2193 = vadd.f32 %v2191, %v33
    %v2194 = vadd.f32 %v2192, %v34
    %v2195 = vsel %vm224, %v2193, -inf
    %2196 = vmax.xlane.f32.xlu0 %v2195
    %v2197 = vpop.xlane.xlu0 %2196
    %v2198 = vsel %vm224, %v2194, -inf
    %2199 = vmax.xlane.f32.xlu0 %v2198
    %v2200 = vpop.xlane.xlu0 %2199
    %v2201 = vsub.f32 %v2193, %v2197
    %v2202 = vsub.f32 %v2194, %v2200
    %v2203 = vmul.f32 %v2201, 1.442695
    %v2204 = vpow.pop %v2203
    %v2205 = vmul.f32 %v2202, 1.442695
    %v2206 = vpow.pop %v2205
    %v2207 = vsel %vm224, %v2204, 0.0
    %2208 = vadd.xlane.f32.xlu0 %v2207
    %v2209 = vpop.xlane.xlu0 %2208
    %v2210 = vsel %vm224, %v2206, 0.0
    %2211 = vadd.xlane.f32.xlu0 %v2210
    %v2212 = vpop.xlane.xlu0 %2211
    %v2213 = vrcp.pop %v2209
    %v2214 = vrcp.pop %v2212
    %v2215 = vmul.f32 %v2204, %v2213
    %v2216 = vmul.f32 %v2206, %v2214
    %2217 = vrot.lane.b32.xlu0 %v1418, 80
    %v2218 = vpop.permute.xlu0 %2217
    %2219 = vrot.lane.b32.xlu0 %v1423, 80
    %v2220 = vpop.permute.xlu0 %2219
    %v2224 = vsel %vm224, %v2215, 0
    %v2227 = vsel %vm224, %v2216, 0
    %2229 = vmatprep.subr.mxu0 0.0
    %2230 = vmatpush1.msra.mxu0 %v2218
    %2231 = vmatprep.subr.mxu0 0.0
    %2232 = vmatpush1.msra.mxu0 %v2220
    %2233 = vmatprep.subr.mxu0 0.0
    %2234 = vmatpush1.msra.mxu0 0.0
    %2235 = vmatprep.subr.mxu0 0.0
    %2236 = vmatpush1.msra.mxu0 0.0
    %2237 = vmatprep.subr.mxu0 0.0
    %2238 = vmatpush1.msra.mxu0 0.0
    %2239 = vmatprep.subr.mxu0 0.0
    %2240 = vmatpush1.msra.mxu0 0.0
    %2241 = vmatprep.subr.mxu0 0.0
    %2242 = vmatpush1.msra.mxu0 0.0
    %2243 = vmatprep.subr.mxu0 0.0
    %2244 = vmatpush1.msra.mxu0 0.0
    %2245 = vmatprep.subr.mxu0 0.0
    %2246 = vmatpush1.msra.mxu0 0.0
    %2247 = vmatprep.subr.mxu0 0.0
    %2248 = vmatpush1.msra.mxu0 0.0
    %2249 = vmatprep.subr.mxu0 0.0
    %2250 = vmatpush1.msra.mxu0 0.0
    %2251 = vmatprep.subr.mxu0 0.0
    %2252 = vmatpush1.msra.mxu0 0.0
    %2253 = vmatprep.subr.mxu0 0.0
    %2254 = vmatpush1.msra.mxu0 0.0
    %2255 = vmatprep.subr.mxu0 0.0
    %2256 = vmatpush1.msra.mxu0 0.0
    %2257 = vmatprep.subr.mxu0 0.0
    %2258 = vmatpush1.msra.mxu0 0.0
    %2259 = vmatprep.subr.mxu0 0.0
    %2260 = vmatpush1.msra.mxu0 0.0
    %2261 = vmatprep.subr.mxu0 0.0
    %2262 = vmatpush1.msra.mxu0 0.0
    %2263 = vmatprep.subr.mxu0 0.0
    %2264 = vmatpush1.msra.mxu0 0.0
    %2265 = vmatprep.subr.mxu0 0.0
    %2266 = vmatpush1.msra.mxu0 0.0
    %2267 = vmatprep.subr.mxu0 0.0
    %2268 = vmatpush1.msra.mxu0 0.0
    %2269 = vmatprep.subr.mxu0 0.0
    %2270 = vmatpush1.msra.mxu0 0.0
    %2271 = vmatprep.subr.mxu0 0.0
    %2272 = vmatpush1.msra.mxu0 0.0
    %2273 = vmatprep.subr.mxu0 0.0
    %2274 = vmatpush1.msra.mxu0 0.0
    %2275 = vmatprep.subr.mxu0 0.0
    %2276 = vmatpush1.msra.mxu0 0.0
    %2277 = vmatprep.subr.mxu0 0.0
    %2278 = vmatpush1.msra.mxu0 0.0
    %2279 = vmatprep.subr.mxu0 0.0
    %2280 = vmatpush1.msra.mxu0 0.0
    %2281 = vmatprep.subr.mxu0 0.0
    %2282 = vmatpush1.msra.mxu0 0.0
    %2283 = vmatprep.subr.mxu0 0.0
    %2284 = vmatpush1.msra.mxu0 0.0
    %2285 = vmatprep.subr.mxu0 0.0
    %2286 = vmatpush1.msra.mxu0 0.0
    %2287 = vmatprep.subr.mxu0 0.0
    %2288 = vmatpush1.msra.mxu0 0.0
    %2289 = vmatprep.subr.mxu0 0.0
    %2290 = vmatpush1.msra.mxu0 0.0
    %2291 = vmatprep.subr.mxu0 0.0
    %2292 = vmatpush1.msra.mxu0 0.0
    %2293 = vmatprep.mubr.f32.mxu0 0.0
    %2294 = vmatmul.mubr.f32.gmra.mrb[0].mxu0 %v2224
    %v2295 = vpop.f32.mrb[0].mxu0
    %v2296 = vadd.f32 0.0, %v2295
    %v2297 = vpop.f32.mrb[0].mxu0
    %2298 = vmatprep.mubr.f32.mxu0 0.0
    %2299 = vmatmul.mubr.f32.gmra.mrb[0].mxu0 %v2227
    %v2300 = vpop.f32.mrb[0].mxu0
    %v2301 = vadd.f32 0.0, %v2300
    %v2302 = vpop.f32.mrb[0].mxu0
    %2303 = vdwg.mxu0
    %2304 = vrot.lane.b32.xlu0 %v128, 32
    %v2305 = vpop.permute.xlu0 %2304
    %v2308 = vsel %vm136, %v2296, 0
    %v2311 = vsel %vm136, %v2301, 0
    %2313 = vmatprep.subr.mxu0 0.0
    %2314 = vmatpush1.msra.mxu0 %v2305
    %2315 = vmatprep.subr.mxu0 0.0
    %2316 = vmatpush1.msra.mxu0 0.0
    %2317 = vmatprep.subr.mxu0 0.0
    %2318 = vmatpush1.msra.mxu0 0.0
    %2319 = vmatprep.subr.mxu0 0.0
    %2320 = vmatpush1.msra.mxu0 0.0
    %2321 = vmatprep.subr.mxu0 0.0
    %2322 = vmatpush1.msra.mxu0 0.0
    %2323 = vmatprep.subr.mxu0 0.0
    %2324 = vmatpush1.msra.mxu0 0.0
    %2325 = vmatprep.subr.mxu0 0.0
    %2326 = vmatpush1.msra.mxu0 0.0
    %2327 = vmatprep.subr.mxu0 0.0
    %2328 = vmatpush1.msra.mxu0 0.0
    %2329 = vmatprep.subr.mxu0 0.0
    %2330 = vmatpush1.msra.mxu0 0.0
    %2331 = vmatprep.subr.mxu0 0.0
    %2332 = vmatpush1.msra.mxu0 0.0
    %2333 = vmatprep.subr.mxu0 0.0
    %2334 = vmatpush1.msra.mxu0 0.0
    %2335 = vmatprep.subr.mxu0 0.0
    %2336 = vmatpush1.msra.mxu0 0.0
    %2337 = vmatprep.subr.mxu0 0.0
    %2338 = vmatpush1.msra.mxu0 0.0
    %2339 = vmatprep.subr.mxu0 0.0
    %2340 = vmatpush1.msra.mxu0 0.0
    %2341 = vmatprep.subr.mxu0 0.0
    %2342 = vmatpush1.msra.mxu0 0.0
    %2343 = vmatprep.subr.mxu0 0.0
    %2344 = vmatpush1.msra.mxu0 0.0
    %2345 = vmatprep.subr.mxu0 0.0
    %2346 = vmatpush1.msra.mxu0 0.0
    %2347 = vmatprep.subr.mxu0 0.0
    %2348 = vmatpush1.msra.mxu0 0.0
    %2349 = vmatprep.subr.mxu0 0.0
    %2350 = vmatpush1.msra.mxu0 0.0
    %2351 = vmatprep.subr.mxu0 0.0
    %2352 = vmatpush1.msra.mxu0 0.0
    %2353 = vmatprep.subr.mxu0 0.0
    %2354 = vmatpush1.msra.mxu0 0.0
    %2355 = vmatprep.subr.mxu0 0.0
    %2356 = vmatpush1.msra.mxu0 0.0
    %2357 = vmatprep.subr.mxu0 0.0
    %2358 = vmatpush1.msra.mxu0 0.0
    %2359 = vmatprep.subr.mxu0 0.0
    %2360 = vmatpush1.msra.mxu0 0.0
    %2361 = vmatprep.subr.mxu0 0.0
    %2362 = vmatpush1.msra.mxu0 0.0
    %2363 = vmatprep.subr.mxu0 0.0
    %2364 = vmatpush1.msra.mxu0 0.0
    %2365 = vmatprep.subr.mxu0 0.0
    %2366 = vmatpush1.msra.mxu0 0.0
    %2367 = vmatprep.subr.mxu0 0.0
    %2368 = vmatpush1.msra.mxu0 0.0
    %2369 = vmatprep.subr.mxu0 0.0
    %2370 = vmatpush1.msra.mxu0 0.0
    %2371 = vmatprep.subr.mxu0 0.0
    %2372 = vmatpush1.msra.mxu0 0.0
    %2373 = vmatprep.subr.mxu0 0.0
    %2374 = vmatpush1.msra.mxu0 0.0
    %2375 = vmatprep.subr.mxu0 0.0
    %2376 = vmatpush1.msra.mxu0 0.0
    %2377 = vmatprep.mubr.f32.mxu0 0.0
    %2378 = vmatmul.mubr.f32.gmra.mrb[0].mxu0 %v2308
    %v2379 = vpop.f32.mrb[0].mxu0
    %v2380 = vadd.f32 0.0, %v2379
    %v2381 = vpop.f32.mrb[0].mxu0
    %2382 = vmatprep.mubr.f32.mxu0 0.0
    %2383 = vmatmul.mubr.f32.gmra.mrb[0].mxu0 %v2311
    %v2384 = vpop.f32.mrb[0].mxu0
    %v2385 = vadd.f32 0.0, %v2384
    %v2386 = vpop.f32.mrb[0].mxu0
    %2387 = vdwg.mxu0
    %v2388 = vadd.f32 %v2092, %v2380
    %v2389 = vadd.f32 %v2097, %v2385
    %2390 = vrot.lane.b32.xlu0 %v1520, 104
    %v2391 = vpop.permute.xlu0 %2390
    %2392 = vrot.lane.b32.xlu0 %v1525, 104
    %v2393 = vpop.permute.xlu0 %2392
    %2394 = vrot.lane.b32.xlu0 %v1418, 104
    %v2395 = vpop.permute.xlu0 %2394
    %2396 = vrot.lane.b32.xlu0 %v1423, 104
    %v2397 = vpop.permute.xlu0 %2396
    %v2398 = vsel %vm136, %v2391, 0
    %v2400 = vsel %vm136, %v2393, 0
    %v2402 = vsel %vm136, %v2395, 0
    %v2404 = vsel %vm136, %v2397, 0
    %2406 = vmatprep.subr.mxu0 0.0
    %2407 = vmatpush1.xpose.msra.mxu0 %v2402
    %2408 = vmatprep.subr.mxu0 0.0
    %2409 = vmatpush1.xpose.msra.mxu0 %v2404
    %2410 = vmatprep.subr.mxu0 0.0
    %2411 = vmatpush1.xpose.msra.mxu0 0.0
    %2412 = vmatprep.subr.mxu0 0.0
    %2413 = vmatpush1.xpose.msra.mxu0 0.0
    %2414 = vmatprep.subr.mxu0 0.0
    %2415 = vmatpush1.xpose.msra.mxu0 0.0
    %2416 = vmatprep.subr.mxu0 0.0
    %2417 = vmatpush1.xpose.msra.mxu0 0.0
    %2418 = vmatprep.subr.mxu0 0.0
    %2419 = vmatpush1.xpose.msra.mxu0 0.0
    %2420 = vmatprep.subr.mxu0 0.0
    %2421 = vmatpush1.xpose.msra.mxu0 0.0
    %2422 = vmatprep.subr.mxu0 0.0
    %2423 = vmatpush1.xpose.msra.mxu0 0.0
    %2424 = vmatprep.subr.mxu0 0.0
    %2425 = vmatpush1.xpose.msra.mxu0 0.0
    %2426 = vmatprep.subr.mxu0 0.0
    %2427 = vmatpush1.xpose.msra.mxu0 0.0
    %2428 = vmatprep.subr.mxu0 0.0
    %2429 = vmatpush1.xpose.msra.mxu0 0.0
    %2430 = vmatprep.subr.mxu0 0.0
    %2431 = vmatpush1.xpose.msra.mxu0 0.0
    %2432 = vmatprep.subr.mxu0 0.0
    %2433 = vmatpush1.xpose.msra.mxu0 0.0
    %2434 = vmatprep.subr.mxu0 0.0
    %2435 = vmatpush1.xpose.msra.mxu0 0.0
    %2436 = vmatprep.subr.mxu0 0.0
    %2437 = vmatpush1.xpose.msra.mxu0 0.0
    %2438 = vmatprep.subr.mxu0 0.0
    %2439 = vmatpush1.xpose.msra.mxu0 0.0
    %2440 = vmatprep.subr.mxu0 0.0
    %2441 = vmatpush1.xpose.msra.mxu0 0.0
    %2442 = vmatprep.subr.mxu0 0.0
    %2443 = vmatpush1.xpose.msra.mxu0 0.0
    %2444 = vmatprep.subr.mxu0 0.0
    %2445 = vmatpush1.xpose.msra.mxu0 0.0
    %2446 = vmatprep.subr.mxu0 0.0
    %2447 = vmatpush1.xpose.msra.mxu0 0.0
    %2448 = vmatprep.subr.mxu0 0.0
    %2449 = vmatpush1.xpose.msra.mxu0 0.0
    %2450 = vmatprep.subr.mxu0 0.0
    %2451 = vmatpush1.xpose.msra.mxu0 0.0
    %2452 = vmatprep.subr.mxu0 0.0
    %2453 = vmatpush1.xpose.msra.mxu0 0.0
    %2454 = vmatprep.subr.mxu0 0.0
    %2455 = vmatpush1.xpose.msra.mxu0 0.0
    %2456 = vmatprep.subr.mxu0 0.0
    %2457 = vmatpush1.xpose.msra.mxu0 0.0
    %2458 = vmatprep.subr.mxu0 0.0
    %2459 = vmatpush1.xpose.msra.mxu0 0.0
    %2460 = vmatprep.subr.mxu0 0.0
    %2461 = vmatpush1.xpose.msra.mxu0 0.0
    %2462 = vmatprep.subr.mxu0 0.0
    %2463 = vmatpush1.xpose.msra.mxu0 0.0
    %2464 = vmatprep.subr.mxu0 0.0
    %2465 = vmatpush1.xpose.msra.mxu0 0.0
    %2466 = vmatprep.subr.mxu0 0.0
    %2467 = vmatpush1.xpose.msra.mxu0 0.0
    %2468 = vmatprep.subr.mxu0 0.0
    %2469 = vmatpush1.xpose.msra.mxu0 0.0
    %2470 = vmatprep.mubr.f32.mxu0 0.0
    %2471 = vmatmul.mubr.f32.gmra.mrb[0].mxu0 %v2398
    %v2472 = vpop.f32.mrb[0].mxu0
    %v2473 = vadd.f32 0.0, %v2472
    %v2474 = vpop.f32.mrb[0].mxu0
    %2475 = vmatprep.mubr.f32.mxu0 0.0
    %2476 = vmatmul.mubr.f32.gmra.mrb[0].mxu0 %v2400
    %v2477 = vpop.f32.mrb[0].mxu0
    %v2478 = vadd.f32 0.0, %v2477
    %v2479 = vpop.f32.mrb[0].mxu0
    %2480 = vdwg.mxu0
    %v2481 = vmul.f32 %v2473, 0.35355338
    %v2482 = vmul.f32 %v2478, 0.35355338
    %v2483 = vadd.f32 %v2481, %v33
    %v2484 = vadd.f32 %v2482, %v34
    %v2485 = vsel %vm224, %v2483, -inf
    %2486 = vmax.xlane.f32.xlu0 %v2485
    %v2487 = vpop.xlane.xlu0 %2486
    %v2488 = vsel %vm224, %v2484, -inf
    %2489 = vmax.xlane.f32.xlu0 %v2488
    %v2490 = vpop.xlane.xlu0 %2489
    %v2491 = vsub.f32 %v2483, %v2487
    %v2492 = vsub.f32 %v2484, %v2490
    %v2493 = vmul.f32 %v2491, 1.442695
    %v2494 = vpow.pop %v2493
    %v2495 = vmul.f32 %v2492, 1.442695
    %v2496 = vpow.pop %v2495
    %v2497 = vsel %vm224, %v2494, 0.0
    %2498 = vadd.xlane.f32.xlu0 %v2497
    %v2499 = vpop.xlane.xlu0 %2498
    %v2500 = vsel %vm224, %v2496, 0.0
    %2501 = vadd.xlane.f32.xlu0 %v2500
    %v2502 = vpop.xlane.xlu0 %2501
    %v2503 = vrcp.pop %v2499
    %v2504 = vrcp.pop %v2502
    %v2505 = vmul.f32 %v2494, %v2503
    %v2506 = vmul.f32 %v2496, %v2504
    %2507 = vrot.lane.b32.xlu0 %v1418, 72
    %v2508 = vpop.permute.xlu0 %2507
    %2509 = vrot.lane.b32.xlu0 %v1423, 72
    %v2510 = vpop.permute.xlu0 %2509
    %v2514 = vsel %vm224, %v2505, 0
    %v2517 = vsel %vm224, %v2506, 0
    %2519 = vmatprep.subr.mxu0 0.0
    %2520 = vmatpush1.msra.mxu0 %v2508
    %2521 = vmatprep.subr.mxu0 0.0
    %2522 = vmatpush1.msra.mxu0 %v2510
    %2523 = vmatprep.subr.mxu0 0.0
    %2524 = vmatpush1.msra.mxu0 0.0
    %2525 = vmatprep.subr.mxu0 0.0
    %2526 = vmatpush1.msra.mxu0 0.0
    %2527 = vmatprep.subr.mxu0 0.0
    %2528 = vmatpush1.msra.mxu0 0.0
    %2529 = vmatprep.subr.mxu0 0.0
    %2530 = vmatpush1.msra.mxu0 0.0
    %2531 = vmatprep.subr.mxu0 0.0
    %2532 = vmatpush1.msra.mxu0 0.0
    %2533 = vmatprep.subr.mxu0 0.0
    %2534 = vmatpush1.msra.mxu0 0.0
    %2535 = vmatprep.subr.mxu0 0.0
    %2536 = vmatpush1.msra.mxu0 0.0
    %2537 = vmatprep.subr.mxu0 0.0
    %2538 = vmatpush1.msra.mxu0 0.0
    %2539 = vmatprep.subr.mxu0 0.0
    %2540 = vmatpush1.msra.mxu0 0.0
    %2541 = vmatprep.subr.mxu0 0.0
    %2542 = vmatpush1.msra.mxu0 0.0
    %2543 = vmatprep.subr.mxu0 0.0
    %2544 = vmatpush1.msra.mxu0 0.0
    %2545 = vmatprep.subr.mxu0 0.0
    %2546 = vmatpush1.msra.mxu0 0.0
    %2547 = vmatprep.subr.mxu0 0.0
    %2548 = vmatpush1.msra.mxu0 0.0
    %2549 = vmatprep.subr.mxu0 0.0
    %2550 = vmatpush1.msra.mxu0 0.0
    %2551 = vmatprep.subr.mxu0 0.0
    %2552 = vmatpush1.msra.mxu0 0.0
    %2553 = vmatprep.subr.mxu0 0.0
    %2554 = vmatpush1.msra.mxu0 0.0
    %2555 = vmatprep.subr.mxu0 0.0
    %2556 = vmatpush1.msra.mxu0 0.0
    %2557 = vmatprep.subr.mxu0 0.0
    %2558 = vmatpush1.msra.mxu0 0.0
    %2559 = vmatprep.subr.mxu0 0.0
    %2560 = vmatpush1.msra.mxu0 0.0
    %2561 = vmatprep.subr.mxu0 0.0
    %2562 = vmatpush1.msra.mxu0 0.0
    %2563 = vmatprep.subr.mxu0 0.0
    %2564 = vmatpush1.msra.mxu0 0.0
    %2565 = vmatprep.subr.mxu0 0.0
    %2566 = vmatpush1.msra.mxu0 0.0
    %2567 = vmatprep.subr.mxu0 0.0
    %2568 = vmatpush1.msra.mxu0 0.0
    %2569 = vmatprep.subr.mxu0 0.0
    %2570 = vmatpush1.msra.mxu0 0.0
    %2571 = vmatprep.subr.mxu0 0.0
    %2572 = vmatpush1.msra.mxu0 0.0
    %2573 = vmatprep.subr.mxu0 0.0
    %2574 = vmatpush1.msra.mxu0 0.0
    %2575 = vmatprep.subr.mxu0 0.0
    %2576 = vmatpush1.msra.mxu0 0.0
    %2577 = vmatprep.subr.mxu0 0.0
    %2578 = vmatpush1.msra.mxu0 0.0
    %2579 = vmatprep.subr.mxu0 0.0
    %2580 = vmatpush1.msra.mxu0 0.0
    %2581 = vmatprep.subr.mxu0 0.0
    %2582 = vmatpush1.msra.mxu0 0.0
    %2583 = vmatprep.mubr.f32.mxu0 0.0
    %2584 = vmatmul.mubr.f32.gmra.mrb[0].mxu0 %v2514
    %v2585 = vpop.f32.mrb[0].mxu0
    %v2586 = vadd.f32 0.0, %v2585
    %v2587 = vpop.f32.mrb[0].mxu0
    %2588 = vmatprep.mubr.f32.mxu0 0.0
    %2589 = vmatmul.mubr.f32.gmra.mrb[0].mxu0 %v2517
    %v2590 = vpop.f32.mrb[0].mxu0
    %v2591 = vadd.f32 0.0, %v2590
    %v2592 = vpop.f32.mrb[0].mxu0
    %2593 = vdwg.mxu0
    %2594 = vrot.lane.b32.xlu0 %v129, 32
    %v2595 = vpop.permute.xlu0 %2594
    %v2598 = vsel %vm136, %v2586, 0
    %v2601 = vsel %vm136, %v2591, 0
    %2603 = vmatprep.subr.mxu0 0.0
    %2604 = vmatpush1.msra.mxu0 %v2595
    %2605 = vmatprep.subr.mxu0 0.0
    %2606 = vmatpush1.msra.mxu0 0.0
    %2607 = vmatprep.subr.mxu0 0.0
    %2608 = vmatpush1.msra.mxu0 0.0
    %2609 = vmatprep.subr.mxu0 0.0
    %2610 = vmatpush1.msra.mxu0 0.0
    %2611 = vmatprep.subr.mxu0 0.0
    %2612 = vmatpush1.msra.mxu0 0.0
    %2613 = vmatprep.subr.mxu0 0.0
    %2614 = vmatpush1.msra.mxu0 0.0
    %2615 = vmatprep.subr.mxu0 0.0
    %2616 = vmatpush1.msra.mxu0 0.0
    %2617 = vmatprep.subr.mxu0 0.0
    %2618 = vmatpush1.msra.mxu0 0.0
    %2619 = vmatprep.subr.mxu0 0.0
    %2620 = vmatpush1.msra.mxu0 0.0
    %2621 = vmatprep.subr.mxu0 0.0
    %2622 = vmatpush1.msra.mxu0 0.0
    %2623 = vmatprep.subr.mxu0 0.0
    %2624 = vmatpush1.msra.mxu0 0.0
    %2625 = vmatprep.subr.mxu0 0.0
    %2626 = vmatpush1.msra.mxu0 0.0
    %2627 = vmatprep.subr.mxu0 0.0
    %2628 = vmatpush1.msra.mxu0 0.0
    %2629 = vmatprep.subr.mxu0 0.0
    %2630 = vmatpush1.msra.mxu0 0.0
    %2631 = vmatprep.subr.mxu0 0.0
    %2632 = vmatpush1.msra.mxu0 0.0
    %2633 = vmatprep.subr.mxu0 0.0
    %2634 = vmatpush1.msra.mxu0 0.0
    %2635 = vmatprep.subr.mxu0 0.0
    %2636 = vmatpush1.msra.mxu0 0.0
    %2637 = vmatprep.subr.mxu0 0.0
    %2638 = vmatpush1.msra.mxu0 0.0
    %2639 = vmatprep.subr.mxu0 0.0
    %2640 = vmatpush1.msra.mxu0 0.0
    %2641 = vmatprep.subr.mxu0 0.0
    %2642 = vmatpush1.msra.mxu0 0.0
    %2643 = vmatprep.subr.mxu0 0.0
    %2644 = vmatpush1.msra.mxu0 0.0
    %2645 = vmatprep.subr.mxu0 0.0
    %2646 = vmatpush1.msra.mxu0 0.0
    %2647 = vmatprep.subr.mxu0 0.0
    %2648 = vmatpush1.msra.mxu0 0.0
    %2649 = vmatprep.subr.mxu0 0.0
    %2650 = vmatpush1.msra.mxu0 0.0
    %2651 = vmatprep.subr.mxu0 0.0
    %2652 = vmatpush1.msra.mxu0 0.0
    %2653 = vmatprep.subr.mxu0 0.0
    %2654 = vmatpush1.msra.mxu0 0.0
    %2655 = vmatprep.subr.mxu0 0.0
    %2656 = vmatpush1.msra.mxu0 0.0
    %2657 = vmatprep.subr.mxu0 0.0
    %2658 = vmatpush1.msra.mxu0 0.0
    %2659 = vmatprep.subr.mxu0 0.0
    %2660 = vmatpush1.msra.mxu0 0.0
    %2661 = vmatprep.subr.mxu0 0.0
    %2662 = vmatpush1.msra.mxu0 0.0
    %2663 = vmatprep.subr.mxu0 0.0
    %2664 = vmatpush1.msra.mxu0 0.0
    %2665 = vmatprep.subr.mxu0 0.0
    %2666 = vmatpush1.msra.mxu0 0.0
    %2667 = vmatprep.mubr.f32.mxu0 0.0
    %2668 = vmatmul.mubr.f32.gmra.mrb[0].mxu0 %v2598
    %v2669 = vpop.f32.mrb[0].mxu0
    %v2670 = vadd.f32 0.0, %v2669
    %v2671 = vpop.f32.mrb[0].mxu0
    %2672 = vmatprep.mubr.f32.mxu0 0.0
    %2673 = vmatmul.mubr.f32.gmra.mrb[0].mxu0 %v2601
    %v2674 = vpop.f32.mrb[0].mxu0
    %v2675 = vadd.f32 0.0, %v2674
    %v2676 = vpop.f32.mrb[0].mxu0
    %2677 = vdwg.mxu0
    %v2678 = vadd.f32 %v2388, %v2670
    %v2679 = vadd.f32 %v2389, %v2675
    %v2680 = vld [vmem:[%s6 + $0x4] sm:$0x1]
    %v2681 = vlaneseq
    %v2682 = vshrl.u32 %v2681, 7
    %v2683 = vsub.s32 0, %v2682
    %v2684 = vrot.slane %v2680, %v2683
    %v2685 = vadd.f32 %v2678, %v2684
    %v2686 = vadd.f32 %v2679, %v2684
    %v2687 = vadd.f32 %v2685, %v1338
    %v2688 = vadd.f32 %v2686, %v1339
    %v2689 = vld [vmem:[%s6 + $0x9] sm:$0x1]
    %v2690 = vld [vmem:[%s6 + $0xa] sm:$0x1]
    %v2691 = vsel %vm44, %v2687, 0.0
    %2692 = vadd.xlane.f32.xlu0 %v2691
    %v2693 = vpop.xlane.xlu0 %2692
    %v2694 = vsel %vm44, %v2688, 0.0
    %2695 = vadd.xlane.f32.xlu0 %v2694
    %v2696 = vpop.xlane.xlu0 %2695
    %v2697 = vmul.f32 %v2693, %v1307
    %v2698 = vmul.f32 %v2696, %v1307
    %v2699 = vsub.f32 %v2687, %v2697
    %v2700 = vsub.f32 %v2688, %v2698
    %v2701 = vmul.f32 %v2699, %v2699
    %v2702 = vmul.f32 %v2700, %v2700
    %v2703 = vsel %vm44, %v2701, 0.0
    %2704 = vadd.xlane.f32.xlu0 %v2703
    %v2705 = vpop.xlane.xlu0 %2704
    %v2706 = vsel %vm44, %v2702, 0.0
    %2707 = vadd.xlane.f32.xlu0 %v2706
    %v2708 = vpop.xlane.xlu0 %2707
    %v2709 = vmul.f32 %v2705, %v1307
    %v2710 = vmul.f32 %v2708, %v1307
    %v2711 = vadd.f32 %v2709, 1e-05
    %v2712 = vadd.f32 %v2710, 1e-05
    %v2713 = vrsqrt.pop %v2711
    %v2714 = vrsqrt.pop %v2712
    %v2715 = vmul.f32 %v2699, %v2713
    %v2716 = vmul.f32 %v2700, %v2714
    %v2717 = vlaneseq
    %v2718 = vshrl.u32 %v2717, 7
    %v2719 = vsub.s32 0, %v2718
    %v2720 = vrot.slane %v2689, %v2719
    %v2721 = vmul.f32 %v2715, %v2720
    %v2722 = vmul.f32 %v2716, %v2720
    %v2723 = vlaneseq
    %v2724 = vshrl.u32 %v2723, 7
    %v2725 = vsub.s32 0, %v2724
    %v2726 = vrot.slane %v2690, %v2725
    %v2727 = vadd.f32 %v2721, %v2726
    %v2728 = vadd.f32 %v2722, %v2726
    %v2729 = vld [vmem:[%s4 + $0x10] sm:$0xff]
    %v2730 = vld [vmem:[%s4 + $0x28] sm:$0xff]
    %v2731 = vld [vmem:[%s4 + $0x40] sm:$0xff]
    %v2732 = vld [vmem:[%s4 + $0x58] sm:$0xff]
    %v2733 = vld [vmem:[%s6 + $0x5] sm:$0x1]
    %v2734 = vlaneseq
    %v2735 = vshrl.u32 %v2734, 7
    %v2736 = vsub.s32 0, %v2735
    %v2737 = vrot.slane %v2733, %v2736
    %v2739 = vsel %vm44, %v2727, 0
    %v2742 = vsel %vm44, %v2728, 0
    %2744 = vmatprep.subr.mxu0 0.0
    %2745 = vmatpush1.msra.mxu0 %v2729
    %2746 = vmatprep.subr.mxu0 0.0
    %2747 = vmatpush1.msra.mxu0 %v2730
    %2748 = vmatprep.subr.mxu0 0.0
    %2749 = vmatpush1.msra.mxu0 %v2731
    %2750 = vmatprep.subr.mxu0 0.0
    %2751 = vmatpush1.msra.mxu0 %v2732
    %2752 = vmatprep.subr.mxu0 0.0
    %2753 = vmatpush1.msra.mxu0 0.0
    %2754 = vmatprep.subr.mxu0 0.0
    %2755 = vmatpush1.msra.mxu0 0.0
    %2756 = vmatprep.subr.mxu0 0.0
    %2757 = vmatpush1.msra.mxu0 0.0
    %2758 = vmatprep.subr.mxu0 0.0
    %2759 = vmatpush1.msra.mxu0 0.0
    %2760 = vmatprep.subr.mxu0 0.0
    %2761 = vmatpush1.msra.mxu0 0.0
    %2762 = vmatprep.subr.mxu0 0.0
    %2763 = vmatpush1.msra.mxu0 0.0
    %2764 = vmatprep.subr.mxu0 0.0
    %2765 = vmatpush1.msra.mxu0 0.0
    %2766 = vmatprep.subr.mxu0 0.0
    %2767 = vmatpush1.msra.mxu0 0.0
    %2768 = vmatprep.subr.mxu0 0.0
    %2769 = vmatpush1.msra.mxu0 0.0
    %2770 = vmatprep.subr.mxu0 0.0
    %2771 = vmatpush1.msra.mxu0 0.0
    %2772 = vmatprep.subr.mxu0 0.0
    %2773 = vmatpush1.msra.mxu0 0.0
    %2774 = vmatprep.subr.mxu0 0.0
    %2775 = vmatpush1.msra.mxu0 0.0
    %2776 = vmatprep.subr.mxu0 0.0
    %2777 = vmatpush1.msra.mxu0 0.0
    %2778 = vmatprep.subr.mxu0 0.0
    %2779 = vmatpush1.msra.mxu0 0.0
    %2780 = vmatprep.subr.mxu0 0.0
    %2781 = vmatpush1.msra.mxu0 0.0
    %2782 = vmatprep.subr.mxu0 0.0
    %2783 = vmatpush1.msra.mxu0 0.0
    %2784 = vmatprep.subr.mxu0 0.0
    %2785 = vmatpush1.msra.mxu0 0.0
    %2786 = vmatprep.subr.mxu0 0.0
    %2787 = vmatpush1.msra.mxu0 0.0
    %2788 = vmatprep.subr.mxu0 0.0
    %2789 = vmatpush1.msra.mxu0 0.0
    %2790 = vmatprep.subr.mxu0 0.0
    %2791 = vmatpush1.msra.mxu0 0.0
    %2792 = vmatprep.subr.mxu0 0.0
    %2793 = vmatpush1.msra.mxu0 0.0
    %2794 = vmatprep.subr.mxu0 0.0
    %2795 = vmatpush1.msra.mxu0 0.0
    %2796 = vmatprep.subr.mxu0 0.0
    %2797 = vmatpush1.msra.mxu0 0.0
    %2798 = vmatprep.subr.mxu0 0.0
    %2799 = vmatpush1.msra.mxu0 0.0
    %2800 = vmatprep.subr.mxu0 0.0
    %2801 = vmatpush1.msra.mxu0 0.0
    %2802 = vmatprep.subr.mxu0 0.0
    %2803 = vmatpush1.msra.mxu0 0.0
    %2804 = vmatprep.subr.mxu0 0.0
    %2805 = vmatpush1.msra.mxu0 0.0
    %2806 = vmatprep.subr.mxu0 0.0
    %2807 = vmatpush1.msra.mxu0 0.0
    %2808 = vmatprep.mubr.f32.mxu0 0.0
    %2809 = vmatmul.mubr.f32.gmra.mrb[0].mxu0 %v2739
    %v2810 = vpop.f32.mrb[0].mxu0
    %v2811 = vadd.f32 %v2737, %v2810
    %v2812 = vpop.f32.mrb[0].mxu0
    %2813 = vmatprep.mubr.f32.mxu0 0.0
    %2814 = vmatmul.mubr.f32.gmra.mrb[0].mxu0 %v2742
    %v2815 = vpop.f32.mrb[0].mxu0
    %v2816 = vadd.f32 %v2737, %v2815
    %v2817 = vpop.f32.mrb[0].mxu0
    %2818 = vdwg.mxu0
    %v2819 = vmax.f32 %v2811, 0.0
    %v2820 = vmax.f32 %v2816, 0.0
    %v2821 = vld [vmem:[%s5] sm:$0xff]
    %v2822 = vld [vmem:[%s5 + $0x8] sm:$0xff]
    %v2823 = vld [vmem:[%s5 + $0x10] sm:$0xff]
    %v2824 = vld [vmem:[%s5 + $0x18] sm:$0xff]
    %v2825 = vld [vmem:[%s5 + $0x20] sm:$0xff]
    %v2826 = vld [vmem:[%s5 + $0x28] sm:$0xff]
    %v2827 = vld [vmem:[%s5 + $0x30] sm:$0xff]
    %v2828 = vld [vmem:[%s5 + $0x38] sm:$0xff]
    %v2829 = vld [vmem:[%s6 + $0x6] sm:$0x1]
    %v2830 = vlaneseq
    %v2831 = vshrl.u32 %v2830, 7
    %v2832 = vsub.s32 0, %v2831
    %v2833 = vrot.slane %v2829, %v2832
    %vm2834 = vcmask 523264
    %v2836 = vsel %vm2834, %v2819, 0
    %v2839 = vsel %vm2834, %v2820, 0
    %2841 = vmatprep.subr.mxu0 0.0
    %2842 = vmatpush1.msra.mxu0 %v2821
    %2843 = vmatprep.subr.mxu0 0.0
    %2844 = vmatpush1.msra.mxu0 %v2822
    %2845 = vmatprep.subr.mxu0 0.0
    %2846 = vmatpush1.msra.mxu0 %v2823
    %2847 = vmatprep.subr.mxu0 0.0
    %2848 = vmatpush1.msra.mxu0 %v2824
    %2849 = vmatprep.subr.mxu0 0.0
    %2850 = vmatpush1.msra.mxu0 %v2825
    %2851 = vmatprep.subr.mxu0 0.0
    %2852 = vmatpush1.msra.mxu0 %v2826
    %2853 = vmatprep.subr.mxu0 0.0
    %2854 = vmatpush1.msra.mxu0 %v2827
    %2855 = vmatprep.subr.mxu0 0.0
    %2856 = vmatpush1.msra.mxu0 %v2828
    %2857 = vmatprep.subr.mxu0 0.0
    %2858 = vmatpush1.msra.mxu0 0.0
    %2859 = vmatprep.subr.mxu0 0.0
    %2860 = vmatpush1.msra.mxu0 0.0
    %2861 = vmatprep.subr.mxu0 0.0
    %2862 = vmatpush1.msra.mxu0 0.0
    %2863 = vmatprep.subr.mxu0 0.0
    %2864 = vmatpush1.msra.mxu0 0.0
    %2865 = vmatprep.subr.mxu0 0.0
    %2866 = vmatpush1.msra.mxu0 0.0
    %2867 = vmatprep.subr.mxu0 0.0
    %2868 = vmatpush1.msra.mxu0 0.0
    %2869 = vmatprep.subr.mxu0 0.0
    %2870 = vmatpush1.msra.mxu0 0.0
    %2871 = vmatprep.subr.mxu0 0.0
    %2872 = vmatpush1.msra.mxu0 0.0
    %2873 = vmatprep.subr.mxu0 0.0
    %2874 = vmatpush1.msra.mxu0 0.0
    %2875 = vmatprep.subr.mxu0 0.0
    %2876 = vmatpush1.msra.mxu0 0.0
    %2877 = vmatprep.subr.mxu0 0.0
    %2878 = vmatpush1.msra.mxu0 0.0
    %2879 = vmatprep.subr.mxu0 0.0
    %2880 = vmatpush1.msra.mxu0 0.0
    %2881 = vmatprep.subr.mxu0 0.0
    %2882 = vmatpush1.msra.mxu0 0.0
    %2883 = vmatprep.subr.mxu0 0.0
    %2884 = vmatpush1.msra.mxu0 0.0
    %2885 = vmatprep.subr.mxu0 0.0
    %2886 = vmatpush1.msra.mxu0 0.0
    %2887 = vmatprep.subr.mxu0 0.0
    %2888 = vmatpush1.msra.mxu0 0.0
    %2889 = vmatprep.subr.mxu0 0.0
    %2890 = vmatpush1.msra.mxu0 0.0
    %2891 = vmatprep.subr.mxu0 0.0
    %2892 = vmatpush1.msra.mxu0 0.0
    %2893 = vmatprep.subr.mxu0 0.0
    %2894 = vmatpush1.msra.mxu0 0.0
    %2895 = vmatprep.subr.mxu0 0.0
    %2896 = vmatpush1.msra.mxu0 0.0
    %2897 = vmatprep.subr.mxu0 0.0
    %2898 = vmatpush1.msra.mxu0 0.0
    %2899 = vmatprep.subr.mxu0 0.0
    %2900 = vmatpush1.msra.mxu0 0.0
    %2901 = vmatprep.subr.mxu0 0.0
    %2902 = vmatpush1.msra.mxu0 0.0
    %2903 = vmatprep.subr.mxu0 0.0
    %2904 = vmatpush1.msra.mxu0 0.0
    %2905 = vmatprep.mubr.f32.mxu0 0.0
    %2906 = vmatmul.mubr.f32.gmra.mrb[0].mxu0 %v2836
    %v2907 = vpop.f32.mrb[0].mxu0
    %v2908 = vadd.f32 %v2833, %v2907
    %v2909 = vpop.f32.mrb[0].mxu0
    %2910 = vmatprep.mubr.f32.mxu0 0.0
    %2911 = vmatmul.mubr.f32.gmra.mrb[0].mxu0 %v2839
    %v2912 = vpop.f32.mrb[0].mxu0
    %v2913 = vadd.f32 %v2833, %v2912
    %v2914 = vpop.f32.mrb[0].mxu0
    %2915 = vdwg.mxu0
    %v2916 = vadd.f32 %v2908, %v2727
    %v2917 = vadd.f32 %v2913, %v2728
    %v2918 = vld [vmem:[%s6 + $0xb] sm:$0x1]
    %v2919 = vld [vmem:[%s6 + $0xc] sm:$0x1]
    %v2920 = vsel %vm44, %v2916, 0.0
    %2921 = vadd.xlane.f32.xlu0 %v2920
    %v2922 = vpop.xlane.xlu0 %2921
    %v2923 = vsel %vm44, %v2917, 0.0
    %2924 = vadd.xlane.f32.xlu0 %v2923
    %v2925 = vpop.xlane.xlu0 %2924
    %v2926 = vmul.f32 %v2922, %v1307
    %v2927 = vmul.f32 %v2925, %v1307
    %v2928 = vsub.f32 %v2916, %v2926
    %v2929 = vsub.f32 %v2917, %v2927
    %v2930 = vmul.f32 %v2928, %v2928
    %v2931 = vmul.f32 %v2929, %v2929
    %v2932 = vsel %vm44, %v2930, 0.0
    %2933 = vadd.xlane.f32.xlu0 %v2932
    %v2934 = vpop.xlane.xlu0 %2933
    %v2935 = vsel %vm44, %v2931, 0.0
    %2936 = vadd.xlane.f32.xlu0 %v2935
    %v2937 = vpop.xlane.xlu0 %2936
    %v2938 = vmul.f32 %v2934, %v1307
    %v2939 = vmul.f32 %v2937, %v1307
    %v2940 = vadd.f32 %v2938, 1e-05
    %v2941 = vadd.f32 %v2939, 1e-05
    %v2942 = vrsqrt.pop %v2940
    %v2943 = vrsqrt.pop %v2941
    %v2944 = vmul.f32 %v2928, %v2942
    %v2945 = vmul.f32 %v2929, %v2943
    %v2946 = vlaneseq
    %v2947 = vshrl.u32 %v2946, 7
    %v2948 = vsub.s32 0, %v2947
    %v2949 = vrot.slane %v2918, %v2948
    %v2950 = vmul.f32 %v2944, %v2949
    %v2951 = vmul.f32 %v2945, %v2949
    %v2952 = vlaneseq
    %v2953 = vshrl.u32 %v2952, 7
    %v2954 = vsub.s32 0, %v2953
    %v2955 = vrot.slane %v2919, %v2954
    %v2956 = vadd.f32 %v2950, %v2955
    %v2957 = vadd.f32 %v2951, %v2955
    %2958 = vst.msk [vmem:[#allocation2] sm:$0xff] %vm44, %v2956
    %2959 = vst.msk [vmem:[#allocation2 + $0x8] sm:$0xff] %vm44, %v2957
    // Predicated region
    $region30: #{decoder_layer.1} parent=1 // pred_check
      _
    $region31: #{decoder_layer.1} parent=1 // pred_check_branch
      %2961 = sbr.rel (0) target = $region33
    $region32: #{decoder_layer.1} parent=1 // pred_region
      %s2963 = ssub.s32 256, 256
      %2964 = vsyncadd [#allocation3], %s2963
      %s2965 = sshll.u32 [#allocation2], 4
      %s2966 = int_to_ptr.vmem [resolvable:$true] %s2965
      %2971 = dma.vmem_to_hbm [thread:$0]  %s2966, 256, %s7, [#allocation3], 128, 128, 8
    $region33: #{decoder_layer.1} parent=1 // pred_fallthru
      _
    // Predicated region
    $region34: #{decoder_layer.1} parent=1 // pred_check
      _
    $region35: #{decoder_layer.1} parent=1 // pred_check_branch
      %2973 = sbr.rel (0) target = $region37
    $region36: #{decoder_layer.1} parent=1 // pred_region
      %2974 = dma.done [#allocation3], 256
    $region37: #{decoder_layer.1} parent=1 // pred_fallthru
      _
    %2975 = vsyncpa [#allocation3], 1

</llo_original>
